<compile_context>
chip_gen: v5e
topology: v5e:2x2
jax: 0.10.0
libtpu: 0.0.40
codegen_flags: <defaults>
</compile_context>

<pallas_src>
import functools
import math

import jax
import jax.numpy as jnp
from jax import lax
from jax.experimental import pallas as pl
from jax.experimental.pallas import tpu as pltpu


# Finite -inf sentinel.  A Python float (NOT a jnp scalar) so the kernel does
# not capture a traced constant; finite so 0 * NEG_INF stays 0 (no NaN).
NEG_INF = -1e30


# ----------------------------------------------------------------------------
# Pallas kernel: one "agg" hop of RGAT, edge-tiled with online segment softmax
# ----------------------------------------------------------------------------
def rgat_agg_kernel(idx_ref, ent_ref, wt_ref, relt_ref, out_ref,
                    ent_t_ref, ent_w_ref, m_ref, l_ref, acc_ref,
                    *, latdim, n_nodes):
    i = pl.program_id(0)
    D = latdim
    N = n_nodes

    @pl.when(i == 0)
    def _init():
        # Cache ent^T and (ent @ W)^T = W^T @ ent^T once per call; both stay
        # resident in VMEM scratch for the rest of the edge grid.
        ent_t = jnp.transpose(ent_ref[...])                          # (D, N)
        ent_t_ref[...] = ent_t
        wt = wt_ref[...]                                             # (D, 2D)
        # TODO(synk): switch these (and the per-tile matmuls) to bf16_3x
        # (lax.Precision.HIGH) once the Mosaic dot lowering accepts it; the
        # one-hot operands are exact in bf16, only value operands need x3.
        ent_w_ref[:, :N] = jnp.dot(wt[:, :D], ent_t,
                                   preferred_element_type=jnp.float32)
        ent_w_ref[:, N:] = jnp.dot(wt[:, D:], ent_t,
                                   preferred_element_type=jnp.float32)
        m_ref[...] = jnp.full(m_ref.shape, NEG_INF, jnp.float32)
        l_ref[...] = jnp.zeros(l_ref.shape, jnp.float32)
        acc_ref[...] = jnp.zeros(acc_ref.shape, jnp.float32)

    head = idx_ref[0:1, :]                                           # (1, TE)
    tail = idx_ref[1:2, :]                                           # (1, TE)
    etyp = idx_ref[2:3, :]                                           # (1, TE)
    TE = head.shape[1]
    R8 = relt_ref.shape[1]
    valid = head >= 0                                                # (1, TE)

    # Combined (2N, TE) one-hot: rows [0,N) select head == n, rows [N,2N)
    # select tail == n - N.  Padded edges are explicitly zeroed via `valid`.
    node2 = lax.broadcasted_iota(jnp.int32, (2 * N, TE), 0)
    oh2_mask = ((node2 == head) | (node2 == tail + N)) & valid       # (2N, TE)
    oh2 = oh2_mask.astype(jnp.float32)
    head_mask = oh2_mask[:N, :]                                      # (N, TE)
    head_oh = oh2[:N, :]                                             # (N, TE)
    tail_oh = oh2[N:, :]                                             # (N, TE)

    # In-kernel relation gather: (D, R8) @ (R8, TE) one-hot matmul (R is tiny).
    rel_ids = lax.broadcasted_iota(jnp.int32, (R8, TE), 0)
    rel_oh = (rel_ids == etyp).astype(jnp.float32)                   # (R8, TE)
    rel_e_t = jnp.dot(relt_ref[...], rel_oh,
                      preferred_element_type=jnp.float32)            # (D, TE)

    # Per-edge projection (ent[head]@W[:D] + ent[tail]@W[D:])^T as one K = 2N
    # contraction against the combined one-hot.
    aw_t = jnp.dot(ent_w_ref[...], oh2,
                   preferred_element_type=jnp.float32)               # (D, TE)
    # Per-edge tail embedding (transposed).
    t_emb_t = jnp.dot(ent_t_ref[...], tail_oh,
                      preferred_element_type=jnp.float32)            # (D, TE)

    # e = LeakyReLU_0.2( sum_d aw * relation_emb[edge_type] )
    score = jnp.sum(aw_t * rel_e_t, axis=0, keepdims=True)           # (1, TE)
    e = jnp.where(score > 0, score, 0.2 * score)                     # (1, TE)

    # ---- online (flash-style) scatter-softmax over head nodes ----
    masked = jnp.where(head_mask, e, NEG_INF)                        # (N, TE)
    m_tile = jnp.max(masked, axis=1, keepdims=True)                  # (N, 1)
    m_old = m_ref[...]
    m_new = jnp.maximum(m_old, m_tile)                               # (N, 1)
    alpha = jnp.exp(m_old - m_new)                                   # (N, 1)

    m_edge = jnp.sum(head_oh * m_new, axis=0, keepdims=True)         # (1, TE)
    p = jnp.where(valid, jnp.exp(e - m_edge), 0.0)                   # (1, TE)

    # Fold the denominator into the scatter matmul: one NT contraction yields
    # both the weighted scatter-sum (cols :D) and the denominator (cols D:).
    weighted_t = t_emb_t * p                                         # (D, TE)
    aug = jnp.concatenate(
        [weighted_t, jnp.broadcast_to(p, (8, TE))], axis=0)          # (D+8, TE)
    scat = lax.dot_general(head_oh, aug, (((1,), (1,)), ((), ())),
                           preferred_element_type=jnp.float32)       # (N, D+8)

    m_ref[...] = m_new
    l_ref[...] = alpha * l_ref[...] + scat[:, D:D + 1]
    acc_ref[...] = alpha * acc_ref[...] + scat[:, :D]

    @pl.when(i == pl.num_programs(0) - 1)
    def _finalize():
        l = l_ref[...]                                               # (N, 1)
        inv = jnp.where(l > 0, 1.0 / jnp.maximum(l, 1e-30), 0.0)
        # agg_emb = scatter_sum(ent[tail] * attn, head) + ent
        out_ref[...] = acc_ref[...] * inv + ent_ref[...]             # (N, D)


def rgat_agg_pallas(entity_emb, relation_emb, W, head, tail, edge_type,
                    *, edge_tile=1024):
    """One agg() hop. entity_emb (N,D) f32, relation_emb (R,D) f32, W (2D,D)
    f32, head/tail/edge_type (E,) int. Best when N, D are multiples of 128."""
    N, D = entity_emb.shape
    E = int(head.shape[0])
    R = relation_emb.shape[0]

    edge_tile = max(128, (edge_tile // 128) * 128)
    TE = min(edge_tile, ((E + 127) // 128) * 128)
    n_tiles = -(-E // TE)
    E_pad = n_tiles * TE
    pad = E_pad - E

    head_p = jnp.pad(head.astype(jnp.int32), (0, pad), constant_values=-1)
    tail_p = jnp.pad(tail.astype(jnp.int32), (0, pad), constant_values=-1)
    typ_p = jnp.pad(edge_type.astype(jnp.int32), (0, pad), constant_values=-1)
    # One packed (8, E_pad) int32 edge table (rows: head, tail, type, padding)
    # -> 32 B streamed per edge instead of lane-padded (E,1) blocks + (E,D) rel.
    idx = jnp.concatenate(
        [head_p[None], tail_p[None], typ_p[None],
         jnp.full((5, E_pad), -1, jnp.int32)], axis=0)

    # Pre-transposed weights / relation table (tiny, done once in XLA).
    w_t = jnp.transpose(W.astype(jnp.float32))                       # (D, 2D)
    R8 = ((R + 7) // 8) * 8
    rel_t = jnp.transpose(
        jnp.pad(relation_emb.astype(jnp.float32),
                ((0, R8 - R), (0, 0))))                              # (D, R8)

    kernel = functools.partial(rgat_agg_kernel, latdim=D, n_nodes=N)
    # TODO(synk): for v7x, add a leading "parallel" node-block grid axis (host
    # edge sort + scalar-prefetched per-block offsets) so the work shards over
    # both TensorCores and the (D,2N)/(N,D) scratch fits 64 MiB VMEM at big N.
    # TODO(synk): single-buffer the constant-index inputs (ent / W^T / rel^T)
    # once pl.Buffered(1) pipeline_mode is safe, to reclaim the extra buffers.
    return pl.pallas_call(
        kernel,
        out_shape=jax.ShapeDtypeStruct((N, D), jnp.float32),
        grid_spec=pltpu.PrefetchScalarGridSpec(
            num_scalar_prefetch=0,
            grid=(n_tiles,),
            in_specs=[
                pl.BlockSpec((8, TE), lambda i: (0, i)),      # packed edge idx
                pl.BlockSpec((N, D), lambda i: (0, 0)),       # entity_emb
                pl.BlockSpec((D, 2 * D), lambda i: (0, 0)),   # W^T
                pl.BlockSpec((D, R8), lambda i: (0, 0)),      # relation_emb^T
            ],
            out_specs=pl.BlockSpec((N, D), lambda i: (0, 0)),
            scratch_shapes=[
                pltpu.VMEM((D, N), jnp.float32),      # ent^T
                pltpu.VMEM((D, 2 * N), jnp.float32),  # (ent @ W)^T, both halves
                pltpu.VMEM((N, 1), jnp.float32),      # running per-node max
                pltpu.VMEM((N, 1), jnp.float32),      # running per-node denom
                pltpu.VMEM((N, D), jnp.float32),      # running weighted sum
            ],
        ),
        compiler_params=pltpu.CompilerParams(
            dimension_semantics=("arbitrary",)),
    )(idx, entity_emb.astype(jnp.float32), w_t, rel_t)


# ----------------------------------------------------------------------------
# Pure-JAX reference agg (for correctness check)
# ----------------------------------------------------------------------------
def rgat_agg_ref(entity_emb, relation_emb, W, head, tail, edge_type):
    N = entity_emb.shape[0]
    rel_edge = relation_emb[edge_type]
    a = jnp.concatenate([entity_emb[head], entity_emb[tail]], axis=-1)
    score = jnp.sum((a @ W) * rel_edge, axis=-1)
    e = jnp.where(score > 0, score, 0.2 * score)
    m = jax.ops.segment_max(e, head, num_segments=N)
    m = jnp.where(jnp.isfinite(m), m, 0.0)           # empty segments
    p = jnp.exp(e - m[head])
    denom = jax.ops.segment_sum(p, head, num_segments=N)
    attn = p / denom[head]
    agg = jax.ops.segment_sum(entity_emb[tail] * attn[:, None], head,
                              num_segments=N)
    return agg + entity_emb


# ----------------------------------------------------------------------------
# RGAT.forward glue: hops, dropout, F.normalize, residual mix
# ----------------------------------------------------------------------------
def rgat_forward(entity_emb, relation_emb, kg, n_hops, *, agg_fn,
                 mess_dropout=True, dropout_rate=0.4, key=None):
    entity_res = entity_emb
    for _ in range(n_hops):
        entity_emb = agg_fn(entity_emb, relation_emb, kg)
        if mess_dropout:
            key, sub = jax.random.split(key)
            keep = jax.random.bernoulli(sub, 1.0 - dropout_rate,
                                        entity_emb.shape)
            # TODO(synk): torch.nn.Dropout uses torch RNG; deterministic JAX
            # mask here (same semantics: zero + 1/(1-p) scaling).
            entity_emb = jnp.where(keep, entity_emb / (1.0 - dropout_rate), 0.0)
        # F.normalize(x) == x / max(||x||_2 along dim=1, 1e-12)
        norm = jnp.sqrt(jnp.sum(entity_emb * entity_emb, axis=1, keepdims=True))
        entity_emb = entity_emb / jnp.maximum(norm, 1e-12)
        entity_res = 0.5 * entity_res + entity_emb
    return entity_res


# ----------------------------------------------------------------------------
if __name__ == "__main__":
    N, D, E, R = 128, 128, 384, 8   # entities, latdim, edges, relations
    n_hops = 2
    dropout_rate = 0.4

    key = jax.random.PRNGKey(0)
    k_ent, k_rel, k_head, k_tail, k_type, k_w, k_drop = jax.random.split(key, 7)

    entity_emb = (0.1 * jax.random.normal(k_ent, (N, D))).astype(jnp.float32)
    relation_emb = (0.1 * jax.random.normal(k_rel, (R, D))).astype(jnp.float32)
    head = jax.random.randint(k_head, (E,), 0, N)
    tail = jax.random.randint(k_tail, (E,), 0, N)
    edge_type = jax.random.randint(k_type, (E,), 0, R)
    kg = (jnp.stack([head, tail]), edge_type)

    # nn.Parameter(xavier_uniform_(empty(2D, D), gain=calculate_gain('relu')))
    gain = math.sqrt(2.0)
    bound = gain * math.sqrt(6.0 / (2 * D + D))
    W = jax.random.uniform(k_w, (2 * D, D), minval=-bound, maxval=bound,
                           dtype=jnp.float32)

    def pallas_agg(ent, rel_emb, kg_):
        (h, t), et = kg_[0], kg_[1]
        return rgat_agg_pallas(ent, rel_emb, W, h, t, et)

    def ref_agg(ent, rel_emb, kg_):
        (h, t), et = kg_[0], kg_[1]
        return rgat_agg_ref(ent, rel_emb, W, h, t, et)

    out_pallas = rgat_forward(entity_emb, relation_emb, kg, n_hops,
                              agg_fn=pallas_agg, mess_dropout=True,
                              dropout_rate=dropout_rate, key=k_drop)
    out_ref = rgat_forward(entity_emb, relation_emb, kg, n_hops,
                           agg_fn=ref_agg, mess_dropout=True,
                           dropout_rate=dropout_rate, key=k_drop)

    out_pallas = jax.block_until_ready(out_pallas)
    out_ref = jax.block_until_ready(out_ref)

    assert out_pallas.shape == (N, D)
    max_err = float(jnp.max(jnp.abs(out_pallas - out_ref)))
    assert jnp.allclose(out_pallas, out_ref, atol=2e-4, rtol=2e-4), max_err
    print("KERNEL_OK")
</pallas_src>

<mosaic_0001>
module attributes {stable_mosaic.version = 11 : i64} {
  func.func @rgat_agg_kernel(%arg0: i32, %arg1: memref<8x384xi32, #tpu.memory_space<vmem>>, %arg2: memref<128x128xf32, #tpu.memory_space<vmem>>, %arg3: memref<128x256xf32, #tpu.memory_space<vmem>>, %arg4: memref<128x8xf32, #tpu.memory_space<vmem>>, %arg5: memref<128x128xf32, #tpu.memory_space<vmem>>, %arg6: memref<128x128xf32, #tpu.memory_space<vmem>>, %arg7: memref<128x256xf32, #tpu.memory_space<vmem>>, %arg8: memref<128x1xf32, #tpu.memory_space<vmem>>, %arg9: memref<128x1xf32, #tpu.memory_space<vmem>>, %arg10: memref<128x128xf32, #tpu.memory_space<vmem>>) attributes {dimension_semantics = [#tpu.dimension_semantics<arbitrary>], iteration_bounds = array<i64: 1>, scalar_prefetch = 0 : i64, scratch_operands = 5 : i64, tpu.core_type = #tpu.core_type<tc>, window_params = [{transform_indices = @transform_0, window_bounds = array<i64: 8, 384>}, {pipeline_mode = #tpu.pipeline_mode<synchronous>, transform_indices = @transform_1, window_bounds = array<i64: 128, 128>}, {pipeline_mode = #tpu.pipeline_mode<synchronous>, transform_indices = @transform_2, window_bounds = array<i64: 128, 256>}, {pipeline_mode = #tpu.pipeline_mode<synchronous>, transform_indices = @transform_3, window_bounds = array<i64: 128, 8>}, {pipeline_mode = #tpu.pipeline_mode<synchronous>, transform_indices = @transform_4, window_bounds = array<i64: 128, 128>}]} {
    %c0_i32 = arith.constant 0 : i32
    %0 = arith.cmpi eq, %arg0, %c0_i32 : i32
    %1 = arith.extui %0 : i1 to i32
    %c0_i32_0 = arith.constant 0 : i32
    %2 = arith.cmpi ne, %1, %c0_i32_0 : i32
    scf.if %2 {
      %c0_35 = arith.constant 0 : index
      %c0_36 = arith.constant 0 : index
      %81 = vector.load %arg2[%c0_35, %c0_36] : memref<128x128xf32, #tpu.memory_space<vmem>>, vector<128x128xf32>
      %82 = tpu.transpose %81, [1, 0] : vector<128x128xf32> -> vector<128x128xf32>
      %c0_37 = arith.constant 0 : index
      %c0_38 = arith.constant 0 : index
      %83 = vector.load %arg6[%c0_37, %c0_38] : memref<128x128xf32, #tpu.memory_space<vmem>>, vector<128x128xf32>
      tpu.vector_store %arg6[%c0_37, %c0_38], %82 {strides = array<i32>} : memref<128x128xf32, #tpu.memory_space<vmem>>, vector<128x128xf32>,
      %c0_39 = arith.constant 0 : index
      %c0_40 = arith.constant 0 : index
      %84 = vector.load %arg3[%c0_39, %c0_40] : memref<128x256xf32, #tpu.memory_space<vmem>>, vector<128x256xf32>
      %85 = vector.extract_strided_slice %84 {offsets = [0, 0], sizes = [128, 128], strides = [1, 1]} : vector<128x256xf32> to vector<128x128xf32>
      %cst_41 = arith.constant dense<0.000000e+00> : vector<128x128xf32>
      %86 = tpu.matmul %85, %82, %cst_41 {dimension_numbers = #tpu.dot_dimension_numbers<[1], [0], [0], [1], [0, 0, 1, 1], [], []>} : vector<128x128xf32>, vector<128x128xf32>, vector<128x128xf32> -> vector<128x128xf32>
      %c0_42 = arith.constant 0 : index
      %c0_43 = arith.constant 0 : index
      %87 = vector.load %arg7[%c0_42, %c0_43] : memref<128x256xf32, #tpu.memory_space<vmem>>, vector<128x128xf32>
      tpu.vector_store %arg7[%c0_42, %c0_43], %86 {strides = array<i32>} : memref<128x256xf32, #tpu.memory_space<vmem>>, vector<128x128xf32>,
      %88 = vector.extract_strided_slice %84 {offsets = [0, 128], sizes = [128, 128], strides = [1, 1]} : vector<128x256xf32> to vector<128x128xf32>
      %cst_44 = arith.constant dense<0.000000e+00> : vector<128x128xf32>
      %89 = tpu.matmul %88, %82, %cst_44 {dimension_numbers = #tpu.dot_dimension_numbers<[1], [0], [0], [1], [0, 0, 1, 1], [], []>} : vector<128x128xf32>, vector<128x128xf32>, vector<128x128xf32> -> vector<128x128xf32>
      %c0_45 = arith.constant 0 : index
      %c128 = arith.constant 128 : index
      %90 = vector.load %arg7[%c0_45, %c128] : memref<128x256xf32, #tpu.memory_space<vmem>>, vector<128x128xf32>
      tpu.vector_store %arg7[%c0_45, %c128], %89 {strides = array<i32>} : memref<128x256xf32, #tpu.memory_space<vmem>>, vector<128x128xf32>,
      %cst_46 = arith.constant -1.000000e+30 : f32
      %91 = vector.broadcast %cst_46 : f32 to vector<128x1xf32>
      %c0_47 = arith.constant 0 : index
      %c0_48 = arith.constant 0 : index
      %92 = vector.load %arg8[%c0_47, %c0_48] : memref<128x1xf32, #tpu.memory_space<vmem>>, vector<128x1xf32>
      tpu.vector_store %arg8[%c0_47, %c0_48], %91 {strides = array<i32>} : memref<128x1xf32, #tpu.memory_space<vmem>>, vector<128x1xf32>,
      %cst_49 = arith.constant 0.000000e+00 : f32
      %93 = vector.broadcast %cst_49 : f32 to vector<128x1xf32>
      %c0_50 = arith.constant 0 : index
      %c0_51 = arith.constant 0 : index
      %94 = vector.load %arg9[%c0_50, %c0_51] : memref<128x1xf32, #tpu.memory_space<vmem>>, vector<128x1xf32>
      tpu.vector_store %arg9[%c0_50, %c0_51], %93 {strides = array<i32>} : memref<128x1xf32, #tpu.memory_space<vmem>>, vector<128x1xf32>,
      %cst_52 = arith.constant 0.000000e+00 : f32
      %95 = vector.broadcast %cst_52 : f32 to vector<128x128xf32>
      %c0_53 = arith.constant 0 : index
      %c0_54 = arith.constant 0 : index
      %96 = vector.load %arg10[%c0_53, %c0_54] : memref<128x128xf32, #tpu.memory_space<vmem>>, vector<128x128xf32>
      tpu.vector_store %arg10[%c0_53, %c0_54], %95 {strides = array<i32>} : memref<128x128xf32, #tpu.memory_space<vmem>>, vector<128x128xf32>,
    } else {
    }
    %c0 = arith.constant 0 : index
    %c0_1 = arith.constant 0 : index
    %3 = vector.load %arg1[%c0, %c0_1] : memref<8x384xi32, #tpu.memory_space<vmem>>, vector<1x384xi32>
    %c1 = arith.constant 1 : index
    %c0_2 = arith.constant 0 : index
    %4 = vector.load %arg1[%c1, %c0_2] : memref<8x384xi32, #tpu.memory_space<vmem>>, vector<1x384xi32>
    %c2 = arith.constant 2 : index
    %c0_3 = arith.constant 0 : index
    %5 = vector.load %arg1[%c2, %c0_3] : memref<8x384xi32, #tpu.memory_space<vmem>>, vector<1x384xi32>
    %c0_i32_4 = arith.constant 0 : i32
    %6 = vector.broadcast %c0_i32_4 : i32 to vector<1x384xi32>
    %7 = arith.cmpi sge, %3, %6 : vector<1x384xi32>
    %8 = tpu.iota {dimensions = array<i32: 0>} : vector<256x384xi32>
    %9 = vector.broadcast %3 : vector<1x384xi32> to vector<256x384xi32>
    %10 = arith.cmpi eq, %8, %9 : vector<256x384xi32>
    %c128_i32 = arith.constant 128 : i32
    %11 = vector.broadcast %c128_i32 : i32 to vector<1x384xi32>
    %12 = arith.addi %4, %11 : vector<1x384xi32>
    %13 = vector.broadcast %12 : vector<1x384xi32> to vector<256x384xi32>
    %14 = arith.cmpi eq, %8, %13 : vector<256x384xi32>
    %15 = arith.ori %10, %14 : vector<256x384xi1>
    %16 = vector.broadcast %7 : vector<1x384xi1> to vector<256x384xi1>
    %17 = arith.andi %15, %16 : vector<256x384xi1>
    %18 = arith.extui %17 : vector<256x384xi1> to vector<256x384xi32>
    %19 = arith.sitofp %18 : vector<256x384xi32> to vector<256x384xf32>
    %20 = vector.extract_strided_slice %17 {offsets = [0, 0], sizes = [128, 384], strides = [1, 1]} : vector<256x384xi1> to vector<128x384xi1>
    %21 = vector.extract_strided_slice %19 {offsets = [0, 0], sizes = [128, 384], strides = [1, 1]} : vector<256x384xf32> to vector<128x384xf32>
    %22 = vector.extract_strided_slice %19 {offsets = [128, 0], sizes = [128, 384], strides = [1, 1]} : vector<256x384xf32> to vector<128x384xf32>
    %23 = tpu.iota {dimensions = array<i32: 0>} : vector<8x384xi32>
    %24 = vector.broadcast %5 : vector<1x384xi32> to vector<8x384xi32>
    %25 = arith.cmpi eq, %23, %24 : vector<8x384xi32>
    %26 = arith.extui %25 : vector<8x384xi1> to vector<8x384xi32>
    %27 = arith.sitofp %26 : vector<8x384xi32> to vector<8x384xf32>
    %c0_5 = arith.constant 0 : index
    %c0_6 = arith.constant 0 : index
    %28 = vector.load %arg4[%c0_5, %c0_6] : memref<128x8xf32, #tpu.memory_space<vmem>>, vector<128x8xf32>
    %cst = arith.constant dense<0.000000e+00> : vector<128x384xf32>
    %29 = tpu.matmul %28, %27, %cst {dimension_numbers = #tpu.dot_dimension_numbers<[1], [0], [0], [1], [0, 0, 1, 1], [], []>} : vector<128x8xf32>, vector<8x384xf32>, vector<128x384xf32> -> vector<128x384xf32>
    %c0_7 = arith.constant 0 : index
    %c0_8 = arith.constant 0 : index
    %30 = vector.load %arg7[%c0_7, %c0_8] : memref<128x256xf32, #tpu.memory_space<vmem>>, vector<128x256xf32>
    %cst_9 = arith.constant dense<0.000000e+00> : vector<128x384xf32>
    %31 = tpu.matmul %30, %19, %cst_9 {dimension_numbers = #tpu.dot_dimension_numbers<[1], [0], [0], [1], [0, 0, 1, 1], [], []>} : vector<128x256xf32>, vector<256x384xf32>, vector<128x384xf32> -> vector<128x384xf32>
    %c0_10 = arith.constant 0 : index
    %c0_11 = arith.constant 0 : index
    %32 = vector.load %arg6[%c0_10, %c0_11] : memref<128x128xf32, #tpu.memory_space<vmem>>, vector<128x128xf32>
    %cst_12 = arith.constant dense<0.000000e+00> : vector<128x384xf32>
    %33 = tpu.matmul %32, %22, %cst_12 {dimension_numbers = #tpu.dot_dimension_numbers<[1], [0], [0], [1], [0, 0, 1, 1], [], []>} : vector<128x128xf32>, vector<128x384xf32>, vector<128x384xf32> -> vector<128x384xf32>
    %34 = arith.mulf %31, %29 : vector<128x384xf32>
    %cst_13 = arith.constant dense<0.000000e+00> : vector<384xf32>
    %35 = vector.multi_reduction <add>, %34, %cst_13 [0] : vector<128x384xf32> to vector<384xf32>
    %36 = vector.shape_cast %35 : vector<384xf32> to vector<1x384xf32>
    %cst_14 = arith.constant 0.000000e+00 : f32
    %37 = vector.broadcast %cst_14 : f32 to vector<1x384xf32>
    %38 = arith.cmpf ogt, %36, %37 : vector<1x384xf32>
    %cst_15 = arith.constant 2.000000e-01 : f32
    %39 = vector.broadcast %cst_15 : f32 to vector<1x384xf32>
    %40 = arith.mulf %39, %36 : vector<1x384xf32>
    %41 = arith.select %38, %36, %40 : vector<1x384xi1>, vector<1x384xf32>
    %cst_16 = arith.constant -1.000000e+30 : f32
    %42 = vector.shape_cast %41 : vector<1x384xf32> to vector<1x384xf32>
    %43 = vector.broadcast %42 : vector<1x384xf32> to vector<128x384xf32>
    %44 = vector.broadcast %cst_16 : f32 to vector<128x384xf32>
    %45 = arith.select %20, %43, %44 : vector<128x384xi1>, vector<128x384xf32>
    %cst_17 = arith.constant dense<0xFF800000> : vector<128xf32>
    %46 = vector.multi_reduction <maximumf>, %45, %cst_17 [1] : vector<128x384xf32> to vector<128xf32>
    %47 = vector.shape_cast %46 : vector<128xf32> to vector<128x1xf32>
    %c0_18 = arith.constant 0 : index
    %c0_19 = arith.constant 0 : index
    %48 = vector.load %arg8[%c0_18, %c0_19] : memref<128x1xf32, #tpu.memory_space<vmem>>, vector<128x1xf32>
    %49 = arith.maximumf %48, %47 : vector<128x1xf32>
    %50 = arith.subf %48, %49 : vector<128x1xf32>
    %51 = math.exp %50 : vector<128x1xf32>
    %52 = vector.broadcast %49 : vector<128x1xf32> to vector<128x384xf32>
    %53 = arith.mulf %21, %52 : vector<128x384xf32>
    %cst_20 = arith.constant dense<0.000000e+00> : vector<384xf32>
    %54 = vector.multi_reduction <add>, %53, %cst_20 [0] : vector<128x384xf32> to vector<384xf32>
    %55 = vector.shape_cast %54 : vector<384xf32> to vector<1x384xf32>
    %56 = arith.subf %41, %55 : vector<1x384xf32>
    %57 = math.exp %56 : vector<1x384xf32>
    %cst_21 = arith.constant 0.000000e+00 : f32
    %58 = vector.broadcast %cst_21 : f32 to vector<1x384xf32>
    %59 = arith.select %7, %57, %58 : vector<1x384xi1>, vector<1x384xf32>
    %60 = vector.broadcast %59 : vector<1x384xf32> to vector<128x384xf32>
    %61 = arith.mulf %33, %60 : vector<128x384xf32>
    %62 = vector.shape_cast %59 : vector<1x384xf32> to vector<1x384xf32>
    %63 = vector.broadcast %62 : vector<1x384xf32> to vector<8x384xf32>
    %64 = tpu.concatenate %61, %63 in 0 : vector<128x384xf32>, vector<8x384xf32> -> vector<136x384xf32>
    %cst_22 = arith.constant dense<0.000000e+00> : vector<128x136xf32>
    %65 = tpu.matmul %21, %64, %cst_22 {dimension_numbers = #tpu.dot_dimension_numbers<[1], [1], [0], [0], [0, 0, 1, 0], [], []>} : vector<128x384xf32>, vector<136x384xf32>, vector<128x136xf32> -> vector<128x136xf32>
    %c0_23 = arith.constant 0 : index
    %c0_24 = arith.constant 0 : index
    %66 = vector.load %arg8[%c0_23, %c0_24] : memref<128x1xf32, #tpu.memory_space<vmem>>, vector<128x1xf32>
    tpu.vector_store %arg8[%c0_23, %c0_24], %49 {strides = array<i32>} : memref<128x1xf32, #tpu.memory_space<vmem>>, vector<128x1xf32>,
    %c0_25 = arith.constant 0 : index
    %c0_26 = arith.constant 0 : index
    %67 = vector.load %arg9[%c0_25, %c0_26] : memref<128x1xf32, #tpu.memory_space<vmem>>, vector<128x1xf32>
    %68 = arith.mulf %51, %67 : vector<128x1xf32>
    %69 = vector.extract_strided_slice %65 {offsets = [0, 128], sizes = [128, 1], strides = [1, 1]} : vector<128x136xf32> to vector<128x1xf32>
    %70 = arith.addf %68, %69 : vector<128x1xf32>
    %c0_27 = arith.constant 0 : index
    %c0_28 = arith.constant 0 : index
    %71 = vector.load %arg9[%c0_27, %c0_28] : memref<128x1xf32, #tpu.memory_space<vmem>>, vector<128x1xf32>
    tpu.vector_store %arg9[%c0_27, %c0_28], %70 {strides = array<i32>} : memref<128x1xf32, #tpu.memory_space<vmem>>, vector<128x1xf32>,
    %c0_29 = arith.constant 0 : index
    %c0_30 = arith.constant 0 : index
    %72 = vector.load %arg10[%c0_29, %c0_30] : memref<128x128xf32, #tpu.memory_space<vmem>>, vector<128x128xf32>
    %73 = vector.broadcast %51 : vector<128x1xf32> to vector<128x128xf32>
    %74 = arith.mulf %73, %72 : vector<128x128xf32>
    %75 = vector.extract_strided_slice %65 {offsets = [0, 0], sizes = [128, 128], strides = [1, 1]} : vector<128x136xf32> to vector<128x128xf32>
    %76 = arith.addf %74, %75 : vector<128x128xf32>
    %c0_31 = arith.constant 0 : index
    %c0_32 = arith.constant 0 : index
    %77 = vector.load %arg10[%c0_31, %c0_32] : memref<128x128xf32, #tpu.memory_space<vmem>>, vector<128x128xf32>
    tpu.vector_store %arg10[%c0_31, %c0_32], %76 {strides = array<i32>} : memref<128x128xf32, #tpu.memory_space<vmem>>, vector<128x128xf32>,
    %c0_i32_33 = arith.constant 0 : i32
    %78 = arith.cmpi eq, %arg0, %c0_i32_33 : i32
    %79 = arith.extui %78 : i1 to i32
    %c0_i32_34 = arith.constant 0 : i32
    %80 = arith.cmpi ne, %79, %c0_i32_34 : i32
    scf.if %80 {
      %c0_35 = arith.constant 0 : index
      %c0_36 = arith.constant 0 : index
      %81 = vector.load %arg9[%c0_35, %c0_36] : memref<128x1xf32, #tpu.memory_space<vmem>>, vector<128x1xf32>
      %cst_37 = arith.constant 0.000000e+00 : f32
      %82 = vector.broadcast %cst_37 : f32 to vector<128x1xf32>
      %83 = arith.cmpf ogt, %81, %82 : vector<128x1xf32>
      %cst_38 = arith.constant 1.000000e-30 : f32
      %84 = vector.broadcast %cst_38 : f32 to vector<128x1xf32>
      %85 = arith.maximumf %81, %84 : vector<128x1xf32>
      %cst_39 = arith.constant 1.000000e+00 : f32
      %86 = vector.broadcast %cst_39 : f32 to vector<128x1xf32>
      %87 = arith.divf %86, %85 : vector<128x1xf32>
      %cst_40 = arith.constant 0.000000e+00 : f32
      %88 = vector.broadcast %cst_40 : f32 to vector<128x1xf32>
      %89 = arith.select %83, %87, %88 : vector<128x1xi1>, vector<128x1xf32>
      %c0_41 = arith.constant 0 : index
      %c0_42 = arith.constant 0 : index
      %90 = vector.load %arg10[%c0_41, %c0_42] : memref<128x128xf32, #tpu.memory_space<vmem>>, vector<128x128xf32>
      %91 = vector.broadcast %89 : vector<128x1xf32> to vector<128x128xf32>
      %92 = arith.mulf %90, %91 : vector<128x128xf32>
      %c0_43 = arith.constant 0 : index
      %c0_44 = arith.constant 0 : index
      %93 = vector.load %arg2[%c0_43, %c0_44] : memref<128x128xf32, #tpu.memory_space<vmem>>, vector<128x128xf32>
      %94 = arith.addf %92, %93 : vector<128x128xf32>
      %c0_45 = arith.constant 0 : index
      %c0_46 = arith.constant 0 : index
      %95 = vector.load %arg5[%c0_45, %c0_46] : memref<128x128xf32, #tpu.memory_space<vmem>>, vector<128x128xf32>
      tpu.vector_store %arg5[%c0_45, %c0_46], %94 {strides = array<i32>} : memref<128x128xf32, #tpu.memory_space<vmem>>, vector<128x128xf32>,
    } else {
    }
    return
  }
  func.func @transform_0(%arg0: i32) -> (i32, i32) {
    %c0_i32 = arith.constant 0 : i32
    %c0_i32_0 = arith.constant 0 : i32
    return %c0_i32, %arg0 : i32, i32
  }
  func.func @transform_1(%arg0: i32) -> (i32, i32) {
    %c0_i32 = arith.constant 0 : i32
    %c0_i32_0 = arith.constant 0 : i32
    %c0_i32_1 = arith.constant 0 : i32
    return %c0_i32, %c0_i32_0 : i32, i32
  }
  func.func @transform_2(%arg0: i32) -> (i32, i32) {
    %c0_i32 = arith.constant 0 : i32
    %c0_i32_0 = arith.constant 0 : i32
    %c0_i32_1 = arith.constant 0 : i32
    return %c0_i32, %c0_i32_0 : i32, i32
  }
  func.func @transform_3(%arg0: i32) -> (i32, i32) {
    %c0_i32 = arith.constant 0 : i32
    %c0_i32_0 = arith.constant 0 : i32
    %c0_i32_1 = arith.constant 0 : i32
    return %c0_i32, %c0_i32_0 : i32, i32
  }
  func.func @transform_4(%arg0: i32) -> (i32, i32) {
    %c0_i32 = arith.constant 0 : i32
    %c0_i32_0 = arith.constant 0 : i32
    %c0_i32_1 = arith.constant 0 : i32
    return %c0_i32, %c0_i32_0 : i32, i32
  }
}

</mosaic_0001>

<llo_original>
// kernel: tpu_custom_call.1
$region0: #{tpu_custom_call.1}
  #allocation0 [shape = 'u32[]', space=smem, size = 0x4, offset = 0x4, fixed_abs, tag = 'smem constant byte address 0x4 - core index']
  #allocation1 [shape = 'u32[72,128]{1,0:T(1,128)}', space=vmem, size = 0x9000, scoped, tag = 'internal scratch']
  #allocation2 [shape = 'f32[128,128]{1,0:T(8,128)}', space=vmem, size = 0x10000, scoped, tag = 'scratch operand']
  #allocation3 [shape = 'f32[128,256]{1,0:T(8,128)}', space=vmem, size = 0x20000, scoped, tag = 'scratch operand']
  #allocation4 [shape = 'f32[128,1]{1,0:T(8,128)}', space=vmem, size = 0x10000, scoped, tag = 'scratch operand']
  #allocation5 [shape = 'f32[128,1]{1,0:T(8,128)}', space=vmem, size = 0x10000, scoped, tag = 'scratch operand']
  #allocation6 [shape = 'f32[128,128]{1,0:T(8,128)}', space=vmem, size = 0x10000, scoped, tag = 'scratch operand']
  %s0 = inlined_call_operand.hbm [shape: s32[8,384], index: 0, kind: input, shape index: {}]
  %s1 = inlined_call_operand.vmem [shape: f32[128,128], index: 1, kind: input, shape index: {}]
  %s2 = inlined_call_operand.hbm [shape: f32[128,256], index: 2, kind: input, shape index: {}]
  %s3 = inlined_call_operand.vmem [shape: f32[128,8], index: 3, kind: input, shape index: {}]
  %s4 = inlined_call_operand.hbm [shape: f32[128,128], index: 4, kind: output, shape index: {}]
  %s5 = sld [smem:[#allocation0]]
  $region42: #{tpu_custom_call.1} parent=0
    _
  %s7 = ssub.s32 1, %s5
  %s8 = scalar_select 0, %s7, %s5
  $region1: #{tpu_custom_call.1} parent=0
    #allocation7 [shape = 'u8[12288]{0}', space=vmem, size = 0x3000, scoped, tag = 'input window, operand 0, single buffered']
    #allocation8 [shape = 's32[1]{0}', space=sflag, size = 0x4, scoped, tag = 'scoped memory for tpu_custom_call.1']
    #allocation9 [shape = 's32[1]{0}', space=sflag, size = 0x4, scoped, tag = 'scoped memory for tpu_custom_call.1']
    #allocation10 [shape = 'u8[131072]{0}', space=vmem, size = 0x20000, scoped, tag = 'input window, operand 2, single buffered']
    #allocation11 [shape = 's32[1]{0}', space=sflag, size = 0x4, scoped, tag = 'scoped memory for tpu_custom_call.1']
    #allocation12 [shape = 'u8[65536]{0}', space=vmem, size = 0x10000, scoped, tag = 'output window, operand 0, single buffered']
    %9 = vsyncpa [#allocation8], 0
    %10 = vsyncpa [#allocation11], 0
    %11 = vsyncpa [#allocation9], 0
    // Predicated region
    $region2: #{tpu_custom_call.1} parent=1 // pred_check
      _
    $region3: #{tpu_custom_call.1} parent=1 // pred_check_branch
      %13 = sbr.rel (0) target = $region5
    $region4: #{tpu_custom_call.1} parent=1 // pred_region
      %15 = vsyncadd [#allocation8], 0
      %s17 = sshll.u32 %s0, 4
      %s18 = int_to_ptr.hbm [resolvable:$true] %s17
      %s19 = sshll.u32 [#allocation7], 4
      %s20 = int_to_ptr.vmem [resolvable:$true] %s19
      %22 = dma.hbm_to_vmem [thread:$0]  %s18, 384, %s20, [#allocation8]
    $region5: #{tpu_custom_call.1} parent=1 // pred_fallthru
      _
    // Predicated region
    $region6: #{tpu_custom_call.1} parent=1 // pred_check
      _
    $region7: #{tpu_custom_call.1} parent=1 // pred_check_branch
      %24 = sbr.rel (0) target = $region9
    $region8: #{tpu_custom_call.1} parent=1 // pred_region
      _
    $region9: #{tpu_custom_call.1} parent=1 // pred_fallthru
      _
    // Predicated region
    $region10: #{tpu_custom_call.1} parent=1 // pred_check
      _
    $region11: #{tpu_custom_call.1} parent=1 // pred_check_branch
      %26 = sbr.rel (0) target = $region13
    $region12: #{tpu_custom_call.1} parent=1 // pred_region
      %28 = vsyncadd [#allocation11], 0
      %s29 = sshll.u32 %s2, 4
      %s30 = int_to_ptr.hbm [resolvable:$true] %s29
      %s31 = sshll.u32 [#allocation10], 4
      %s32 = int_to_ptr.vmem [resolvable:$true] %s31
      %37 = dma.hbm_to_vmem [thread:$0]  %s30, 4096, %s32, [#allocation11], 256, 256, 16
    $region13: #{tpu_custom_call.1} parent=1 // pred_fallthru
      _
    // Predicated region
    $region14: #{tpu_custom_call.1} parent=1 // pred_check
      _
    $region15: #{tpu_custom_call.1} parent=1 // pred_check_branch
      %39 = sbr.rel (0) target = $region17
    $region16: #{tpu_custom_call.1} parent=1 // pred_region
      _
    $region17: #{tpu_custom_call.1} parent=1 // pred_fallthru
      _
    // Predicated region
    $region18: #{tpu_custom_call.1} parent=1 // pred_check
      _
    $region19: #{tpu_custom_call.1} parent=1 // pred_check_branch
      %41 = sbr.rel (0) target = $region21
    $region20: #{tpu_custom_call.1} parent=1 // pred_region
      %43 = dma.done [#allocation8], 384
    $region21: #{tpu_custom_call.1} parent=1 // pred_fallthru
      _
    // Predicated region
    $region22: #{tpu_custom_call.1} parent=1 // pred_check
      _
    $region23: #{tpu_custom_call.1} parent=1 // pred_check_branch
      %45 = sbr.rel (0) target = $region25
    $region24: #{tpu_custom_call.1} parent=1 // pred_region
      %47 = dma.done [#allocation11], 4096
    $region25: #{tpu_custom_call.1} parent=1 // pred_fallthru
      _
    %p48 = scmp.eq.s32.totalorder 0, 0
    // Predicated region
    $region26: #{tpu_custom_call.1} parent=1 // pred_check
      %p49 = pneg %p48
    $region27: #{tpu_custom_call.1} parent=1 // pred_check_branch
      %51 = sbr.rel (%p49) target = $region29
    $region28: #{tpu_custom_call.1} parent=1 // pred_region
      %v52 = vld [vmem:[%s1] sm:$0xff]
      %v53 = vld [vmem:[%s1 + $0x8] sm:$0xff]
      %v54 = vld [vmem:[%s1 + $0x10] sm:$0xff]
      %v55 = vld [vmem:[%s1 + $0x18] sm:$0xff]
      %v56 = vld [vmem:[%s1 + $0x20] sm:$0xff]
      %v57 = vld [vmem:[%s1 + $0x28] sm:$0xff]
      %v58 = vld [vmem:[%s1 + $0x30] sm:$0xff]
      %v59 = vld [vmem:[%s1 + $0x38] sm:$0xff]
      %v60 = vld [vmem:[%s1 + $0x40] sm:$0xff]
      %v61 = vld [vmem:[%s1 + $0x48] sm:$0xff]
      %v62 = vld [vmem:[%s1 + $0x50] sm:$0xff]
      %v63 = vld [vmem:[%s1 + $0x58] sm:$0xff]
      %v64 = vld [vmem:[%s1 + $0x60] sm:$0xff]
      %v65 = vld [vmem:[%s1 + $0x68] sm:$0xff]
      %v66 = vld [vmem:[%s1 + $0x70] sm:$0xff]
      %v67 = vld [vmem:[%s1 + $0x78] sm:$0xff]
      %68 = vxpose.xlu0.b32.start [1/16] %v52, 128
      %69 = vxpose.xlu0.b32.cont [2/16] %v53, 128
      %70 = vxpose.xlu0.b32.cont [3/16] %v54, 128
      %71 = vxpose.xlu0.b32.cont [4/16] %v55, 128
      %72 = vxpose.xlu0.b32.cont [5/16] %v56, 128
      %73 = vxpose.xlu0.b32.cont [6/16] %v57, 128
      %74 = vxpose.xlu0.b32.cont [7/16] %v58, 128
      %75 = vxpose.xlu0.b32.cont [8/16] %v59, 128
      %76 = vxpose.xlu0.b32.cont [9/16] %v60, 128
      %77 = vxpose.xlu0.b32.cont [10/16] %v61, 128
      %78 = vxpose.xlu0.b32.cont [11/16] %v62, 128
      %79 = vxpose.xlu0.b32.cont [12/16] %v63, 128
      %80 = vxpose.xlu0.b32.cont [13/16] %v64, 128
      %81 = vxpose.xlu0.b32.cont [14/16] %v65, 128
      %82 = vxpose.xlu0.b32.cont [15/16] %v66, 128
      %83 = vxpose.xlu0.b32.end [16/16] %v67, 128
      %v84 = vpop.trf.xlu0
      %v85 = vpop.trf.xlu0
      %v86 = vpop.trf.xlu0
      %v87 = vpop.trf.xlu0
      %v88 = vpop.trf.xlu0
      %v89 = vpop.trf.xlu0
      %v90 = vpop.trf.xlu0
      %v91 = vpop.trf.xlu0
      %v92 = vpop.trf.xlu0
      %v93 = vpop.trf.xlu0
      %v94 = vpop.trf.xlu0
      %v95 = vpop.trf.xlu0
      %v96 = vpop.trf.xlu0
      %v97 = vpop.trf.xlu0
      %v98 = vpop.trf.xlu0
      %v99 = vpop.trf.xlu0
      %100 = vst [vmem:[#allocation2] sm:$0xff] %v84
      %101 = vst [vmem:[#allocation2 + $0x8] sm:$0xff] %v85
      %102 = vst [vmem:[#allocation2 + $0x10] sm:$0xff] %v86
      %103 = vst [vmem:[#allocation2 + $0x18] sm:$0xff] %v87
      %104 = vst [vmem:[#allocation2 + $0x20] sm:$0xff] %v88
      %105 = vst [vmem:[#allocation2 + $0x28] sm:$0xff] %v89
      %106 = vst [vmem:[#allocation2 + $0x30] sm:$0xff] %v90
      %107 = vst [vmem:[#allocation2 + $0x38] sm:$0xff] %v91
      %108 = vst [vmem:[#allocation2 + $0x40] sm:$0xff] %v92
      %109 = vst [vmem:[#allocation2 + $0x48] sm:$0xff] %v93
      %110 = vst [vmem:[#allocation2 + $0x50] sm:$0xff] %v94
      %111 = vst [vmem:[#allocation2 + $0x58] sm:$0xff] %v95
      %112 = vst [vmem:[#allocation2 + $0x60] sm:$0xff] %v96
      %113 = vst [vmem:[#allocation2 + $0x68] sm:$0xff] %v97
      %114 = vst [vmem:[#allocation2 + $0x70] sm:$0xff] %v98
      %115 = vst [vmem:[#allocation2 + $0x78] sm:$0xff] %v99
      %v116 = vld [vmem:[#allocation10] sm:$0xff]
      %v117 = vld [vmem:[#allocation10 + $0x8] sm:$0xff]
      %v118 = vld [vmem:[#allocation10 + $0x10] sm:$0xff]
      %v119 = vld [vmem:[#allocation10 + $0x18] sm:$0xff]
      %v120 = vld [vmem:[#allocation10 + $0x20] sm:$0xff]
      %v121 = vld [vmem:[#allocation10 + $0x28] sm:$0xff]
      %v122 = vld [vmem:[#allocation10 + $0x30] sm:$0xff]
      %v123 = vld [vmem:[#allocation10 + $0x38] sm:$0xff]
      %v124 = vld [vmem:[#allocation10 + $0x40] sm:$0xff]
      %v125 = vld [vmem:[#allocation10 + $0x48] sm:$0xff]
      %v126 = vld [vmem:[#allocation10 + $0x50] sm:$0xff]
      %v127 = vld [vmem:[#allocation10 + $0x58] sm:$0xff]
      %v128 = vld [vmem:[#allocation10 + $0x60] sm:$0xff]
      %v129 = vld [vmem:[#allocation10 + $0x68] sm:$0xff]
      %v130 = vld [vmem:[#allocation10 + $0x70] sm:$0xff]
      %v131 = vld [vmem:[#allocation10 + $0x78] sm:$0xff]
      %v132 = vld [vmem:[#allocation10 + $0x80] sm:$0xff]
      %v133 = vld [vmem:[#allocation10 + $0x88] sm:$0xff]
      %v134 = vld [vmem:[#allocation10 + $0x90] sm:$0xff]
      %v135 = vld [vmem:[#allocation10 + $0x98] sm:$0xff]
      %v136 = vld [vmem:[#allocation10 + $0xa0] sm:$0xff]
      %v137 = vld [vmem:[#allocation10 + $0xa8] sm:$0xff]
      %v138 = vld [vmem:[#allocation10 + $0xb0] sm:$0xff]
      %v139 = vld [vmem:[#allocation10 + $0xb8] sm:$0xff]
      %v140 = vld [vmem:[#allocation10 + $0xc0] sm:$0xff]
      %v141 = vld [vmem:[#allocation10 + $0xc8] sm:$0xff]
      %v142 = vld [vmem:[#allocation10 + $0xd0] sm:$0xff]
      %v143 = vld [vmem:[#allocation10 + $0xd8] sm:$0xff]
      %v144 = vld [vmem:[#allocation10 + $0xe0] sm:$0xff]
      %v145 = vld [vmem:[#allocation10 + $0xe8] sm:$0xff]
      %v146 = vld [vmem:[#allocation10 + $0xf0] sm:$0xff]
      %v147 = vld [vmem:[#allocation10 + $0xf8] sm:$0xff]
      %148 = vmatpush.msra.mxu0 %v99
      %149 = vmatpush.msra.mxu0 %v98
      %150 = vmatpush.msra.mxu0 %v97
      %151 = vmatpush.msra.mxu0 %v96
      %152 = vmatpush.msra.mxu0 %v95
      %153 = vmatpush.msra.mxu0 %v94
      %154 = vmatpush.msra.mxu0 %v93
      %155 = vmatpush.msra.mxu0 %v92
      %156 = vmatpush.msra.mxu0 %v91
      %157 = vmatpush.msra.mxu0 %v90
      %158 = vmatpush.msra.mxu0 %v89
      %159 = vmatpush.msra.mxu0 %v88
      %160 = vmatpush.msra.mxu0 %v87
      %161 = vmatpush.msra.mxu0 %v86
      %162 = vmatpush.msra.mxu0 %v85
      %163 = vmatpush.msra.mxu0 %v84
      %164 = vmatmul.f32.gmra.mxu0 %v116
      %v165 = vpop.f32.mrf.mxu0
      %v166 = vadd.f32 0.0, %v165
      %167 = vmatmul.f32.gmra.mxu0 %v118
      %v168 = vpop.f32.mrf.mxu0
      %v169 = vadd.f32 0.0, %v168
      %170 = vmatmul.f32.gmra.mxu0 %v120
      %v171 = vpop.f32.mrf.mxu0
      %v172 = vadd.f32 0.0, %v171
      %173 = vmatmul.f32.gmra.mxu0 %v122
      %v174 = vpop.f32.mrf.mxu0
      %v175 = vadd.f32 0.0, %v174
      %176 = vmatmul.f32.gmra.mxu0 %v124
      %v177 = vpop.f32.mrf.mxu0
      %v178 = vadd.f32 0.0, %v177
      %179 = vmatmul.f32.gmra.mxu0 %v126
      %v180 = vpop.f32.mrf.mxu0
      %v181 = vadd.f32 0.0, %v180
      %182 = vmatmul.f32.gmra.mxu0 %v128
      %v183 = vpop.f32.mrf.mxu0
      %v184 = vadd.f32 0.0, %v183
      %185 = vmatmul.f32.gmra.mxu0 %v130
      %v186 = vpop.f32.mrf.mxu0
      %v187 = vadd.f32 0.0, %v186
      %188 = vmatmul.f32.gmra.mxu0 %v132
      %v189 = vpop.f32.mrf.mxu0
      %v190 = vadd.f32 0.0, %v189
      %191 = vmatmul.f32.gmra.mxu0 %v134
      %v192 = vpop.f32.mrf.mxu0
      %v193 = vadd.f32 0.0, %v192
      %194 = vmatmul.f32.gmra.mxu0 %v136
      %v195 = vpop.f32.mrf.mxu0
      %v196 = vadd.f32 0.0, %v195
      %197 = vmatmul.f32.gmra.mxu0 %v138
      %v198 = vpop.f32.mrf.mxu0
      %v199 = vadd.f32 0.0, %v198
      %200 = vmatmul.f32.gmra.mxu0 %v140
      %v201 = vpop.f32.mrf.mxu0
      %v202 = vadd.f32 0.0, %v201
      %203 = vmatmul.f32.gmra.mxu0 %v142
      %v204 = vpop.f32.mrf.mxu0
      %v205 = vadd.f32 0.0, %v204
      %206 = vmatmul.f32.gmra.mxu0 %v144
      %v207 = vpop.f32.mrf.mxu0
      %v208 = vadd.f32 0.0, %v207
      %209 = vmatmul.f32.gmra.mxu0 %v146
      %v210 = vpop.f32.mrf.mxu0
      %v211 = vadd.f32 0.0, %v210
      %212 = vdwg.mxu0
      %213 = vst [vmem:[#allocation3] sm:$0xff] %v166
      %214 = vst [vmem:[#allocation3 + $0x10] sm:$0xff] %v169
      %215 = vst [vmem:[#allocation3 + $0x20] sm:$0xff] %v172
      %216 = vst [vmem:[#allocation3 + $0x30] sm:$0xff] %v175
      %217 = vst [vmem:[#allocation3 + $0x40] sm:$0xff] %v178
      %218 = vst [vmem:[#allocation3 + $0x50] sm:$0xff] %v181
      %219 = vst [vmem:[#allocation3 + $0x60] sm:$0xff] %v184
      %220 = vst [vmem:[#allocation3 + $0x70] sm:$0xff] %v187
      %221 = vst [vmem:[#allocation3 + $0x80] sm:$0xff] %v190
      %222 = vst [vmem:[#allocation3 + $0x90] sm:$0xff] %v193
      %223 = vst [vmem:[#allocation3 + $0xa0] sm:$0xff] %v196
      %224 = vst [vmem:[#allocation3 + $0xb0] sm:$0xff] %v199
      %225 = vst [vmem:[#allocation3 + $0xc0] sm:$0xff] %v202
      %226 = vst [vmem:[#allocation3 + $0xd0] sm:$0xff] %v205
      %227 = vst [vmem:[#allocation3 + $0xe0] sm:$0xff] %v208
      %228 = vst [vmem:[#allocation3 + $0xf0] sm:$0xff] %v211
      %229 = vmatpush.msra.mxu0 %v99
      %230 = vmatpush.msra.mxu0 %v98
      %231 = vmatpush.msra.mxu0 %v97
      %232 = vmatpush.msra.mxu0 %v96
      %233 = vmatpush.msra.mxu0 %v95
      %234 = vmatpush.msra.mxu0 %v94
      %235 = vmatpush.msra.mxu0 %v93
      %236 = vmatpush.msra.mxu0 %v92
      %237 = vmatpush.msra.mxu0 %v91
      %238 = vmatpush.msra.mxu0 %v90
      %239 = vmatpush.msra.mxu0 %v89
      %240 = vmatpush.msra.mxu0 %v88
      %241 = vmatpush.msra.mxu0 %v87
      %242 = vmatpush.msra.mxu0 %v86
      %243 = vmatpush.msra.mxu0 %v85
      %244 = vmatpush.msra.mxu0 %v84
      %245 = vmatmul.f32.gmra.mxu0 %v117
      %v246 = vpop.f32.mrf.mxu0
      %v247 = vadd.f32 0.0, %v246
      %248 = vmatmul.f32.gmra.mxu0 %v119
      %v249 = vpop.f32.mrf.mxu0
      %v250 = vadd.f32 0.0, %v249
      %251 = vmatmul.f32.gmra.mxu0 %v121
      %v252 = vpop.f32.mrf.mxu0
      %v253 = vadd.f32 0.0, %v252
      %254 = vmatmul.f32.gmra.mxu0 %v123
      %v255 = vpop.f32.mrf.mxu0
      %v256 = vadd.f32 0.0, %v255
      %257 = vmatmul.f32.gmra.mxu0 %v125
      %v258 = vpop.f32.mrf.mxu0
      %v259 = vadd.f32 0.0, %v258
      %260 = vmatmul.f32.gmra.mxu0 %v127
      %v261 = vpop.f32.mrf.mxu0
      %v262 = vadd.f32 0.0, %v261
      %263 = vmatmul.f32.gmra.mxu0 %v129
      %v264 = vpop.f32.mrf.mxu0
      %v265 = vadd.f32 0.0, %v264
      %266 = vmatmul.f32.gmra.mxu0 %v131
      %v267 = vpop.f32.mrf.mxu0
      %v268 = vadd.f32 0.0, %v267
      %269 = vmatmul.f32.gmra.mxu0 %v133
      %v270 = vpop.f32.mrf.mxu0
      %v271 = vadd.f32 0.0, %v270
      %272 = vmatmul.f32.gmra.mxu0 %v135
      %v273 = vpop.f32.mrf.mxu0
      %v274 = vadd.f32 0.0, %v273
      %275 = vmatmul.f32.gmra.mxu0 %v137
      %v276 = vpop.f32.mrf.mxu0
      %v277 = vadd.f32 0.0, %v276
      %278 = vmatmul.f32.gmra.mxu0 %v139
      %v279 = vpop.f32.mrf.mxu0
      %v280 = vadd.f32 0.0, %v279
      %281 = vmatmul.f32.gmra.mxu0 %v141
      %v282 = vpop.f32.mrf.mxu0
      %v283 = vadd.f32 0.0, %v282
      %284 = vmatmul.f32.gmra.mxu0 %v143
      %v285 = vpop.f32.mrf.mxu0
      %v286 = vadd.f32 0.0, %v285
      %287 = vmatmul.f32.gmra.mxu0 %v145
      %v288 = vpop.f32.mrf.mxu0
      %v289 = vadd.f32 0.0, %v288
      %290 = vmatmul.f32.gmra.mxu0 %v147
      %v291 = vpop.f32.mrf.mxu0
      %v292 = vadd.f32 0.0, %v291
      %293 = vdwg.mxu0
      %294 = vst [vmem:[#allocation3 + $0x8] sm:$0xff] %v247
      %295 = vst [vmem:[#allocation3 + $0x18] sm:$0xff] %v250
      %296 = vst [vmem:[#allocation3 + $0x28] sm:$0xff] %v253
      %297 = vst [vmem:[#allocation3 + $0x38] sm:$0xff] %v256
      %298 = vst [vmem:[#allocation3 + $0x48] sm:$0xff] %v259
      %299 = vst [vmem:[#allocation3 + $0x58] sm:$0xff] %v262
      %300 = vst [vmem:[#allocation3 + $0x68] sm:$0xff] %v265
      %301 = vst [vmem:[#allocation3 + $0x78] sm:$0xff] %v268
      %302 = vst [vmem:[#allocation3 + $0x88] sm:$0xff] %v271
      %303 = vst [vmem:[#allocation3 + $0x98] sm:$0xff] %v274
      %304 = vst [vmem:[#allocation3 + $0xa8] sm:$0xff] %v277
      %305 = vst [vmem:[#allocation3 + $0xb8] sm:$0xff] %v280
      %306 = vst [vmem:[#allocation3 + $0xc8] sm:$0xff] %v283
      %307 = vst [vmem:[#allocation3 + $0xd8] sm:$0xff] %v286
      %308 = vst [vmem:[#allocation3 + $0xe8] sm:$0xff] %v289
      %309 = vst [vmem:[#allocation3 + $0xf8] sm:$0xff] %v292
      %vm310 = vcmask 7168
      %311 = vst.msk [vmem:[#allocation4] sm:$0xff] %vm310, -1e+30
      %312 = vst.msk [vmem:[#allocation4 + $0x8] sm:$0xff] %vm310, -1e+30
      %313 = vst.msk [vmem:[#allocation4 + $0x10] sm:$0xff] %vm310, -1e+30
      %314 = vst.msk [vmem:[#allocation4 + $0x18] sm:$0xff] %vm310, -1e+30
      %315 = vst.msk [vmem:[#allocation4 + $0x20] sm:$0xff] %vm310, -1e+30
      %316 = vst.msk [vmem:[#allocation4 + $0x28] sm:$0xff] %vm310, -1e+30
      %317 = vst.msk [vmem:[#allocation4 + $0x30] sm:$0xff] %vm310, -1e+30
      %318 = vst.msk [vmem:[#allocation4 + $0x38] sm:$0xff] %vm310, -1e+30
      %319 = vst.msk [vmem:[#allocation4 + $0x40] sm:$0xff] %vm310, -1e+30
      %320 = vst.msk [vmem:[#allocation4 + $0x48] sm:$0xff] %vm310, -1e+30
      %321 = vst.msk [vmem:[#allocation4 + $0x50] sm:$0xff] %vm310, -1e+30
      %322 = vst.msk [vmem:[#allocation4 + $0x58] sm:$0xff] %vm310, -1e+30
      %323 = vst.msk [vmem:[#allocation4 + $0x60] sm:$0xff] %vm310, -1e+30
      %324 = vst.msk [vmem:[#allocation4 + $0x68] sm:$0xff] %vm310, -1e+30
      %325 = vst.msk [vmem:[#allocation4 + $0x70] sm:$0xff] %vm310, -1e+30
      %326 = vst.msk [vmem:[#allocation4 + $0x78] sm:$0xff] %vm310, -1e+30
      %327 = vst.msk [vmem:[#allocation5] sm:$0xff] %vm310, 0.0
      %328 = vst.msk [vmem:[#allocation5 + $0x8] sm:$0xff] %vm310, 0.0
      %329 = vst.msk [vmem:[#allocation5 + $0x10] sm:$0xff] %vm310, 0.0
      %330 = vst.msk [vmem:[#allocation5 + $0x18] sm:$0xff] %vm310, 0.0
      %331 = vst.msk [vmem:[#allocation5 + $0x20] sm:$0xff] %vm310, 0.0
      %332 = vst.msk [vmem:[#allocation5 + $0x28] sm:$0xff] %vm310, 0.0
      %333 = vst.msk [vmem:[#allocation5 + $0x30] sm:$0xff] %vm310, 0.0
      %334 = vst.msk [vmem:[#allocation5 + $0x38] sm:$0xff] %vm310, 0.0
      %335 = vst.msk [vmem:[#allocation5 + $0x40] sm:$0xff] %vm310, 0.0
      %336 = vst.msk [vmem:[#allocation5 + $0x48] sm:$0xff] %vm310, 0.0
      %337 = vst.msk [vmem:[#allocation5 + $0x50] sm:$0xff] %vm310, 0.0
      %338 = vst.msk [vmem:[#allocation5 + $0x58] sm:$0xff] %vm310, 0.0
      %339 = vst.msk [vmem:[#allocation5 + $0x60] sm:$0xff] %vm310, 0.0
      %340 = vst.msk [vmem:[#allocation5 + $0x68] sm:$0xff] %vm310, 0.0
      %341 = vst.msk [vmem:[#allocation5 + $0x70] sm:$0xff] %vm310, 0.0
      %342 = vst.msk [vmem:[#allocation5 + $0x78] sm:$0xff] %vm310, 0.0
      %343 = vst [vmem:[#allocation6] sm:$0xff] 0.0
      %344 = vst [vmem:[#allocation6 + $0x8] sm:$0xff] 0.0
      %345 = vst [vmem:[#allocation6 + $0x10] sm:$0xff] 0.0
      %346 = vst [vmem:[#allocation6 + $0x18] sm:$0xff] 0.0
      %347 = vst [vmem:[#allocation6 + $0x20] sm:$0xff] 0.0
      %348 = vst [vmem:[#allocation6 + $0x28] sm:$0xff] 0.0
      %349 = vst [vmem:[#allocation6 + $0x30] sm:$0xff] 0.0
      %350 = vst [vmem:[#allocation6 + $0x38] sm:$0xff] 0.0
      %351 = vst [vmem:[#allocation6 + $0x40] sm:$0xff] 0.0
      %352 = vst [vmem:[#allocation6 + $0x48] sm:$0xff] 0.0
      %353 = vst [vmem:[#allocation6 + $0x50] sm:$0xff] 0.0
      %354 = vst [vmem:[#allocation6 + $0x58] sm:$0xff] 0.0
      %355 = vst [vmem:[#allocation6 + $0x60] sm:$0xff] 0.0
      %356 = vst [vmem:[#allocation6 + $0x68] sm:$0xff] 0.0
      %357 = vst [vmem:[#allocation6 + $0x70] sm:$0xff] 0.0
      %358 = vst [vmem:[#allocation6 + $0x78] sm:$0xff] 0.0
    $region29: #{tpu_custom_call.1} parent=1 // pred_fallthru
      _
    %v359 = vld [vmem:[#allocation7] ss:$8 sm:$0x7]
    %s360 = scalar_lea.vmem [#allocation7], 1
    %v361 = vld [vmem:[%s360] ss:$8 sm:$0x7]
    %s362 = scalar_lea.vmem [#allocation7], 2
    %v363 = vld [vmem:[%s362] ss:$8 sm:$0x7]
    %vm364 = vcmp.ge.s32.totalorder %v359, 0
    %v365 = vlaneseq
    %v366 = vshrl.u32 %v365, 7
    %v367 = vadd.s32 %v366, 8
    %v368 = vadd.s32 %v366, 16
    %v369 = vadd.s32 %v366, 24
    %v370 = vadd.s32 %v366, 32
    %v371 = vadd.s32 %v366, 40
    %v372 = vadd.s32 %v366, 48
    %v373 = vadd.s32 %v366, 56
    %v374 = vadd.s32 %v366, 64
    %v375 = vadd.s32 %v366, 72
    %v376 = vadd.s32 %v366, 80
    %v377 = vadd.s32 %v366, 88
    %v378 = vadd.s32 %v366, 96
    %v379 = vadd.s32 %v366, 104
    %v380 = vadd.s32 %v366, 112
    %v381 = vadd.s32 %v366, 120
    %v382 = vadd.s32 %v366, 128
    %v383 = vadd.s32 %v366, 136
    %v384 = vadd.s32 %v366, 144
    %v385 = vadd.s32 %v366, 152
    %v386 = vadd.s32 %v366, 160
    %v387 = vadd.s32 %v366, 168
    %v388 = vadd.s32 %v366, 176
    %v389 = vadd.s32 %v366, 184
    %v390 = vadd.s32 %v366, 192
    %v391 = vadd.s32 %v366, 200
    %v392 = vadd.s32 %v366, 208
    %v393 = vadd.s32 %v366, 216
    %v394 = vadd.s32 %v366, 224
    %v395 = vadd.s32 %v366, 232
    %v396 = vadd.s32 %v366, 240
    %v397 = vadd.s32 %v366, 248
    %v398 = vperm.slane %v359, 0
    %v399 = vperm.slane %v359, 1
    %v400 = vperm.slane %v359, 2
    %vm401 = vcmp.eq.s32.totalorder %v366, %v398
    %vm402 = vcmp.eq.s32.totalorder %v366, %v399
    %vm403 = vcmp.eq.s32.totalorder %v366, %v400
    %vm404 = vcmp.eq.s32.totalorder %v367, %v398
    %vm405 = vcmp.eq.s32.totalorder %v367, %v399
    %vm406 = vcmp.eq.s32.totalorder %v367, %v400
    %vm407 = vcmp.eq.s32.totalorder %v368, %v398
    %vm408 = vcmp.eq.s32.totalorder %v368, %v399
    %vm409 = vcmp.eq.s32.totalorder %v368, %v400
    %vm410 = vcmp.eq.s32.totalorder %v369, %v398
    %vm411 = vcmp.eq.s32.totalorder %v369, %v399
    %vm412 = vcmp.eq.s32.totalorder %v369, %v400
    %vm413 = vcmp.eq.s32.totalorder %v370, %v398
    %vm414 = vcmp.eq.s32.totalorder %v370, %v399
    %vm415 = vcmp.eq.s32.totalorder %v370, %v400
    %vm416 = vcmp.eq.s32.totalorder %v371, %v398
    %vm417 = vcmp.eq.s32.totalorder %v371, %v399
    %vm418 = vcmp.eq.s32.totalorder %v371, %v400
    %vm419 = vcmp.eq.s32.totalorder %v372, %v398
    %vm420 = vcmp.eq.s32.totalorder %v372, %v399
    %vm421 = vcmp.eq.s32.totalorder %v372, %v400
    %vm422 = vcmp.eq.s32.totalorder %v373, %v398
    %vm423 = vcmp.eq.s32.totalorder %v373, %v399
    %vm424 = vcmp.eq.s32.totalorder %v373, %v400
    %vm425 = vcmp.eq.s32.totalorder %v374, %v398
    %vm426 = vcmp.eq.s32.totalorder %v374, %v399
    %vm427 = vcmp.eq.s32.totalorder %v374, %v400
    %vm428 = vcmp.eq.s32.totalorder %v375, %v398
    %vm429 = vcmp.eq.s32.totalorder %v375, %v399
    %vm430 = vcmp.eq.s32.totalorder %v375, %v400
    %vm431 = vcmp.eq.s32.totalorder %v376, %v398
    %vm432 = vcmp.eq.s32.totalorder %v376, %v399
    %vm433 = vcmp.eq.s32.totalorder %v376, %v400
    %vm434 = vcmp.eq.s32.totalorder %v377, %v398
    %vm435 = vcmp.eq.s32.totalorder %v377, %v399
    %vm436 = vcmp.eq.s32.totalorder %v377, %v400
    %vm437 = vcmp.eq.s32.totalorder %v378, %v398
    %vm438 = vcmp.eq.s32.totalorder %v378, %v399
    %vm439 = vcmp.eq.s32.totalorder %v378, %v400
    %vm440 = vcmp.eq.s32.totalorder %v379, %v398
    %vm441 = vcmp.eq.s32.totalorder %v379, %v399
    %vm442 = vcmp.eq.s32.totalorder %v379, %v400
    %vm443 = vcmp.eq.s32.totalorder %v380, %v398
    %vm444 = vcmp.eq.s32.totalorder %v380, %v399
    %vm445 = vcmp.eq.s32.totalorder %v380, %v400
    %vm446 = vcmp.eq.s32.totalorder %v381, %v398
    %vm447 = vcmp.eq.s32.totalorder %v381, %v399
    %vm448 = vcmp.eq.s32.totalorder %v381, %v400
    %vm449 = vcmp.eq.s32.totalorder %v382, %v398
    %vm450 = vcmp.eq.s32.totalorder %v382, %v399
    %vm451 = vcmp.eq.s32.totalorder %v382, %v400
    %vm452 = vcmp.eq.s32.totalorder %v383, %v398
    %vm453 = vcmp.eq.s32.totalorder %v383, %v399
    %vm454 = vcmp.eq.s32.totalorder %v383, %v400
    %vm455 = vcmp.eq.s32.totalorder %v384, %v398
    %vm456 = vcmp.eq.s32.totalorder %v384, %v399
    %vm457 = vcmp.eq.s32.totalorder %v384, %v400
    %vm458 = vcmp.eq.s32.totalorder %v385, %v398
    %vm459 = vcmp.eq.s32.totalorder %v385, %v399
    %vm460 = vcmp.eq.s32.totalorder %v385, %v400
    %vm461 = vcmp.eq.s32.totalorder %v386, %v398
    %vm462 = vcmp.eq.s32.totalorder %v386, %v399
    %vm463 = vcmp.eq.s32.totalorder %v386, %v400
    %vm464 = vcmp.eq.s32.totalorder %v387, %v398
    %vm465 = vcmp.eq.s32.totalorder %v387, %v399
    %vm466 = vcmp.eq.s32.totalorder %v387, %v400
    %vm467 = vcmp.eq.s32.totalorder %v388, %v398
    %vm468 = vcmp.eq.s32.totalorder %v388, %v399
    %vm469 = vcmp.eq.s32.totalorder %v388, %v400
    %vm470 = vcmp.eq.s32.totalorder %v389, %v398
    %vm471 = vcmp.eq.s32.totalorder %v389, %v399
    %vm472 = vcmp.eq.s32.totalorder %v389, %v400
    %vm473 = vcmp.eq.s32.totalorder %v390, %v398
    %vm474 = vcmp.eq.s32.totalorder %v390, %v399
    %vm475 = vcmp.eq.s32.totalorder %v390, %v400
    %vm476 = vcmp.eq.s32.totalorder %v391, %v398
    %vm477 = vcmp.eq.s32.totalorder %v391, %v399
    %vm478 = vcmp.eq.s32.totalorder %v391, %v400
    %vm479 = vcmp.eq.s32.totalorder %v392, %v398
    %vm480 = vcmp.eq.s32.totalorder %v392, %v399
    %vm481 = vcmp.eq.s32.totalorder %v392, %v400
    %vm482 = vcmp.eq.s32.totalorder %v393, %v398
    %vm483 = vcmp.eq.s32.totalorder %v393, %v399
    %vm484 = vcmp.eq.s32.totalorder %v393, %v400
    %vm485 = vcmp.eq.s32.totalorder %v394, %v398
    %vm486 = vcmp.eq.s32.totalorder %v394, %v399
    %vm487 = vcmp.eq.s32.totalorder %v394, %v400
    %vm488 = vcmp.eq.s32.totalorder %v395, %v398
    %vm489 = vcmp.eq.s32.totalorder %v395, %v399
    %vm490 = vcmp.eq.s32.totalorder %v395, %v400
    %vm491 = vcmp.eq.s32.totalorder %v396, %v398
    %vm492 = vcmp.eq.s32.totalorder %v396, %v399
    %vm493 = vcmp.eq.s32.totalorder %v396, %v400
    %vm494 = vcmp.eq.s32.totalorder %v397, %v398
    %vm495 = vcmp.eq.s32.totalorder %v397, %v399
    %vm496 = vcmp.eq.s32.totalorder %v397, %v400
    %v497 = vadd.s32 %v361, 128
    %v498 = vperm.slane %v497, 0
    %v499 = vperm.slane %v497, 1
    %v500 = vperm.slane %v497, 2
    %vm501 = vcmp.eq.s32.totalorder %v366, %v498
    %vm502 = vcmp.eq.s32.totalorder %v366, %v499
    %vm503 = vcmp.eq.s32.totalorder %v366, %v500
    %vm504 = vcmp.eq.s32.totalorder %v367, %v498
    %vm505 = vcmp.eq.s32.totalorder %v367, %v499
    %vm506 = vcmp.eq.s32.totalorder %v367, %v500
    %vm507 = vcmp.eq.s32.totalorder %v368, %v498
    %vm508 = vcmp.eq.s32.totalorder %v368, %v499
    %vm509 = vcmp.eq.s32.totalorder %v368, %v500
    %vm510 = vcmp.eq.s32.totalorder %v369, %v498
    %vm511 = vcmp.eq.s32.totalorder %v369, %v499
    %vm512 = vcmp.eq.s32.totalorder %v369, %v500
    %vm513 = vcmp.eq.s32.totalorder %v370, %v498
    %vm514 = vcmp.eq.s32.totalorder %v370, %v499
    %vm515 = vcmp.eq.s32.totalorder %v370, %v500
    %vm516 = vcmp.eq.s32.totalorder %v371, %v498
    %vm517 = vcmp.eq.s32.totalorder %v371, %v499
    %vm518 = vcmp.eq.s32.totalorder %v371, %v500
    %vm519 = vcmp.eq.s32.totalorder %v372, %v498
    %vm520 = vcmp.eq.s32.totalorder %v372, %v499
    %vm521 = vcmp.eq.s32.totalorder %v372, %v500
    %vm522 = vcmp.eq.s32.totalorder %v373, %v498
    %vm523 = vcmp.eq.s32.totalorder %v373, %v499
    %vm524 = vcmp.eq.s32.totalorder %v373, %v500
    %vm525 = vcmp.eq.s32.totalorder %v374, %v498
    %vm526 = vcmp.eq.s32.totalorder %v374, %v499
    %vm527 = vcmp.eq.s32.totalorder %v374, %v500
    %vm528 = vcmp.eq.s32.totalorder %v375, %v498
    %vm529 = vcmp.eq.s32.totalorder %v375, %v499
    %vm530 = vcmp.eq.s32.totalorder %v375, %v500
    %vm531 = vcmp.eq.s32.totalorder %v376, %v498
    %vm532 = vcmp.eq.s32.totalorder %v376, %v499
    %vm533 = vcmp.eq.s32.totalorder %v376, %v500
    %vm534 = vcmp.eq.s32.totalorder %v377, %v498
    %vm535 = vcmp.eq.s32.totalorder %v377, %v499
    %vm536 = vcmp.eq.s32.totalorder %v377, %v500
    %vm537 = vcmp.eq.s32.totalorder %v378, %v498
    %vm538 = vcmp.eq.s32.totalorder %v378, %v499
    %vm539 = vcmp.eq.s32.totalorder %v378, %v500
    %vm540 = vcmp.eq.s32.totalorder %v379, %v498
    %vm541 = vcmp.eq.s32.totalorder %v379, %v499
    %vm542 = vcmp.eq.s32.totalorder %v379, %v500
    %vm543 = vcmp.eq.s32.totalorder %v380, %v498
    %vm544 = vcmp.eq.s32.totalorder %v380, %v499
    %vm545 = vcmp.eq.s32.totalorder %v380, %v500
    %vm546 = vcmp.eq.s32.totalorder %v381, %v498
    %vm547 = vcmp.eq.s32.totalorder %v381, %v499
    %vm548 = vcmp.eq.s32.totalorder %v381, %v500
    %vm549 = vcmp.eq.s32.totalorder %v382, %v498
    %vm550 = vcmp.eq.s32.totalorder %v382, %v499
    %vm551 = vcmp.eq.s32.totalorder %v382, %v500
    %vm552 = vcmp.eq.s32.totalorder %v383, %v498
    %vm553 = vcmp.eq.s32.totalorder %v383, %v499
    %vm554 = vcmp.eq.s32.totalorder %v383, %v500
    %vm555 = vcmp.eq.s32.totalorder %v384, %v498
    %vm556 = vcmp.eq.s32.totalorder %v384, %v499
    %vm557 = vcmp.eq.s32.totalorder %v384, %v500
    %vm558 = vcmp.eq.s32.totalorder %v385, %v498
    %vm559 = vcmp.eq.s32.totalorder %v385, %v499
    %vm560 = vcmp.eq.s32.totalorder %v385, %v500
    %vm561 = vcmp.eq.s32.totalorder %v386, %v498
    %vm562 = vcmp.eq.s32.totalorder %v386, %v499
    %vm563 = vcmp.eq.s32.totalorder %v386, %v500
    %vm564 = vcmp.eq.s32.totalorder %v387, %v498
    %vm565 = vcmp.eq.s32.totalorder %v387, %v499
    %vm566 = vcmp.eq.s32.totalorder %v387, %v500
    %vm567 = vcmp.eq.s32.totalorder %v388, %v498
    %vm568 = vcmp.eq.s32.totalorder %v388, %v499
    %vm569 = vcmp.eq.s32.totalorder %v388, %v500
    %vm570 = vcmp.eq.s32.totalorder %v389, %v498
    %vm571 = vcmp.eq.s32.totalorder %v389, %v499
    %vm572 = vcmp.eq.s32.totalorder %v389, %v500
    %vm573 = vcmp.eq.s32.totalorder %v390, %v498
    %vm574 = vcmp.eq.s32.totalorder %v390, %v499
    %vm575 = vcmp.eq.s32.totalorder %v390, %v500
    %vm576 = vcmp.eq.s32.totalorder %v391, %v498
    %vm577 = vcmp.eq.s32.totalorder %v391, %v499
    %vm578 = vcmp.eq.s32.totalorder %v391, %v500
    %vm579 = vcmp.eq.s32.totalorder %v392, %v498
    %vm580 = vcmp.eq.s32.totalorder %v392, %v499
    %vm581 = vcmp.eq.s32.totalorder %v392, %v500
    %vm582 = vcmp.eq.s32.totalorder %v393, %v498
    %vm583 = vcmp.eq.s32.totalorder %v393, %v499
    %vm584 = vcmp.eq.s32.totalorder %v393, %v500
    %vm585 = vcmp.eq.s32.totalorder %v394, %v498
    %vm586 = vcmp.eq.s32.totalorder %v394, %v499
    %vm587 = vcmp.eq.s32.totalorder %v394, %v500
    %vm588 = vcmp.eq.s32.totalorder %v395, %v498
    %vm589 = vcmp.eq.s32.totalorder %v395, %v499
    %vm590 = vcmp.eq.s32.totalorder %v395, %v500
    %vm591 = vcmp.eq.s32.totalorder %v396, %v498
    %vm592 = vcmp.eq.s32.totalorder %v396, %v499
    %vm593 = vcmp.eq.s32.totalorder %v396, %v500
    %vm594 = vcmp.eq.s32.totalorder %v397, %v498
    %vm595 = vcmp.eq.s32.totalorder %v397, %v499
    %vm596 = vcmp.eq.s32.totalorder %v397, %v500
    %vm597 = vmor %vm401, %vm501
    %vm598 = vmor %vm402, %vm502
    %vm599 = vmor %vm403, %vm503
    %vm600 = vmor %vm404, %vm504
    %vm601 = vmor %vm405, %vm505
    %vm602 = vmor %vm406, %vm506
    %vm603 = vmor %vm407, %vm507
    %vm604 = vmor %vm408, %vm508
    %vm605 = vmor %vm409, %vm509
    %vm606 = vmor %vm410, %vm510
    %vm607 = vmor %vm411, %vm511
    %vm608 = vmor %vm412, %vm512
    %vm609 = vmor %vm413, %vm513
    %vm610 = vmor %vm414, %vm514
    %vm611 = vmor %vm415, %vm515
    %vm612 = vmor %vm416, %vm516
    %vm613 = vmor %vm417, %vm517
    %vm614 = vmor %vm418, %vm518
    %vm615 = vmor %vm419, %vm519
    %vm616 = vmor %vm420, %vm520
    %vm617 = vmor %vm421, %vm521
    %vm618 = vmor %vm422, %vm522
    %vm619 = vmor %vm423, %vm523
    %vm620 = vmor %vm424, %vm524
    %vm621 = vmor %vm425, %vm525
    %vm622 = vmor %vm426, %vm526
    %vm623 = vmor %vm427, %vm527
    %vm624 = vmor %vm428, %vm528
    %vm625 = vmor %vm429, %vm529
    %vm626 = vmor %vm430, %vm530
    %vm627 = vmor %vm431, %vm531
    %vm628 = vmor %vm432, %vm532
    %vm629 = vmor %vm433, %vm533
    %vm630 = vmor %vm434, %vm534
    %vm631 = vmor %vm435, %vm535
    %vm632 = vmor %vm436, %vm536
    %vm633 = vmor %vm437, %vm537
    %vm634 = vmor %vm438, %vm538
    %vm635 = vmor %vm439, %vm539
    %vm636 = vmor %vm440, %vm540
    %vm637 = vmor %vm441, %vm541
    %vm638 = vmor %vm442, %vm542
    %vm639 = vmor %vm443, %vm543
    %vm640 = vmor %vm444, %vm544
    %vm641 = vmor %vm445, %vm545
    %vm642 = vmor %vm446, %vm546
    %vm643 = vmor %vm447, %vm547
    %vm644 = vmor %vm448, %vm548
    %vm645 = vmor %vm449, %vm549
    %vm646 = vmor %vm450, %vm550
    %vm647 = vmor %vm451, %vm551
    %vm648 = vmor %vm452, %vm552
    %vm649 = vmor %vm453, %vm553
    %vm650 = vmor %vm454, %vm554
    %vm651 = vmor %vm455, %vm555
    %vm652 = vmor %vm456, %vm556
    %vm653 = vmor %vm457, %vm557
    %vm654 = vmor %vm458, %vm558
    %vm655 = vmor %vm459, %vm559
    %vm656 = vmor %vm460, %vm560
    %vm657 = vmor %vm461, %vm561
    %vm658 = vmor %vm462, %vm562
    %vm659 = vmor %vm463, %vm563
    %vm660 = vmor %vm464, %vm564
    %vm661 = vmor %vm465, %vm565
    %vm662 = vmor %vm466, %vm566
    %vm663 = vmor %vm467, %vm567
    %vm664 = vmor %vm468, %vm568
    %vm665 = vmor %vm469, %vm569
    %vm666 = vmor %vm470, %vm570
    %vm667 = vmor %vm471, %vm571
    %vm668 = vmor %vm472, %vm572
    %vm669 = vmor %vm473, %vm573
    %vm670 = vmor %vm474, %vm574
    %vm671 = vmor %vm475, %vm575
    %vm672 = vmor %vm476, %vm576
    %vm673 = vmor %vm477, %vm577
    %vm674 = vmor %vm478, %vm578
    %vm675 = vmor %vm479, %vm579
    %vm676 = vmor %vm480, %vm580
    %vm677 = vmor %vm481, %vm581
    %vm678 = vmor %vm482, %vm582
    %vm679 = vmor %vm483, %vm583
    %vm680 = vmor %vm484, %vm584
    %vm681 = vmor %vm485, %vm585
    %vm682 = vmor %vm486, %vm586
    %vm683 = vmor %vm487, %vm587
    %vm684 = vmor %vm488, %vm588
    %vm685 = vmor %vm489, %vm589
    %vm686 = vmor %vm490, %vm590
    %vm687 = vmor %vm491, %vm591
    %vm688 = vmor %vm492, %vm592
    %vm689 = vmor %vm493, %vm593
    %vm690 = vmor %vm494, %vm594
    %vm691 = vmor %vm495, %vm595
    %vm692 = vmor %vm496, %vm596
    %v693 = vsel %vm364, 1, 0
    %v694 = vperm.slane %v693, 0
    %v695 = vperm.slane %v693, 1
    %v696 = vperm.slane %v693, 2
    %vm697 = vcmp.eq.s32.totalorder %v694, 1
    %vm698 = vcmp.eq.s32.totalorder %v695, 1
    %vm699 = vcmp.eq.s32.totalorder %v696, 1
    %vm700 = vmand %vm597, %vm697
    %vm701 = vmand %vm598, %vm698
    %vm702 = vmand %vm599, %vm699
    %vm703 = vmand %vm600, %vm697
    %vm704 = vmand %vm601, %vm698
    %vm705 = vmand %vm602, %vm699
    %vm706 = vmand %vm603, %vm697
    %vm707 = vmand %vm604, %vm698
    %vm708 = vmand %vm605, %vm699
    %vm709 = vmand %vm606, %vm697
    %vm710 = vmand %vm607, %vm698
    %vm711 = vmand %vm608, %vm699
    %vm712 = vmand %vm609, %vm697
    %vm713 = vmand %vm610, %vm698
    %vm714 = vmand %vm611, %vm699
    %vm715 = vmand %vm612, %vm697
    %vm716 = vmand %vm613, %vm698
    %vm717 = vmand %vm614, %vm699
    %vm718 = vmand %vm615, %vm697
    %vm719 = vmand %vm616, %vm698
    %vm720 = vmand %vm617, %vm699
    %vm721 = vmand %vm618, %vm697
    %vm722 = vmand %vm619, %vm698
    %vm723 = vmand %vm620, %vm699
    %vm724 = vmand %vm621, %vm697
    %vm725 = vmand %vm622, %vm698
    %vm726 = vmand %vm623, %vm699
    %vm727 = vmand %vm624, %vm697
    %vm728 = vmand %vm625, %vm698
    %vm729 = vmand %vm626, %vm699
    %vm730 = vmand %vm627, %vm697
    %vm731 = vmand %vm628, %vm698
    %vm732 = vmand %vm629, %vm699
    %vm733 = vmand %vm630, %vm697
    %vm734 = vmand %vm631, %vm698
    %vm735 = vmand %vm632, %vm699
    %vm736 = vmand %vm633, %vm697
    %vm737 = vmand %vm634, %vm698
    %vm738 = vmand %vm635, %vm699
    %vm739 = vmand %vm636, %vm697
    %vm740 = vmand %vm637, %vm698
    %vm741 = vmand %vm638, %vm699
    %vm742 = vmand %vm639, %vm697
    %vm743 = vmand %vm640, %vm698
    %vm744 = vmand %vm641, %vm699
    %vm745 = vmand %vm642, %vm697
    %vm746 = vmand %vm643, %vm698
    %vm747 = vmand %vm644, %vm699
    %vm748 = vmand %vm645, %vm697
    %vm749 = vmand %vm646, %vm698
    %vm750 = vmand %vm647, %vm699
    %vm751 = vmand %vm648, %vm697
    %vm752 = vmand %vm649, %vm698
    %vm753 = vmand %vm650, %vm699
    %vm754 = vmand %vm651, %vm697
    %vm755 = vmand %vm652, %vm698
    %vm756 = vmand %vm653, %vm699
    %vm757 = vmand %vm654, %vm697
    %vm758 = vmand %vm655, %vm698
    %vm759 = vmand %vm656, %vm699
    %vm760 = vmand %vm657, %vm697
    %vm761 = vmand %vm658, %vm698
    %vm762 = vmand %vm659, %vm699
    %vm763 = vmand %vm660, %vm697
    %vm764 = vmand %vm661, %vm698
    %vm765 = vmand %vm662, %vm699
    %vm766 = vmand %vm663, %vm697
    %vm767 = vmand %vm664, %vm698
    %vm768 = vmand %vm665, %vm699
    %vm769 = vmand %vm666, %vm697
    %vm770 = vmand %vm667, %vm698
    %vm771 = vmand %vm668, %vm699
    %vm772 = vmand %vm669, %vm697
    %vm773 = vmand %vm670, %vm698
    %vm774 = vmand %vm671, %vm699
    %vm775 = vmand %vm672, %vm697
    %vm776 = vmand %vm673, %vm698
    %vm777 = vmand %vm674, %vm699
    %vm778 = vmand %vm675, %vm697
    %vm779 = vmand %vm676, %vm698
    %vm780 = vmand %vm677, %vm699
    %vm781 = vmand %vm678, %vm697
    %vm782 = vmand %vm679, %vm698
    %vm783 = vmand %vm680, %vm699
    %vm784 = vmand %vm681, %vm697
    %vm785 = vmand %vm682, %vm698
    %vm786 = vmand %vm683, %vm699
    %vm787 = vmand %vm684, %vm697
    %vm788 = vmand %vm685, %vm698
    %vm789 = vmand %vm686, %vm699
    %vm790 = vmand %vm687, %vm697
    %vm791 = vmand %vm688, %vm698
    %vm792 = vmand %vm689, %vm699
    %vm793 = vmand %vm690, %vm697
    %vm794 = vmand %vm691, %vm698
    %vm795 = vmand %vm692, %vm699
    %v796 = vsel %vm700, 1, 0
    %v797 = vsel %vm701, 1, 0
    %v798 = vsel %vm702, 1, 0
    %v799 = vsel %vm703, 1, 0
    %v800 = vsel %vm704, 1, 0
    %v801 = vsel %vm705, 1, 0
    %v802 = vsel %vm706, 1, 0
    %v803 = vsel %vm707, 1, 0
    %v804 = vsel %vm708, 1, 0
    %v805 = vsel %vm709, 1, 0
    %v806 = vsel %vm710, 1, 0
    %v807 = vsel %vm711, 1, 0
    %v808 = vsel %vm712, 1, 0
    %v809 = vsel %vm713, 1, 0
    %v810 = vsel %vm714, 1, 0
    %v811 = vsel %vm715, 1, 0
    %v812 = vsel %vm716, 1, 0
    %v813 = vsel %vm717, 1, 0
    %v814 = vsel %vm718, 1, 0
    %v815 = vsel %vm719, 1, 0
    %v816 = vsel %vm720, 1, 0
    %v817 = vsel %vm721, 1, 0
    %v818 = vsel %vm722, 1, 0
    %v819 = vsel %vm723, 1, 0
    %v820 = vsel %vm724, 1, 0
    %v821 = vsel %vm725, 1, 0
    %v822 = vsel %vm726, 1, 0
    %v823 = vsel %vm727, 1, 0
    %v824 = vsel %vm728, 1, 0
    %v825 = vsel %vm729, 1, 0
    %v826 = vsel %vm730, 1, 0
    %v827 = vsel %vm731, 1, 0
    %v828 = vsel %vm732, 1, 0
    %v829 = vsel %vm733, 1, 0
    %v830 = vsel %vm734, 1, 0
    %v831 = vsel %vm735, 1, 0
    %v832 = vsel %vm736, 1, 0
    %v833 = vsel %vm737, 1, 0
    %v834 = vsel %vm738, 1, 0
    %v835 = vsel %vm739, 1, 0
    %v836 = vsel %vm740, 1, 0
    %v837 = vsel %vm741, 1, 0
    %v838 = vsel %vm742, 1, 0
    %v839 = vsel %vm743, 1, 0
    %v840 = vsel %vm744, 1, 0
    %v841 = vsel %vm745, 1, 0
    %v842 = vsel %vm746, 1, 0
    %v843 = vsel %vm747, 1, 0
    %v844 = vsel %vm748, 1, 0
    %v845 = vsel %vm749, 1, 0
    %v846 = vsel %vm750, 1, 0
    %v847 = vsel %vm751, 1, 0
    %v848 = vsel %vm752, 1, 0
    %v849 = vsel %vm753, 1, 0
    %v850 = vsel %vm754, 1, 0
    %v851 = vsel %vm755, 1, 0
    %v852 = vsel %vm756, 1, 0
    %v853 = vsel %vm757, 1, 0
    %v854 = vsel %vm758, 1, 0
    %v855 = vsel %vm759, 1, 0
    %v856 = vsel %vm760, 1, 0
    %v857 = vsel %vm761, 1, 0
    %v858 = vsel %vm762, 1, 0
    %v859 = vsel %vm763, 1, 0
    %v860 = vsel %vm764, 1, 0
    %v861 = vsel %vm765, 1, 0
    %v862 = vsel %vm766, 1, 0
    %v863 = vsel %vm767, 1, 0
    %v864 = vsel %vm768, 1, 0
    %v865 = vsel %vm769, 1, 0
    %v866 = vsel %vm770, 1, 0
    %v867 = vsel %vm771, 1, 0
    %v868 = vsel %vm772, 1, 0
    %v869 = vsel %vm773, 1, 0
    %v870 = vsel %vm774, 1, 0
    %v871 = vsel %vm775, 1, 0
    %v872 = vsel %vm776, 1, 0
    %v873 = vsel %vm777, 1, 0
    %v874 = vsel %vm778, 1, 0
    %v875 = vsel %vm779, 1, 0
    %v876 = vsel %vm780, 1, 0
    %v877 = vsel %vm781, 1, 0
    %v878 = vsel %vm782, 1, 0
    %v879 = vsel %vm783, 1, 0
    %v880 = vsel %vm784, 1, 0
    %v881 = vsel %vm785, 1, 0
    %v882 = vsel %vm786, 1, 0
    %v883 = vsel %vm787, 1, 0
    %v884 = vsel %vm788, 1, 0
    %v885 = vsel %vm789, 1, 0
    %v886 = vsel %vm790, 1, 0
    %v887 = vsel %vm791, 1, 0
    %v888 = vsel %vm792, 1, 0
    %v889 = vsel %vm793, 1, 0
    %v890 = vsel %vm794, 1, 0
    %v891 = vsel %vm795, 1, 0
    %v892 = vcvt.s32.f32 %v796
    %v893 = vcvt.s32.f32 %v797
    %v894 = vcvt.s32.f32 %v798
    %v895 = vcvt.s32.f32 %v799
    %v896 = vcvt.s32.f32 %v800
    %v897 = vcvt.s32.f32 %v801
    %v898 = vcvt.s32.f32 %v802
    %v899 = vcvt.s32.f32 %v803
    %v900 = vcvt.s32.f32 %v804
    %v901 = vcvt.s32.f32 %v805
    %v902 = vcvt.s32.f32 %v806
    %v903 = vcvt.s32.f32 %v807
    %v904 = vcvt.s32.f32 %v808
    %v905 = vcvt.s32.f32 %v809
    %v906 = vcvt.s32.f32 %v810
    %v907 = vcvt.s32.f32 %v811
    %v908 = vcvt.s32.f32 %v812
    %v909 = vcvt.s32.f32 %v813
    %v910 = vcvt.s32.f32 %v814
    %v911 = vcvt.s32.f32 %v815
    %v912 = vcvt.s32.f32 %v816
    %v913 = vcvt.s32.f32 %v817
    %v914 = vcvt.s32.f32 %v818
    %v915 = vcvt.s32.f32 %v819
    %v916 = vcvt.s32.f32 %v820
    %v917 = vcvt.s32.f32 %v821
    %v918 = vcvt.s32.f32 %v822
    %v919 = vcvt.s32.f32 %v823
    %v920 = vcvt.s32.f32 %v824
    %v921 = vcvt.s32.f32 %v825
    %v922 = vcvt.s32.f32 %v826
    %v923 = vcvt.s32.f32 %v827
    %v924 = vcvt.s32.f32 %v828
    %v925 = vcvt.s32.f32 %v829
    %v926 = vcvt.s32.f32 %v830
    %v927 = vcvt.s32.f32 %v831
    %v928 = vcvt.s32.f32 %v832
    %v929 = vcvt.s32.f32 %v833
    %v930 = vcvt.s32.f32 %v834
    %v931 = vcvt.s32.f32 %v835
    %v932 = vcvt.s32.f32 %v836
    %v933 = vcvt.s32.f32 %v837
    %v934 = vcvt.s32.f32 %v838
    %v935 = vcvt.s32.f32 %v839
    %v936 = vcvt.s32.f32 %v840
    %v937 = vcvt.s32.f32 %v841
    %v938 = vcvt.s32.f32 %v842
    %v939 = vcvt.s32.f32 %v843
    %v940 = vcvt.s32.f32 %v844
    %v941 = vcvt.s32.f32 %v845
    %v942 = vcvt.s32.f32 %v846
    %v943 = vcvt.s32.f32 %v847
    %v944 = vcvt.s32.f32 %v848
    %v945 = vcvt.s32.f32 %v849
    %v946 = vcvt.s32.f32 %v850
    %v947 = vcvt.s32.f32 %v851
    %v948 = vcvt.s32.f32 %v852
    %v949 = vcvt.s32.f32 %v853
    %v950 = vcvt.s32.f32 %v854
    %v951 = vcvt.s32.f32 %v855
    %v952 = vcvt.s32.f32 %v856
    %v953 = vcvt.s32.f32 %v857
    %v954 = vcvt.s32.f32 %v858
    %v955 = vcvt.s32.f32 %v859
    %v956 = vcvt.s32.f32 %v860
    %v957 = vcvt.s32.f32 %v861
    %v958 = vcvt.s32.f32 %v862
    %v959 = vcvt.s32.f32 %v863
    %v960 = vcvt.s32.f32 %v864
    %v961 = vcvt.s32.f32 %v865
    %v962 = vcvt.s32.f32 %v866
    %v963 = vcvt.s32.f32 %v867
    %v964 = vcvt.s32.f32 %v868
    %v965 = vcvt.s32.f32 %v869
    %v966 = vcvt.s32.f32 %v870
    %v967 = vcvt.s32.f32 %v871
    %v968 = vcvt.s32.f32 %v872
    %v969 = vcvt.s32.f32 %v873
    %v970 = vcvt.s32.f32 %v874
    %v971 = vcvt.s32.f32 %v875
    %v972 = vcvt.s32.f32 %v876
    %v973 = vcvt.s32.f32 %v877
    %v974 = vcvt.s32.f32 %v878
    %v975 = vcvt.s32.f32 %v879
    %v976 = vcvt.s32.f32 %v880
    %v977 = vcvt.s32.f32 %v881
    %v978 = vcvt.s32.f32 %v882
    %v979 = vcvt.s32.f32 %v883
    %v980 = vcvt.s32.f32 %v884
    %v981 = vcvt.s32.f32 %v885
    %v982 = vcvt.s32.f32 %v886
    %v983 = vcvt.s32.f32 %v887
    %v984 = vcvt.s32.f32 %v888
    %v985 = vcvt.s32.f32 %v889
    %v986 = vcvt.s32.f32 %v890
    %v987 = vcvt.s32.f32 %v891
    %v988 = vperm.slane %v363, 0
    %v989 = vperm.slane %v363, 1
    %v990 = vperm.slane %v363, 2
    %vm991 = vcmp.eq.s32.totalorder %v366, %v988
    %vm992 = vcmp.eq.s32.totalorder %v366, %v989
    %vm993 = vcmp.eq.s32.totalorder %v366, %v990
    %v994 = vsel %vm991, 1, 0
    %v995 = vsel %vm992, 1, 0
    %v996 = vsel %vm993, 1, 0
    %v997 = vcvt.s32.f32 %v994
    %v998 = vcvt.s32.f32 %v995
    %v999 = vcvt.s32.f32 %v996
    %v1000 = vld [vmem:[%s3] sm:$0xff]
    %v1001 = vld [vmem:[%s3 + $0x8] sm:$0xff]
    %v1002 = vld [vmem:[%s3 + $0x10] sm:$0xff]
    %v1003 = vld [vmem:[%s3 + $0x18] sm:$0xff]
    %v1004 = vld [vmem:[%s3 + $0x20] sm:$0xff]
    %v1005 = vld [vmem:[%s3 + $0x28] sm:$0xff]
    %v1006 = vld [vmem:[%s3 + $0x30] sm:$0xff]
    %v1007 = vld [vmem:[%s3 + $0x38] sm:$0xff]
    %v1008 = vld [vmem:[%s3 + $0x40] sm:$0xff]
    %v1009 = vld [vmem:[%s3 + $0x48] sm:$0xff]
    %v1010 = vld [vmem:[%s3 + $0x50] sm:$0xff]
    %v1011 = vld [vmem:[%s3 + $0x58] sm:$0xff]
    %v1012 = vld [vmem:[%s3 + $0x60] sm:$0xff]
    %v1013 = vld [vmem:[%s3 + $0x68] sm:$0xff]
    %v1014 = vld [vmem:[%s3 + $0x70] sm:$0xff]
    %v1015 = vld [vmem:[%s3 + $0x78] sm:$0xff]
    %vm1016 = vcmask 64512
    %v1018 = vsel %vm1016, %v1000, 0
    %v1021 = vsel %vm1016, %v1001, 0
    %v1024 = vsel %vm1016, %v1002, 0
    %v1027 = vsel %vm1016, %v1003, 0
    %v1030 = vsel %vm1016, %v1004, 0
    %v1033 = vsel %vm1016, %v1005, 0
    %v1036 = vsel %vm1016, %v1006, 0
    %v1039 = vsel %vm1016, %v1007, 0
    %v1042 = vsel %vm1016, %v1008, 0
    %v1045 = vsel %vm1016, %v1009, 0
    %v1048 = vsel %vm1016, %v1010, 0
    %v1051 = vsel %vm1016, %v1011, 0
    %v1054 = vsel %vm1016, %v1012, 0
    %v1057 = vsel %vm1016, %v1013, 0
    %v1060 = vsel %vm1016, %v1014, 0
    %v1063 = vsel %vm1016, %v1015, 0
    %1065 = vmatpush.msra.mxu0 0.0
    %1066 = vmatpush.msra.mxu0 0.0
    %1067 = vmatpush.msra.mxu0 0.0
    %1068 = vmatpush.msra.mxu0 0.0
    %1069 = vmatpush.msra.mxu0 0.0
    %1070 = vmatpush.msra.mxu0 0.0
    %1071 = vmatpush.msra.mxu0 0.0
    %1072 = vmatpush.msra.mxu0 0.0
    %1073 = vmatpush.msra.mxu0 0.0
    %1074 = vmatpush.msra.mxu0 0.0
    %1075 = vmatpush.msra.mxu0 0.0
    %1076 = vmatpush.msra.mxu0 0.0
    %1077 = vmatpush.msra.mxu0 0.0
    %1078 = vmatpush.msra.mxu0 0.0
    %1079 = vmatpush.msra.mxu0 0.0
    %1080 = vmatpush.msra.mxu0 %v997
    %1081 = vmatmul.f32.gmra.mxu0 %v1018
    %v1082 = vpop.f32.mrf.mxu0
    %v1083 = vadd.f32 0.0, %v1082
    %1084 = vmatmul.f32.gmra.mxu0 %v1021
    %v1085 = vpop.f32.mrf.mxu0
    %v1086 = vadd.f32 0.0, %v1085
    %1087 = vmatmul.f32.gmra.mxu0 %v1024
    %v1088 = vpop.f32.mrf.mxu0
    %v1089 = vadd.f32 0.0, %v1088
    %1090 = vmatmul.f32.gmra.mxu0 %v1027
    %v1091 = vpop.f32.mrf.mxu0
    %v1092 = vadd.f32 0.0, %v1091
    %1093 = vmatmul.f32.gmra.mxu0 %v1030
    %v1094 = vpop.f32.mrf.mxu0
    %v1095 = vadd.f32 0.0, %v1094
    %1096 = vmatmul.f32.gmra.mxu0 %v1033
    %v1097 = vpop.f32.mrf.mxu0
    %v1098 = vadd.f32 0.0, %v1097
    %1099 = vmatmul.f32.gmra.mxu0 %v1036
    %v1100 = vpop.f32.mrf.mxu0
    %v1101 = vadd.f32 0.0, %v1100
    %1102 = vmatmul.f32.gmra.mxu0 %v1039
    %v1103 = vpop.f32.mrf.mxu0
    %v1104 = vadd.f32 0.0, %v1103
    %1105 = vmatmul.f32.gmra.mxu0 %v1042
    %v1106 = vpop.f32.mrf.mxu0
    %v1107 = vadd.f32 0.0, %v1106
    %1108 = vmatmul.f32.gmra.mxu0 %v1045
    %v1109 = vpop.f32.mrf.mxu0
    %v1110 = vadd.f32 0.0, %v1109
    %1111 = vmatmul.f32.gmra.mxu0 %v1048
    %v1112 = vpop.f32.mrf.mxu0
    %v1113 = vadd.f32 0.0, %v1112
    %1114 = vmatmul.f32.gmra.mxu0 %v1051
    %v1115 = vpop.f32.mrf.mxu0
    %v1116 = vadd.f32 0.0, %v1115
    %1117 = vmatmul.f32.gmra.mxu0 %v1054
    %v1118 = vpop.f32.mrf.mxu0
    %v1119 = vadd.f32 0.0, %v1118
    %1120 = vmatmul.f32.gmra.mxu0 %v1057
    %v1121 = vpop.f32.mrf.mxu0
    %v1122 = vadd.f32 0.0, %v1121
    %1123 = vmatmul.f32.gmra.mxu0 %v1060
    %v1124 = vpop.f32.mrf.mxu0
    %v1125 = vadd.f32 0.0, %v1124
    %1126 = vmatmul.f32.gmra.mxu0 %v1063
    %v1127 = vpop.f32.mrf.mxu0
    %v1128 = vadd.f32 0.0, %v1127
    %1129 = vdwg.mxu0
    %1130 = vmatpush.msra.mxu0 0.0
    %1131 = vmatpush.msra.mxu0 0.0
    %1132 = vmatpush.msra.mxu0 0.0
    %1133 = vmatpush.msra.mxu0 0.0
    %1134 = vmatpush.msra.mxu0 0.0
    %1135 = vmatpush.msra.mxu0 0.0
    %1136 = vmatpush.msra.mxu0 0.0
    %1137 = vmatpush.msra.mxu0 0.0
    %1138 = vmatpush.msra.mxu0 0.0
    %1139 = vmatpush.msra.mxu0 0.0
    %1140 = vmatpush.msra.mxu0 0.0
    %1141 = vmatpush.msra.mxu0 0.0
    %1142 = vmatpush.msra.mxu0 0.0
    %1143 = vmatpush.msra.mxu0 0.0
    %1144 = vmatpush.msra.mxu0 0.0
    %1145 = vmatpush.msra.mxu0 %v998
    %1146 = vmatmul.f32.gmra.mxu0 %v1018
    %v1147 = vpop.f32.mrf.mxu0
    %v1148 = vadd.f32 0.0, %v1147
    %1149 = vmatmul.f32.gmra.mxu0 %v1021
    %v1150 = vpop.f32.mrf.mxu0
    %v1151 = vadd.f32 0.0, %v1150
    %1152 = vmatmul.f32.gmra.mxu0 %v1024
    %v1153 = vpop.f32.mrf.mxu0
    %v1154 = vadd.f32 0.0, %v1153
    %1155 = vmatmul.f32.gmra.mxu0 %v1027
    %v1156 = vpop.f32.mrf.mxu0
    %v1157 = vadd.f32 0.0, %v1156
    %1158 = vmatmul.f32.gmra.mxu0 %v1030
    %v1159 = vpop.f32.mrf.mxu0
    %v1160 = vadd.f32 0.0, %v1159
    %1161 = vmatmul.f32.gmra.mxu0 %v1033
    %v1162 = vpop.f32.mrf.mxu0
    %v1163 = vadd.f32 0.0, %v1162
    %1164 = vmatmul.f32.gmra.mxu0 %v1036
    %v1165 = vpop.f32.mrf.mxu0
    %v1166 = vadd.f32 0.0, %v1165
    %1167 = vmatmul.f32.gmra.mxu0 %v1039
    %v1168 = vpop.f32.mrf.mxu0
    %v1169 = vadd.f32 0.0, %v1168
    %1170 = vmatmul.f32.gmra.mxu0 %v1042
    %v1171 = vpop.f32.mrf.mxu0
    %v1172 = vadd.f32 0.0, %v1171
    %1173 = vmatmul.f32.gmra.mxu0 %v1045
    %v1174 = vpop.f32.mrf.mxu0
    %v1175 = vadd.f32 0.0, %v1174
    %1176 = vmatmul.f32.gmra.mxu0 %v1048
    %v1177 = vpop.f32.mrf.mxu0
    %v1178 = vadd.f32 0.0, %v1177
    %1179 = vmatmul.f32.gmra.mxu0 %v1051
    %v1180 = vpop.f32.mrf.mxu0
    %v1181 = vadd.f32 0.0, %v1180
    %1182 = vmatmul.f32.gmra.mxu0 %v1054
    %v1183 = vpop.f32.mrf.mxu0
    %v1184 = vadd.f32 0.0, %v1183
    %1185 = vmatmul.f32.gmra.mxu0 %v1057
    %v1186 = vpop.f32.mrf.mxu0
    %v1187 = vadd.f32 0.0, %v1186
    %1188 = vmatmul.f32.gmra.mxu0 %v1060
    %v1189 = vpop.f32.mrf.mxu0
    %v1190 = vadd.f32 0.0, %v1189
    %1191 = vmatmul.f32.gmra.mxu0 %v1063
    %v1192 = vpop.f32.mrf.mxu0
    %v1193 = vadd.f32 0.0, %v1192
    %1194 = vdwg.mxu0
    %1195 = vmatpush.msra.mxu0 0.0
    %1196 = vmatpush.msra.mxu0 0.0
    %1197 = vmatpush.msra.mxu0 0.0
    %1198 = vmatpush.msra.mxu0 0.0
    %1199 = vmatpush.msra.mxu0 0.0
    %1200 = vmatpush.msra.mxu0 0.0
    %1201 = vmatpush.msra.mxu0 0.0
    %1202 = vmatpush.msra.mxu0 0.0
    %1203 = vmatpush.msra.mxu0 0.0
    %1204 = vmatpush.msra.mxu0 0.0
    %1205 = vmatpush.msra.mxu0 0.0
    %1206 = vmatpush.msra.mxu0 0.0
    %1207 = vmatpush.msra.mxu0 0.0
    %1208 = vmatpush.msra.mxu0 0.0
    %1209 = vmatpush.msra.mxu0 0.0
    %1210 = vmatpush.msra.mxu0 %v999
    %1211 = vmatmul.f32.gmra.mxu0 %v1018
    %v1212 = vpop.f32.mrf.mxu0
    %v1213 = vadd.f32 0.0, %v1212
    %1214 = vmatmul.f32.gmra.mxu0 %v1021
    %v1215 = vpop.f32.mrf.mxu0
    %v1216 = vadd.f32 0.0, %v1215
    %1217 = vmatmul.f32.gmra.mxu0 %v1024
    %v1218 = vpop.f32.mrf.mxu0
    %v1219 = vadd.f32 0.0, %v1218
    %1220 = vmatmul.f32.gmra.mxu0 %v1027
    %v1221 = vpop.f32.mrf.mxu0
    %v1222 = vadd.f32 0.0, %v1221
    %1223 = vmatmul.f32.gmra.mxu0 %v1030
    %v1224 = vpop.f32.mrf.mxu0
    %v1225 = vadd.f32 0.0, %v1224
    %1226 = vmatmul.f32.gmra.mxu0 %v1033
    %v1227 = vpop.f32.mrf.mxu0
    %v1228 = vadd.f32 0.0, %v1227
    %1229 = vmatmul.f32.gmra.mxu0 %v1036
    %v1230 = vpop.f32.mrf.mxu0
    %v1231 = vadd.f32 0.0, %v1230
    %1232 = vmatmul.f32.gmra.mxu0 %v1039
    %v1233 = vpop.f32.mrf.mxu0
    %v1234 = vadd.f32 0.0, %v1233
    %1235 = vmatmul.f32.gmra.mxu0 %v1042
    %v1236 = vpop.f32.mrf.mxu0
    %v1237 = vadd.f32 0.0, %v1236
    %1238 = vmatmul.f32.gmra.mxu0 %v1045
    %v1239 = vpop.f32.mrf.mxu0
    %v1240 = vadd.f32 0.0, %v1239
    %1241 = vmatmul.f32.gmra.mxu0 %v1048
    %v1242 = vpop.f32.mrf.mxu0
    %v1243 = vadd.f32 0.0, %v1242
    %1244 = vmatmul.f32.gmra.mxu0 %v1051
    %v1245 = vpop.f32.mrf.mxu0
    %v1246 = vadd.f32 0.0, %v1245
    %1247 = vmatmul.f32.gmra.mxu0 %v1054
    %v1248 = vpop.f32.mrf.mxu0
    %v1249 = vadd.f32 0.0, %v1248
    %1250 = vmatmul.f32.gmra.mxu0 %v1057
    %v1251 = vpop.f32.mrf.mxu0
    %v1252 = vadd.f32 0.0, %v1251
    %1253 = vmatmul.f32.gmra.mxu0 %v1060
    %v1254 = vpop.f32.mrf.mxu0
    %v1255 = vadd.f32 0.0, %v1254
    %1256 = vmatmul.f32.gmra.mxu0 %v1063
    %v1257 = vpop.f32.mrf.mxu0
    %v1258 = vadd.f32 0.0, %v1257
    %1259 = vdwg.mxu0
    %v1260 = vld [vmem:[#allocation3] sm:$0xff]
    %v1261 = vld [vmem:[#allocation3 + $0x8] sm:$0xff]
    %v1262 = vld [vmem:[#allocation3 + $0x10] sm:$0xff]
    %v1263 = vld [vmem:[#allocation3 + $0x18] sm:$0xff]
    %v1264 = vld [vmem:[#allocation3 + $0x20] sm:$0xff]
    %v1265 = vld [vmem:[#allocation3 + $0x28] sm:$0xff]
    %v1266 = vld [vmem:[#allocation3 + $0x30] sm:$0xff]
    %v1267 = vld [vmem:[#allocation3 + $0x38] sm:$0xff]
    %v1268 = vld [vmem:[#allocation3 + $0x40] sm:$0xff]
    %v1269 = vld [vmem:[#allocation3 + $0x48] sm:$0xff]
    %v1270 = vld [vmem:[#allocation3 + $0x50] sm:$0xff]
    %v1271 = vld [vmem:[#allocation3 + $0x58] sm:$0xff]
    %v1272 = vld [vmem:[#allocation3 + $0x60] sm:$0xff]
    %v1273 = vld [vmem:[#allocation3 + $0x68] sm:$0xff]
    %v1274 = vld [vmem:[#allocation3 + $0x70] sm:$0xff]
    %v1275 = vld [vmem:[#allocation3 + $0x78] sm:$0xff]
    %v1276 = vld [vmem:[#allocation3 + $0x80] sm:$0xff]
    %v1277 = vld [vmem:[#allocation3 + $0x88] sm:$0xff]
    %v1278 = vld [vmem:[#allocation3 + $0x90] sm:$0xff]
    %v1279 = vld [vmem:[#allocation3 + $0x98] sm:$0xff]
    %v1280 = vld [vmem:[#allocation3 + $0xa0] sm:$0xff]
    %v1281 = vld [vmem:[#allocation3 + $0xa8] sm:$0xff]
    %v1282 = vld [vmem:[#allocation3 + $0xb0] sm:$0xff]
    %v1283 = vld [vmem:[#allocation3 + $0xb8] sm:$0xff]
    %v1284 = vld [vmem:[#allocation3 + $0xc0] sm:$0xff]
    %v1285 = vld [vmem:[#allocation3 + $0xc8] sm:$0xff]
    %v1286 = vld [vmem:[#allocation3 + $0xd0] sm:$0xff]
    %v1287 = vld [vmem:[#allocation3 + $0xd8] sm:$0xff]
    %v1288 = vld [vmem:[#allocation3 + $0xe0] sm:$0xff]
    %v1289 = vld [vmem:[#allocation3 + $0xe8] sm:$0xff]
    %v1290 = vld [vmem:[#allocation3 + $0xf0] sm:$0xff]
    %v1291 = vld [vmem:[#allocation3 + $0xf8] sm:$0xff]
    %1292 = vmatpush.msra.mxu0 %v937
    %1293 = vmatpush.msra.mxu0 %v934
    %1294 = vmatpush.msra.mxu0 %v931
    %1295 = vmatpush.msra.mxu0 %v928
    %1296 = vmatpush.msra.mxu0 %v925
    %1297 = vmatpush.msra.mxu0 %v922
    %1298 = vmatpush.msra.mxu0 %v919
    %1299 = vmatpush.msra.mxu0 %v916
    %1300 = vmatpush.msra.mxu0 %v913
    %1301 = vmatpush.msra.mxu0 %v910
    %1302 = vmatpush.msra.mxu0 %v907
    %1303 = vmatpush.msra.mxu0 %v904
    %1304 = vmatpush.msra.mxu0 %v901
    %1305 = vmatpush.msra.mxu0 %v898
    %1306 = vmatpush.msra.mxu0 %v895
    %1307 = vmatpush.msra.mxu0 %v892
    %1308 = vmatmul.f32.gmra.mxu0 %v1260
    %v1309 = vpop.f32.mrf.mxu0
    %v1310 = vadd.f32 0.0, %v1309
    %1311 = vmatmul.f32.gmra.mxu0 %v1262
    %v1312 = vpop.f32.mrf.mxu0
    %v1313 = vadd.f32 0.0, %v1312
    %1314 = vmatmul.f32.gmra.mxu0 %v1264
    %v1315 = vpop.f32.mrf.mxu0
    %v1316 = vadd.f32 0.0, %v1315
    %1317 = vmatmul.f32.gmra.mxu0 %v1266
    %v1318 = vpop.f32.mrf.mxu0
    %v1319 = vadd.f32 0.0, %v1318
    %1320 = vmatmul.f32.gmra.mxu0 %v1268
    %v1321 = vpop.f32.mrf.mxu0
    %v1322 = vadd.f32 0.0, %v1321
    %1323 = vmatmul.f32.gmra.mxu0 %v1270
    %v1324 = vpop.f32.mrf.mxu0
    %v1325 = vadd.f32 0.0, %v1324
    %1326 = vmatmul.f32.gmra.mxu0 %v1272
    %v1327 = vpop.f32.mrf.mxu0
    %v1328 = vadd.f32 0.0, %v1327
    %1329 = vmatmul.f32.gmra.mxu0 %v1274
    %v1330 = vpop.f32.mrf.mxu0
    %v1331 = vadd.f32 0.0, %v1330
    %1332 = vmatmul.f32.gmra.mxu0 %v1276
    %v1333 = vpop.f32.mrf.mxu0
    %v1334 = vadd.f32 0.0, %v1333
    %1335 = vmatmul.f32.gmra.mxu0 %v1278
    %v1336 = vpop.f32.mrf.mxu0
    %v1337 = vadd.f32 0.0, %v1336
    %1338 = vmatmul.f32.gmra.mxu0 %v1280
    %v1339 = vpop.f32.mrf.mxu0
    %v1340 = vadd.f32 0.0, %v1339
    %1341 = vmatmul.f32.gmra.mxu0 %v1282
    %v1342 = vpop.f32.mrf.mxu0
    %v1343 = vadd.f32 0.0, %v1342
    %1344 = vmatmul.f32.gmra.mxu0 %v1284
    %v1345 = vpop.f32.mrf.mxu0
    %v1346 = vadd.f32 0.0, %v1345
    %1347 = vmatmul.f32.gmra.mxu0 %v1286
    %v1348 = vpop.f32.mrf.mxu0
    %v1349 = vadd.f32 0.0, %v1348
    %1350 = vmatmul.f32.gmra.mxu0 %v1288
    %v1351 = vpop.f32.mrf.mxu0
    %v1352 = vadd.f32 0.0, %v1351
    %1353 = vmatmul.f32.gmra.mxu0 %v1290
    %v1354 = vpop.f32.mrf.mxu0
    %v1355 = vadd.f32 0.0, %v1354
    %1356 = vdwg.mxu0
    %1357 = vmatpush.msra.mxu0 %v985
    %1358 = vmatpush.msra.mxu0 %v982
    %1359 = vmatpush.msra.mxu0 %v979
    %1360 = vmatpush.msra.mxu0 %v976
    %1361 = vmatpush.msra.mxu0 %v973
    %1362 = vmatpush.msra.mxu0 %v970
    %1363 = vmatpush.msra.mxu0 %v967
    %1364 = vmatpush.msra.mxu0 %v964
    %1365 = vmatpush.msra.mxu0 %v961
    %1366 = vmatpush.msra.mxu0 %v958
    %1367 = vmatpush.msra.mxu0 %v955
    %1368 = vmatpush.msra.mxu0 %v952
    %1369 = vmatpush.msra.mxu0 %v949
    %1370 = vmatpush.msra.mxu0 %v946
    %1371 = vmatpush.msra.mxu0 %v943
    %1372 = vmatpush.msra.mxu0 %v940
    %1373 = vmatmul.f32.gmra.mxu0 %v1261
    %v1374 = vpop.f32.mrf.mxu0
    %v1375 = vadd.f32 %v1310, %v1374
    %1376 = vmatmul.f32.gmra.mxu0 %v1263
    %v1377 = vpop.f32.mrf.mxu0
    %v1378 = vadd.f32 %v1313, %v1377
    %1379 = vmatmul.f32.gmra.mxu0 %v1265
    %v1380 = vpop.f32.mrf.mxu0
    %v1381 = vadd.f32 %v1316, %v1380
    %1382 = vmatmul.f32.gmra.mxu0 %v1267
    %v1383 = vpop.f32.mrf.mxu0
    %v1384 = vadd.f32 %v1319, %v1383
    %1385 = vmatmul.f32.gmra.mxu0 %v1269
    %v1386 = vpop.f32.mrf.mxu0
    %v1387 = vadd.f32 %v1322, %v1386
    %1388 = vmatmul.f32.gmra.mxu0 %v1271
    %v1389 = vpop.f32.mrf.mxu0
    %v1390 = vadd.f32 %v1325, %v1389
    %1391 = vmatmul.f32.gmra.mxu0 %v1273
    %v1392 = vpop.f32.mrf.mxu0
    %v1393 = vadd.f32 %v1328, %v1392
    %1394 = vmatmul.f32.gmra.mxu0 %v1275
    %v1395 = vpop.f32.mrf.mxu0
    %v1396 = vadd.f32 %v1331, %v1395
    %1397 = vmatmul.f32.gmra.mxu0 %v1277
    %v1398 = vpop.f32.mrf.mxu0
    %v1399 = vadd.f32 %v1334, %v1398
    %1400 = vmatmul.f32.gmra.mxu0 %v1279
    %v1401 = vpop.f32.mrf.mxu0
    %v1402 = vadd.f32 %v1337, %v1401
    %1403 = vmatmul.f32.gmra.mxu0 %v1281
    %v1404 = vpop.f32.mrf.mxu0
    %v1405 = vadd.f32 %v1340, %v1404
    %1406 = vmatmul.f32.gmra.mxu0 %v1283
    %v1407 = vpop.f32.mrf.mxu0
    %v1408 = vadd.f32 %v1343, %v1407
    %1409 = vmatmul.f32.gmra.mxu0 %v1285
    %v1410 = vpop.f32.mrf.mxu0
    %v1411 = vadd.f32 %v1346, %v1410
    %1412 = vmatmul.f32.gmra.mxu0 %v1287
    %v1413 = vpop.f32.mrf.mxu0
    %v1414 = vadd.f32 %v1349, %v1413
    %1415 = vmatmul.f32.gmra.mxu0 %v1289
    %v1416 = vpop.f32.mrf.mxu0
    %v1417 = vadd.f32 %v1352, %v1416
    %1418 = vmatmul.f32.gmra.mxu0 %v1291
    %v1419 = vpop.f32.mrf.mxu0
    %v1420 = vadd.f32 %v1355, %v1419
    %1421 = vdwg.mxu0
    %1422 = vmatpush.msra.mxu0 %v938
    %1423 = vmatpush.msra.mxu0 %v935
    %1424 = vmatpush.msra.mxu0 %v932
    %1425 = vmatpush.msra.mxu0 %v929
    %1426 = vmatpush.msra.mxu0 %v926
    %1427 = vmatpush.msra.mxu0 %v923
    %1428 = vmatpush.msra.mxu0 %v920
    %1429 = vmatpush.msra.mxu0 %v917
    %1430 = vmatpush.msra.mxu0 %v914
    %1431 = vmatpush.msra.mxu0 %v911
    %1432 = vmatpush.msra.mxu0 %v908
    %1433 = vmatpush.msra.mxu0 %v905
    %1434 = vmatpush.msra.mxu0 %v902
    %1435 = vmatpush.msra.mxu0 %v899
    %1436 = vmatpush.msra.mxu0 %v896
    %1437 = vmatpush.msra.mxu0 %v893
    %1438 = vmatmul.f32.gmra.mxu0 %v1260
    %v1439 = vpop.f32.mrf.mxu0
    %v1440 = vadd.f32 0.0, %v1439
    %1441 = vmatmul.f32.gmra.mxu0 %v1262
    %v1442 = vpop.f32.mrf.mxu0
    %v1443 = vadd.f32 0.0, %v1442
    %1444 = vmatmul.f32.gmra.mxu0 %v1264
    %v1445 = vpop.f32.mrf.mxu0
    %v1446 = vadd.f32 0.0, %v1445
    %1447 = vmatmul.f32.gmra.mxu0 %v1266
    %v1448 = vpop.f32.mrf.mxu0
    %v1449 = vadd.f32 0.0, %v1448
    %1450 = vmatmul.f32.gmra.mxu0 %v1268
    %v1451 = vpop.f32.mrf.mxu0
    %v1452 = vadd.f32 0.0, %v1451
    %1453 = vmatmul.f32.gmra.mxu0 %v1270
    %v1454 = vpop.f32.mrf.mxu0
    %v1455 = vadd.f32 0.0, %v1454
    %1456 = vmatmul.f32.gmra.mxu0 %v1272
    %v1457 = vpop.f32.mrf.mxu0
    %v1458 = vadd.f32 0.0, %v1457
    %1459 = vmatmul.f32.gmra.mxu0 %v1274
    %v1460 = vpop.f32.mrf.mxu0
    %v1461 = vadd.f32 0.0, %v1460
    %1462 = vmatmul.f32.gmra.mxu0 %v1276
    %v1463 = vpop.f32.mrf.mxu0
    %v1464 = vadd.f32 0.0, %v1463
    %1465 = vmatmul.f32.gmra.mxu0 %v1278
    %v1466 = vpop.f32.mrf.mxu0
    %v1467 = vadd.f32 0.0, %v1466
    %1468 = vmatmul.f32.gmra.mxu0 %v1280
    %v1469 = vpop.f32.mrf.mxu0
    %v1470 = vadd.f32 0.0, %v1469
    %1471 = vmatmul.f32.gmra.mxu0 %v1282
    %v1472 = vpop.f32.mrf.mxu0
    %v1473 = vadd.f32 0.0, %v1472
    %1474 = vmatmul.f32.gmra.mxu0 %v1284
    %v1475 = vpop.f32.mrf.mxu0
    %v1476 = vadd.f32 0.0, %v1475
    %1477 = vmatmul.f32.gmra.mxu0 %v1286
    %v1478 = vpop.f32.mrf.mxu0
    %v1479 = vadd.f32 0.0, %v1478
    %1480 = vmatmul.f32.gmra.mxu0 %v1288
    %v1481 = vpop.f32.mrf.mxu0
    %v1482 = vadd.f32 0.0, %v1481
    %1483 = vmatmul.f32.gmra.mxu0 %v1290
    %v1484 = vpop.f32.mrf.mxu0
    %v1485 = vadd.f32 0.0, %v1484
    %1486 = vdwg.mxu0
    %1487 = vmatpush.msra.mxu0 %v986
    %1488 = vmatpush.msra.mxu0 %v983
    %1489 = vmatpush.msra.mxu0 %v980
    %1490 = vmatpush.msra.mxu0 %v977
    %1491 = vmatpush.msra.mxu0 %v974
    %1492 = vmatpush.msra.mxu0 %v971
    %1493 = vmatpush.msra.mxu0 %v968
    %1494 = vmatpush.msra.mxu0 %v965
    %1495 = vmatpush.msra.mxu0 %v962
    %1496 = vmatpush.msra.mxu0 %v959
    %1497 = vmatpush.msra.mxu0 %v956
    %1498 = vmatpush.msra.mxu0 %v953
    %1499 = vmatpush.msra.mxu0 %v950
    %1500 = vmatpush.msra.mxu0 %v947
    %1501 = vmatpush.msra.mxu0 %v944
    %1502 = vmatpush.msra.mxu0 %v941
    %1503 = vmatmul.f32.gmra.mxu0 %v1261
    %v1504 = vpop.f32.mrf.mxu0
    %v1505 = vadd.f32 %v1440, %v1504
    %1506 = vmatmul.f32.gmra.mxu0 %v1263
    %v1507 = vpop.f32.mrf.mxu0
    %v1508 = vadd.f32 %v1443, %v1507
    %1509 = vmatmul.f32.gmra.mxu0 %v1265
    %v1510 = vpop.f32.mrf.mxu0
    %v1511 = vadd.f32 %v1446, %v1510
    %1512 = vmatmul.f32.gmra.mxu0 %v1267
    %v1513 = vpop.f32.mrf.mxu0
    %v1514 = vadd.f32 %v1449, %v1513
    %1515 = vmatmul.f32.gmra.mxu0 %v1269
    %v1516 = vpop.f32.mrf.mxu0
    %v1517 = vadd.f32 %v1452, %v1516
    %1518 = vmatmul.f32.gmra.mxu0 %v1271
    %v1519 = vpop.f32.mrf.mxu0
    %v1520 = vadd.f32 %v1455, %v1519
    %1521 = vmatmul.f32.gmra.mxu0 %v1273
    %v1522 = vpop.f32.mrf.mxu0
    %v1523 = vadd.f32 %v1458, %v1522
    %1524 = vmatmul.f32.gmra.mxu0 %v1275
    %v1525 = vpop.f32.mrf.mxu0
    %v1526 = vadd.f32 %v1461, %v1525
    %1527 = vmatmul.f32.gmra.mxu0 %v1277
    %v1528 = vpop.f32.mrf.mxu0
    %v1529 = vadd.f32 %v1464, %v1528
    %1530 = vmatmul.f32.gmra.mxu0 %v1279
    %v1531 = vpop.f32.mrf.mxu0
    %v1532 = vadd.f32 %v1467, %v1531
    %1533 = vmatmul.f32.gmra.mxu0 %v1281
    %v1534 = vpop.f32.mrf.mxu0
    %v1535 = vadd.f32 %v1470, %v1534
    %1536 = vmatmul.f32.gmra.mxu0 %v1283
    %v1537 = vpop.f32.mrf.mxu0
    %v1538 = vadd.f32 %v1473, %v1537
    %1539 = vmatmul.f32.gmra.mxu0 %v1285
    %v1540 = vpop.f32.mrf.mxu0
    %v1541 = vadd.f32 %v1476, %v1540
    %1542 = vmatmul.f32.gmra.mxu0 %v1287
    %v1543 = vpop.f32.mrf.mxu0
    %v1544 = vadd.f32 %v1479, %v1543
    %1545 = vmatmul.f32.gmra.mxu0 %v1289
    %v1546 = vpop.f32.mrf.mxu0
    %v1547 = vadd.f32 %v1482, %v1546
    %1548 = vmatmul.f32.gmra.mxu0 %v1291
    %v1549 = vpop.f32.mrf.mxu0
    %v1550 = vadd.f32 %v1485, %v1549
    %1551 = vdwg.mxu0
    %1552 = vmatpush.msra.mxu0 %v939
    %1553 = vmatpush.msra.mxu0 %v936
    %1554 = vmatpush.msra.mxu0 %v933
    %1555 = vmatpush.msra.mxu0 %v930
    %1556 = vmatpush.msra.mxu0 %v927
    %1557 = vmatpush.msra.mxu0 %v924
    %1558 = vmatpush.msra.mxu0 %v921
    %1559 = vmatpush.msra.mxu0 %v918
    %1560 = vmatpush.msra.mxu0 %v915
    %1561 = vmatpush.msra.mxu0 %v912
    %1562 = vmatpush.msra.mxu0 %v909
    %1563 = vmatpush.msra.mxu0 %v906
    %1564 = vmatpush.msra.mxu0 %v903
    %1565 = vmatpush.msra.mxu0 %v900
    %1566 = vmatpush.msra.mxu0 %v897
    %1567 = vmatpush.msra.mxu0 %v894
    %1568 = vmatmul.f32.gmra.mxu0 %v1260
    %v1569 = vpop.f32.mrf.mxu0
    %v1570 = vadd.f32 0.0, %v1569
    %1571 = vmatmul.f32.gmra.mxu0 %v1262
    %v1572 = vpop.f32.mrf.mxu0
    %v1573 = vadd.f32 0.0, %v1572
    %1574 = vmatmul.f32.gmra.mxu0 %v1264
    %v1575 = vpop.f32.mrf.mxu0
    %v1576 = vadd.f32 0.0, %v1575
    %1577 = vmatmul.f32.gmra.mxu0 %v1266
    %v1578 = vpop.f32.mrf.mxu0
    %v1579 = vadd.f32 0.0, %v1578
    %1580 = vmatmul.f32.gmra.mxu0 %v1268
    %v1581 = vpop.f32.mrf.mxu0
    %v1582 = vadd.f32 0.0, %v1581
    %1583 = vmatmul.f32.gmra.mxu0 %v1270
    %v1584 = vpop.f32.mrf.mxu0
    %v1585 = vadd.f32 0.0, %v1584
    %1586 = vmatmul.f32.gmra.mxu0 %v1272
    %v1587 = vpop.f32.mrf.mxu0
    %v1588 = vadd.f32 0.0, %v1587
    %1589 = vmatmul.f32.gmra.mxu0 %v1274
    %v1590 = vpop.f32.mrf.mxu0
    %v1591 = vadd.f32 0.0, %v1590
    %1592 = vmatmul.f32.gmra.mxu0 %v1276
    %v1593 = vpop.f32.mrf.mxu0
    %v1594 = vadd.f32 0.0, %v1593
    %1595 = vmatmul.f32.gmra.mxu0 %v1278
    %v1596 = vpop.f32.mrf.mxu0
    %v1597 = vadd.f32 0.0, %v1596
    %1598 = vmatmul.f32.gmra.mxu0 %v1280
    %v1599 = vpop.f32.mrf.mxu0
    %v1600 = vadd.f32 0.0, %v1599
    %1601 = vmatmul.f32.gmra.mxu0 %v1282
    %v1602 = vpop.f32.mrf.mxu0
    %v1603 = vadd.f32 0.0, %v1602
    %1604 = vmatmul.f32.gmra.mxu0 %v1284
    %v1605 = vpop.f32.mrf.mxu0
    %v1606 = vadd.f32 0.0, %v1605
    %1607 = vmatmul.f32.gmra.mxu0 %v1286
    %v1608 = vpop.f32.mrf.mxu0
    %v1609 = vadd.f32 0.0, %v1608
    %1610 = vmatmul.f32.gmra.mxu0 %v1288
    %v1611 = vpop.f32.mrf.mxu0
    %v1612 = vadd.f32 0.0, %v1611
    %1613 = vmatmul.f32.gmra.mxu0 %v1290
    %v1614 = vpop.f32.mrf.mxu0
    %v1615 = vadd.f32 0.0, %v1614
    %1616 = vdwg.mxu0
    %1617 = vmatpush.msra.mxu0 %v987
    %1618 = vmatpush.msra.mxu0 %v984
    %1619 = vmatpush.msra.mxu0 %v981
    %1620 = vmatpush.msra.mxu0 %v978
    %1621 = vmatpush.msra.mxu0 %v975
    %1622 = vmatpush.msra.mxu0 %v972
    %1623 = vmatpush.msra.mxu0 %v969
    %1624 = vmatpush.msra.mxu0 %v966
    %1625 = vmatpush.msra.mxu0 %v963
    %1626 = vmatpush.msra.mxu0 %v960
    %1627 = vmatpush.msra.mxu0 %v957
    %1628 = vmatpush.msra.mxu0 %v954
    %1629 = vmatpush.msra.mxu0 %v951
    %1630 = vmatpush.msra.mxu0 %v948
    %1631 = vmatpush.msra.mxu0 %v945
    %1632 = vmatpush.msra.mxu0 %v942
    %1633 = vmatmul.f32.gmra.mxu0 %v1261
    %v1634 = vpop.f32.mrf.mxu0
    %v1635 = vadd.f32 %v1570, %v1634
    %1636 = vmatmul.f32.gmra.mxu0 %v1263
    %v1637 = vpop.f32.mrf.mxu0
    %v1638 = vadd.f32 %v1573, %v1637
    %1639 = vmatmul.f32.gmra.mxu0 %v1265
    %v1640 = vpop.f32.mrf.mxu0
    %v1641 = vadd.f32 %v1576, %v1640
    %1642 = vmatmul.f32.gmra.mxu0 %v1267
    %v1643 = vpop.f32.mrf.mxu0
    %v1644 = vadd.f32 %v1579, %v1643
    %1645 = vmatmul.f32.gmra.mxu0 %v1269
    %v1646 = vpop.f32.mrf.mxu0
    %v1647 = vadd.f32 %v1582, %v1646
    %1648 = vmatmul.f32.gmra.mxu0 %v1271
    %v1649 = vpop.f32.mrf.mxu0
    %v1650 = vadd.f32 %v1585, %v1649
    %1651 = vmatmul.f32.gmra.mxu0 %v1273
    %v1652 = vpop.f32.mrf.mxu0
    %v1653 = vadd.f32 %v1588, %v1652
    %1654 = vmatmul.f32.gmra.mxu0 %v1275
    %v1655 = vpop.f32.mrf.mxu0
    %v1656 = vadd.f32 %v1591, %v1655
    %1657 = vmatmul.f32.gmra.mxu0 %v1277
    %v1658 = vpop.f32.mrf.mxu0
    %v1659 = vadd.f32 %v1594, %v1658
    %1660 = vmatmul.f32.gmra.mxu0 %v1279
    %v1661 = vpop.f32.mrf.mxu0
    %v1662 = vadd.f32 %v1597, %v1661
    %1663 = vmatmul.f32.gmra.mxu0 %v1281
    %v1664 = vpop.f32.mrf.mxu0
    %v1665 = vadd.f32 %v1600, %v1664
    %1666 = vmatmul.f32.gmra.mxu0 %v1283
    %v1667 = vpop.f32.mrf.mxu0
    %v1668 = vadd.f32 %v1603, %v1667
    %1669 = vmatmul.f32.gmra.mxu0 %v1285
    %v1670 = vpop.f32.mrf.mxu0
    %v1671 = vadd.f32 %v1606, %v1670
    %1672 = vmatmul.f32.gmra.mxu0 %v1287
    %v1673 = vpop.f32.mrf.mxu0
    %v1674 = vadd.f32 %v1609, %v1673
    %1675 = vmatmul.f32.gmra.mxu0 %v1289
    %v1676 = vpop.f32.mrf.mxu0
    %v1677 = vadd.f32 %v1612, %v1676
    %1678 = vmatmul.f32.gmra.mxu0 %v1291
    %v1679 = vpop.f32.mrf.mxu0
    %v1680 = vadd.f32 %v1615, %v1679
    %1681 = vdwg.mxu0
    %v1682 = vld [vmem:[#allocation2] sm:$0xff]
    %v1683 = vld [vmem:[#allocation2 + $0x8] sm:$0xff]
    %v1684 = vld [vmem:[#allocation2 + $0x10] sm:$0xff]
    %v1685 = vld [vmem:[#allocation2 + $0x18] sm:$0xff]
    %v1686 = vld [vmem:[#allocation2 + $0x20] sm:$0xff]
    %v1687 = vld [vmem:[#allocation2 + $0x28] sm:$0xff]
    %v1688 = vld [vmem:[#allocation2 + $0x30] sm:$0xff]
    %v1689 = vld [vmem:[#allocation2 + $0x38] sm:$0xff]
    %v1690 = vld [vmem:[#allocation2 + $0x40] sm:$0xff]
    %v1691 = vld [vmem:[#allocation2 + $0x48] sm:$0xff]
    %v1692 = vld [vmem:[#allocation2 + $0x50] sm:$0xff]
    %v1693 = vld [vmem:[#allocation2 + $0x58] sm:$0xff]
    %v1694 = vld [vmem:[#allocation2 + $0x60] sm:$0xff]
    %v1695 = vld [vmem:[#allocation2 + $0x68] sm:$0xff]
    %v1696 = vld [vmem:[#allocation2 + $0x70] sm:$0xff]
    %v1697 = vld [vmem:[#allocation2 + $0x78] sm:$0xff]
    %1698 = vmatpush.msra.mxu0 %v985
    %1699 = vmatpush.msra.mxu0 %v982
    %1700 = vmatpush.msra.mxu0 %v979
    %1701 = vmatpush.msra.mxu0 %v976
    %1702 = vmatpush.msra.mxu0 %v973
    %1703 = vmatpush.msra.mxu0 %v970
    %1704 = vmatpush.msra.mxu0 %v967
    %1705 = vmatpush.msra.mxu0 %v964
    %1706 = vmatpush.msra.mxu0 %v961
    %1707 = vmatpush.msra.mxu0 %v958
    %1708 = vmatpush.msra.mxu0 %v955
    %1709 = vmatpush.msra.mxu0 %v952
    %1710 = vmatpush.msra.mxu0 %v949
    %1711 = vmatpush.msra.mxu0 %v946
    %1712 = vmatpush.msra.mxu0 %v943
    %1713 = vmatpush.msra.mxu0 %v940
    %1714 = vmatmul.f32.gmra.mxu0 %v1682
    %v1715 = vpop.f32.mrf.mxu0
    %v1716 = vadd.f32 0.0, %v1715
    %1717 = vmatmul.f32.gmra.mxu0 %v1683
    %v1718 = vpop.f32.mrf.mxu0
    %v1719 = vadd.f32 0.0, %v1718
    %1720 = vmatmul.f32.gmra.mxu0 %v1684
    %v1721 = vpop.f32.mrf.mxu0
    %v1722 = vadd.f32 0.0, %v1721
    %1723 = vmatmul.f32.gmra.mxu0 %v1685
    %v1724 = vpop.f32.mrf.mxu0
    %v1725 = vadd.f32 0.0, %v1724
    %1726 = vmatmul.f32.gmra.mxu0 %v1686
    %v1727 = vpop.f32.mrf.mxu0
    %v1728 = vadd.f32 0.0, %v1727
    %1729 = vmatmul.f32.gmra.mxu0 %v1687
    %v1730 = vpop.f32.mrf.mxu0
    %v1731 = vadd.f32 0.0, %v1730
    %1732 = vmatmul.f32.gmra.mxu0 %v1688
    %v1733 = vpop.f32.mrf.mxu0
    %v1734 = vadd.f32 0.0, %v1733
    %1735 = vmatmul.f32.gmra.mxu0 %v1689
    %v1736 = vpop.f32.mrf.mxu0
    %v1737 = vadd.f32 0.0, %v1736
    %1738 = vmatmul.f32.gmra.mxu0 %v1690
    %v1739 = vpop.f32.mrf.mxu0
    %v1740 = vadd.f32 0.0, %v1739
    %1741 = vmatmul.f32.gmra.mxu0 %v1691
    %v1742 = vpop.f32.mrf.mxu0
    %v1743 = vadd.f32 0.0, %v1742
    %1744 = vmatmul.f32.gmra.mxu0 %v1692
    %v1745 = vpop.f32.mrf.mxu0
    %v1746 = vadd.f32 0.0, %v1745
    %1747 = vmatmul.f32.gmra.mxu0 %v1693
    %v1748 = vpop.f32.mrf.mxu0
    %v1749 = vadd.f32 0.0, %v1748
    %1750 = vmatmul.f32.gmra.mxu0 %v1694
    %v1751 = vpop.f32.mrf.mxu0
    %v1752 = vadd.f32 0.0, %v1751
    %1753 = vmatmul.f32.gmra.mxu0 %v1695
    %v1754 = vpop.f32.mrf.mxu0
    %v1755 = vadd.f32 0.0, %v1754
    %1756 = vmatmul.f32.gmra.mxu0 %v1696
    %v1757 = vpop.f32.mrf.mxu0
    %v1758 = vadd.f32 0.0, %v1757
    %1759 = vmatmul.f32.gmra.mxu0 %v1697
    %v1760 = vpop.f32.mrf.mxu0
    %v1761 = vadd.f32 0.0, %v1760
    %1762 = vdwg.mxu0
    %1763 = vmatpush.msra.mxu0 %v986
    %1764 = vmatpush.msra.mxu0 %v983
    %1765 = vmatpush.msra.mxu0 %v980
    %1766 = vmatpush.msra.mxu0 %v977
    %1767 = vmatpush.msra.mxu0 %v974
    %1768 = vmatpush.msra.mxu0 %v971
    %1769 = vmatpush.msra.mxu0 %v968
    %1770 = vmatpush.msra.mxu0 %v965
    %1771 = vmatpush.msra.mxu0 %v962
    %1772 = vmatpush.msra.mxu0 %v959
    %1773 = vmatpush.msra.mxu0 %v956
    %1774 = vmatpush.msra.mxu0 %v953
    %1775 = vmatpush.msra.mxu0 %v950
    %1776 = vmatpush.msra.mxu0 %v947
    %1777 = vmatpush.msra.mxu0 %v944
    %1778 = vmatpush.msra.mxu0 %v941
    %1779 = vmatmul.f32.gmra.mxu0 %v1682
    %v1780 = vpop.f32.mrf.mxu0
    %v1781 = vadd.f32 0.0, %v1780
    %1782 = vmatmul.f32.gmra.mxu0 %v1683
    %v1783 = vpop.f32.mrf.mxu0
    %v1784 = vadd.f32 0.0, %v1783
    %1785 = vmatmul.f32.gmra.mxu0 %v1684
    %v1786 = vpop.f32.mrf.mxu0
    %v1787 = vadd.f32 0.0, %v1786
    %1788 = vmatmul.f32.gmra.mxu0 %v1685
    %v1789 = vpop.f32.mrf.mxu0
    %v1790 = vadd.f32 0.0, %v1789
    %1791 = vmatmul.f32.gmra.mxu0 %v1686
    %v1792 = vpop.f32.mrf.mxu0
    %v1793 = vadd.f32 0.0, %v1792
    %1794 = vmatmul.f32.gmra.mxu0 %v1687
    %v1795 = vpop.f32.mrf.mxu0
    %v1796 = vadd.f32 0.0, %v1795
    %1797 = vmatmul.f32.gmra.mxu0 %v1688
    %v1798 = vpop.f32.mrf.mxu0
    %v1799 = vadd.f32 0.0, %v1798
    %1800 = vmatmul.f32.gmra.mxu0 %v1689
    %v1801 = vpop.f32.mrf.mxu0
    %v1802 = vadd.f32 0.0, %v1801
    %1803 = vmatmul.f32.gmra.mxu0 %v1690
    %v1804 = vpop.f32.mrf.mxu0
    %v1805 = vadd.f32 0.0, %v1804
    %1806 = vmatmul.f32.gmra.mxu0 %v1691
    %v1807 = vpop.f32.mrf.mxu0
    %v1808 = vadd.f32 0.0, %v1807
    %1809 = vmatmul.f32.gmra.mxu0 %v1692
    %v1810 = vpop.f32.mrf.mxu0
    %v1811 = vadd.f32 0.0, %v1810
    %1812 = vmatmul.f32.gmra.mxu0 %v1693
    %v1813 = vpop.f32.mrf.mxu0
    %v1814 = vadd.f32 0.0, %v1813
    %1815 = vmatmul.f32.gmra.mxu0 %v1694
    %v1816 = vpop.f32.mrf.mxu0
    %v1817 = vadd.f32 0.0, %v1816
    %1818 = vmatmul.f32.gmra.mxu0 %v1695
    %v1819 = vpop.f32.mrf.mxu0
    %v1820 = vadd.f32 0.0, %v1819
    %1821 = vmatmul.f32.gmra.mxu0 %v1696
    %v1822 = vpop.f32.mrf.mxu0
    %v1823 = vadd.f32 0.0, %v1822
    %1824 = vmatmul.f32.gmra.mxu0 %v1697
    %v1825 = vpop.f32.mrf.mxu0
    %v1826 = vadd.f32 0.0, %v1825
    %1827 = vdwg.mxu0
    %1828 = vmatpush.msra.mxu0 %v987
    %1829 = vmatpush.msra.mxu0 %v984
    %1830 = vmatpush.msra.mxu0 %v981
    %1831 = vmatpush.msra.mxu0 %v978
    %1832 = vmatpush.msra.mxu0 %v975
    %1833 = vmatpush.msra.mxu0 %v972
    %1834 = vmatpush.msra.mxu0 %v969
    %1835 = vmatpush.msra.mxu0 %v966
    %1836 = vmatpush.msra.mxu0 %v963
    %1837 = vmatpush.msra.mxu0 %v960
    %1838 = vmatpush.msra.mxu0 %v957
    %1839 = vmatpush.msra.mxu0 %v954
    %1840 = vmatpush.msra.mxu0 %v951
    %1841 = vmatpush.msra.mxu0 %v948
    %1842 = vmatpush.msra.mxu0 %v945
    %1843 = vmatpush.msra.mxu0 %v942
    %1844 = vmatmul.f32.gmra.mxu0 %v1682
    %v1845 = vpop.f32.mrf.mxu0
    %v1846 = vadd.f32 0.0, %v1845
    %1847 = vmatmul.f32.gmra.mxu0 %v1683
    %v1848 = vpop.f32.mrf.mxu0
    %v1849 = vadd.f32 0.0, %v1848
    %1850 = vmatmul.f32.gmra.mxu0 %v1684
    %v1851 = vpop.f32.mrf.mxu0
    %v1852 = vadd.f32 0.0, %v1851
    %1853 = vmatmul.f32.gmra.mxu0 %v1685
    %v1854 = vpop.f32.mrf.mxu0
    %v1855 = vadd.f32 0.0, %v1854
    %1856 = vmatmul.f32.gmra.mxu0 %v1686
    %v1857 = vpop.f32.mrf.mxu0
    %v1858 = vadd.f32 0.0, %v1857
    %1859 = vmatmul.f32.gmra.mxu0 %v1687
    %v1860 = vpop.f32.mrf.mxu0
    %v1861 = vadd.f32 0.0, %v1860
    %1862 = vmatmul.f32.gmra.mxu0 %v1688
    %v1863 = vpop.f32.mrf.mxu0
    %v1864 = vadd.f32 0.0, %v1863
    %1865 = vmatmul.f32.gmra.mxu0 %v1689
    %v1866 = vpop.f32.mrf.mxu0
    %v1867 = vadd.f32 0.0, %v1866
    %1868 = vmatmul.f32.gmra.mxu0 %v1690
    %v1869 = vpop.f32.mrf.mxu0
    %v1870 = vadd.f32 0.0, %v1869
    %1871 = vmatmul.f32.gmra.mxu0 %v1691
    %v1872 = vpop.f32.mrf.mxu0
    %v1873 = vadd.f32 0.0, %v1872
    %1874 = vmatmul.f32.gmra.mxu0 %v1692
    %v1875 = vpop.f32.mrf.mxu0
    %v1876 = vadd.f32 0.0, %v1875
    %1877 = vmatmul.f32.gmra.mxu0 %v1693
    %v1878 = vpop.f32.mrf.mxu0
    %v1879 = vadd.f32 0.0, %v1878
    %1880 = vmatmul.f32.gmra.mxu0 %v1694
    %v1881 = vpop.f32.mrf.mxu0
    %v1882 = vadd.f32 0.0, %v1881
    %1883 = vmatmul.f32.gmra.mxu0 %v1695
    %v1884 = vpop.f32.mrf.mxu0
    %v1885 = vadd.f32 0.0, %v1884
    %1886 = vmatmul.f32.gmra.mxu0 %v1696
    %v1887 = vpop.f32.mrf.mxu0
    %v1888 = vadd.f32 0.0, %v1887
    %1889 = vmatmul.f32.gmra.mxu0 %v1697
    %v1890 = vpop.f32.mrf.mxu0
    %v1891 = vadd.f32 0.0, %v1890
    %1892 = vdwg.mxu0
    %v1893 = vmul.f32 %v1375, %v1083
    %v1894 = vmul.f32 %v1505, %v1148
    %v1895 = vmul.f32 %v1635, %v1213
    %v1896 = vmul.f32 %v1378, %v1086
    %v1897 = vmul.f32 %v1508, %v1151
    %v1898 = vmul.f32 %v1638, %v1216
    %v1899 = vmul.f32 %v1381, %v1089
    %v1900 = vmul.f32 %v1511, %v1154
    %v1901 = vmul.f32 %v1641, %v1219
    %v1902 = vmul.f32 %v1384, %v1092
    %v1903 = vmul.f32 %v1514, %v1157
    %v1904 = vmul.f32 %v1644, %v1222
    %v1905 = vmul.f32 %v1387, %v1095
    %v1906 = vmul.f32 %v1517, %v1160
    %v1907 = vmul.f32 %v1647, %v1225
    %v1908 = vmul.f32 %v1390, %v1098
    %v1909 = vmul.f32 %v1520, %v1163
    %v1910 = vmul.f32 %v1650, %v1228
    %v1911 = vmul.f32 %v1393, %v1101
    %v1912 = vmul.f32 %v1523, %v1166
    %v1913 = vmul.f32 %v1653, %v1231
    %v1914 = vmul.f32 %v1396, %v1104
    %v1915 = vmul.f32 %v1526, %v1169
    %v1916 = vmul.f32 %v1656, %v1234
    %v1917 = vmul.f32 %v1399, %v1107
    %v1918 = vmul.f32 %v1529, %v1172
    %v1919 = vmul.f32 %v1659, %v1237
    %v1920 = vmul.f32 %v1402, %v1110
    %v1921 = vmul.f32 %v1532, %v1175
    %v1922 = vmul.f32 %v1662, %v1240
    %v1923 = vmul.f32 %v1405, %v1113
    %v1924 = vmul.f32 %v1535, %v1178
    %v1925 = vmul.f32 %v1665, %v1243
    %v1926 = vmul.f32 %v1408, %v1116
    %v1927 = vmul.f32 %v1538, %v1181
    %v1928 = vmul.f32 %v1668, %v1246
    %v1929 = vmul.f32 %v1411, %v1119
    %v1930 = vmul.f32 %v1541, %v1184
    %v1931 = vmul.f32 %v1671, %v1249
    %v1932 = vmul.f32 %v1414, %v1122
    %v1933 = vmul.f32 %v1544, %v1187
    %v1934 = vmul.f32 %v1674, %v1252
    %v1935 = vmul.f32 %v1417, %v1125
    %v1936 = vmul.f32 %v1547, %v1190
    %v1937 = vmul.f32 %v1677, %v1255
    %v1938 = vmul.f32 %v1420, %v1128
    %v1939 = vmul.f32 %v1550, %v1193
    %v1940 = vmul.f32 %v1680, %v1258
    %v1941 = vadd.f32 %v1893, %v1896
    %v1942 = vadd.f32 %v1941, %v1899
    %v1943 = vadd.f32 %v1942, %v1902
    %v1944 = vadd.f32 %v1943, %v1905
    %v1945 = vadd.f32 %v1944, %v1908
    %v1946 = vadd.f32 %v1945, %v1911
    %v1947 = vadd.f32 %v1946, %v1914
    %v1948 = vadd.f32 %v1947, %v1917
    %v1949 = vadd.f32 %v1948, %v1920
    %v1950 = vadd.f32 %v1949, %v1923
    %v1951 = vadd.f32 %v1950, %v1926
    %v1952 = vadd.f32 %v1951, %v1929
    %v1953 = vadd.f32 %v1952, %v1932
    %v1954 = vadd.f32 %v1953, %v1935
    %v1955 = vadd.f32 %v1954, %v1938
    %v1956 = vrot.slane %v1955, 4
    %v1957 = vadd.f32 %v1955, %v1956
    %v1958 = vrot.slane %v1957, 2
    %v1959 = vadd.f32 %v1957, %v1958
    %v1960 = vrot.slane %v1959, 1
    %v1961 = vadd.f32 %v1959, %v1960
    %v1962 = vadd.f32 %v1894, %v1897
    %v1963 = vadd.f32 %v1962, %v1900
    %v1964 = vadd.f32 %v1963, %v1903
    %v1965 = vadd.f32 %v1964, %v1906
    %v1966 = vadd.f32 %v1965, %v1909
    %v1967 = vadd.f32 %v1966, %v1912
    %v1968 = vadd.f32 %v1967, %v1915
    %v1969 = vadd.f32 %v1968, %v1918
    %v1970 = vadd.f32 %v1969, %v1921
    %v1971 = vadd.f32 %v1970, %v1924
    %v1972 = vadd.f32 %v1971, %v1927
    %v1973 = vadd.f32 %v1972, %v1930
    %v1974 = vadd.f32 %v1973, %v1933
    %v1975 = vadd.f32 %v1974, %v1936
    %v1976 = vadd.f32 %v1975, %v1939
    %v1977 = vrot.slane %v1976, 4
    %v1978 = vadd.f32 %v1976, %v1977
    %v1979 = vrot.slane %v1978, 2
    %v1980 = vadd.f32 %v1978, %v1979
    %v1981 = vrot.slane %v1980, 1
    %v1982 = vadd.f32 %v1980, %v1981
    %v1983 = vadd.f32 %v1895, %v1898
    %v1984 = vadd.f32 %v1983, %v1901
    %v1985 = vadd.f32 %v1984, %v1904
    %v1986 = vadd.f32 %v1985, %v1907
    %v1987 = vadd.f32 %v1986, %v1910
    %v1988 = vadd.f32 %v1987, %v1913
    %v1989 = vadd.f32 %v1988, %v1916
    %v1990 = vadd.f32 %v1989, %v1919
    %v1991 = vadd.f32 %v1990, %v1922
    %v1992 = vadd.f32 %v1991, %v1925
    %v1993 = vadd.f32 %v1992, %v1928
    %v1994 = vadd.f32 %v1993, %v1931
    %v1995 = vadd.f32 %v1994, %v1934
    %v1996 = vadd.f32 %v1995, %v1937
    %v1997 = vadd.f32 %v1996, %v1940
    %v1998 = vrot.slane %v1997, 4
    %v1999 = vadd.f32 %v1997, %v1998
    %v2000 = vrot.slane %v1999, 2
    %v2001 = vadd.f32 %v1999, %v2000
    %v2002 = vrot.slane %v2001, 1
    %v2003 = vadd.f32 %v2001, %v2002
    %vm2004 = vcmp.gt.f32.partialorder %v1961, 0.0
    %vm2005 = vcmp.gt.f32.partialorder %v1982, 0.0
    %vm2006 = vcmp.gt.f32.partialorder %v2003, 0.0
    %v2007 = vmul.f32 %v1961, 0.2
    %v2008 = vmul.f32 %v1982, 0.2
    %v2009 = vmul.f32 %v2003, 0.2
    %v2010 = vsel %vm2004, %v1961, %v2007
    %v2011 = vsel %vm2005, %v1982, %v2008
    %v2012 = vsel %vm2006, %v2003, %v2009
    %v2013 = vsel %vm700, %v2010, -1e+30
    %v2014 = vsel %vm701, %v2011, -1e+30
    %v2015 = vsel %vm702, %v2012, -1e+30
    %v2016 = vsel %vm703, %v2010, -1e+30
    %v2017 = vsel %vm704, %v2011, -1e+30
    %v2018 = vsel %vm705, %v2012, -1e+30
    %v2019 = vsel %vm706, %v2010, -1e+30
    %v2020 = vsel %vm707, %v2011, -1e+30
    %v2021 = vsel %vm708, %v2012, -1e+30
    %v2022 = vsel %vm709, %v2010, -1e+30
    %v2023 = vsel %vm710, %v2011, -1e+30
    %v2024 = vsel %vm711, %v2012, -1e+30
    %v2025 = vsel %vm712, %v2010, -1e+30
    %v2026 = vsel %vm713, %v2011, -1e+30
    %v2027 = vsel %vm714, %v2012, -1e+30
    %v2028 = vsel %vm715, %v2010, -1e+30
    %v2029 = vsel %vm716, %v2011, -1e+30
    %v2030 = vsel %vm717, %v2012, -1e+30
    %v2031 = vsel %vm718, %v2010, -1e+30
    %v2032 = vsel %vm719, %v2011, -1e+30
    %v2033 = vsel %vm720, %v2012, -1e+30
    %v2034 = vsel %vm721, %v2010, -1e+30
    %v2035 = vsel %vm722, %v2011, -1e+30
    %v2036 = vsel %vm723, %v2012, -1e+30
    %v2037 = vsel %vm724, %v2010, -1e+30
    %v2038 = vsel %vm725, %v2011, -1e+30
    %v2039 = vsel %vm726, %v2012, -1e+30
    %v2040 = vsel %vm727, %v2010, -1e+30
    %v2041 = vsel %vm728, %v2011, -1e+30
    %v2042 = vsel %vm729, %v2012, -1e+30
    %v2043 = vsel %vm730, %v2010, -1e+30
    %v2044 = vsel %vm731, %v2011, -1e+30
    %v2045 = vsel %vm732, %v2012, -1e+30
    %v2046 = vsel %vm733, %v2010, -1e+30
    %v2047 = vsel %vm734, %v2011, -1e+30
    %v2048 = vsel %vm735, %v2012, -1e+30
    %v2049 = vsel %vm736, %v2010, -1e+30
    %v2050 = vsel %vm737, %v2011, -1e+30
    %v2051 = vsel %vm738, %v2012, -1e+30
    %v2052 = vsel %vm739, %v2010, -1e+30
    %v2053 = vsel %vm740, %v2011, -1e+30
    %v2054 = vsel %vm741, %v2012, -1e+30
    %v2055 = vsel %vm742, %v2010, -1e+30
    %v2056 = vsel %vm743, %v2011, -1e+30
    %v2057 = vsel %vm744, %v2012, -1e+30
    %v2058 = vsel %vm745, %v2010, -1e+30
    %v2059 = vsel %vm746, %v2011, -1e+30
    %v2060 = vsel %vm747, %v2012, -1e+30
    %v2061 = vmax.f32 %v2013, %v2014
    %v2062 = vmax.f32 %v2061, %v2015
    %2063 = vmax.xlane.f32.xlu0 %v2062
    %v2064 = vpop.xlane.xlu0 %2063
    %v2065 = vmax.f32 %v2016, %v2017
    %v2066 = vmax.f32 %v2065, %v2018
    %2067 = vmax.xlane.f32.xlu0 %v2066
    %v2068 = vpop.xlane.xlu0 %2067
    %v2069 = vmax.f32 %v2019, %v2020
    %v2070 = vmax.f32 %v2069, %v2021
    %2071 = vmax.xlane.f32.xlu0 %v2070
    %v2072 = vpop.xlane.xlu0 %2071
    %v2073 = vmax.f32 %v2022, %v2023
    %v2074 = vmax.f32 %v2073, %v2024
    %2075 = vmax.xlane.f32.xlu0 %v2074
    %v2076 = vpop.xlane.xlu0 %2075
    %v2077 = vmax.f32 %v2025, %v2026
    %v2078 = vmax.f32 %v2077, %v2027
    %2079 = vmax.xlane.f32.xlu0 %v2078
    %v2080 = vpop.xlane.xlu0 %2079
    %v2081 = vmax.f32 %v2028, %v2029
    %v2082 = vmax.f32 %v2081, %v2030
    %2083 = vmax.xlane.f32.xlu0 %v2082
    %v2084 = vpop.xlane.xlu0 %2083
    %v2085 = vmax.f32 %v2031, %v2032
    %v2086 = vmax.f32 %v2085, %v2033
    %2087 = vmax.xlane.f32.xlu0 %v2086
    %v2088 = vpop.xlane.xlu0 %2087
    %v2089 = vmax.f32 %v2034, %v2035
    %v2090 = vmax.f32 %v2089, %v2036
    %2091 = vmax.xlane.f32.xlu0 %v2090
    %v2092 = vpop.xlane.xlu0 %2091
    %v2093 = vmax.f32 %v2037, %v2038
    %v2094 = vmax.f32 %v2093, %v2039
    %2095 = vmax.xlane.f32.xlu0 %v2094
    %v2096 = vpop.xlane.xlu0 %2095
    %v2097 = vmax.f32 %v2040, %v2041
    %v2098 = vmax.f32 %v2097, %v2042
    %2099 = vmax.xlane.f32.xlu0 %v2098
    %v2100 = vpop.xlane.xlu0 %2099
    %v2101 = vmax.f32 %v2043, %v2044
    %v2102 = vmax.f32 %v2101, %v2045
    %2103 = vmax.xlane.f32.xlu0 %v2102
    %v2104 = vpop.xlane.xlu0 %2103
    %v2105 = vmax.f32 %v2046, %v2047
    %v2106 = vmax.f32 %v2105, %v2048
    %2107 = vmax.xlane.f32.xlu0 %v2106
    %v2108 = vpop.xlane.xlu0 %2107
    %v2109 = vmax.f32 %v2049, %v2050
    %v2110 = vmax.f32 %v2109, %v2051
    %2111 = vmax.xlane.f32.xlu0 %v2110
    %v2112 = vpop.xlane.xlu0 %2111
    %v2113 = vmax.f32 %v2052, %v2053
    %v2114 = vmax.f32 %v2113, %v2054
    %2115 = vmax.xlane.f32.xlu0 %v2114
    %v2116 = vpop.xlane.xlu0 %2115
    %v2117 = vmax.f32 %v2055, %v2056
    %v2118 = vmax.f32 %v2117, %v2057
    %2119 = vmax.xlane.f32.xlu0 %v2118
    %v2120 = vpop.xlane.xlu0 %2119
    %v2121 = vmax.f32 %v2058, %v2059
    %v2122 = vmax.f32 %v2121, %v2060
    %2123 = vmax.xlane.f32.xlu0 %v2122
    %v2124 = vpop.xlane.xlu0 %2123
    %v2125 = vld [vmem:[#allocation4] sm:$0xff]
    %v2126 = vld [vmem:[#allocation4 + $0x8] sm:$0xff]
    %v2127 = vld [vmem:[#allocation4 + $0x10] sm:$0xff]
    %v2128 = vld [vmem:[#allocation4 + $0x18] sm:$0xff]
    %v2129 = vld [vmem:[#allocation4 + $0x20] sm:$0xff]
    %v2130 = vld [vmem:[#allocation4 + $0x28] sm:$0xff]
    %v2131 = vld [vmem:[#allocation4 + $0x30] sm:$0xff]
    %v2132 = vld [vmem:[#allocation4 + $0x38] sm:$0xff]
    %v2133 = vld [vmem:[#allocation4 + $0x40] sm:$0xff]
    %v2134 = vld [vmem:[#allocation4 + $0x48] sm:$0xff]
    %v2135 = vld [vmem:[#allocation4 + $0x50] sm:$0xff]
    %v2136 = vld [vmem:[#allocation4 + $0x58] sm:$0xff]
    %v2137 = vld [vmem:[#allocation4 + $0x60] sm:$0xff]
    %v2138 = vld [vmem:[#allocation4 + $0x68] sm:$0xff]
    %v2139 = vld [vmem:[#allocation4 + $0x70] sm:$0xff]
    %v2140 = vld [vmem:[#allocation4 + $0x78] sm:$0xff]
    %v2141 = vmax.f32 %v2125, %v2064
    %v2142 = vmax.f32 %v2126, %v2068
    %v2143 = vmax.f32 %v2127, %v2072
    %v2144 = vmax.f32 %v2128, %v2076
    %v2145 = vmax.f32 %v2129, %v2080
    %v2146 = vmax.f32 %v2130, %v2084
    %v2147 = vmax.f32 %v2131, %v2088
    %v2148 = vmax.f32 %v2132, %v2092
    %v2149 = vmax.f32 %v2133, %v2096
    %v2150 = vmax.f32 %v2134, %v2100
    %v2151 = vmax.f32 %v2135, %v2104
    %v2152 = vmax.f32 %v2136, %v2108
    %v2153 = vmax.f32 %v2137, %v2112
    %v2154 = vmax.f32 %v2138, %v2116
    %v2155 = vmax.f32 %v2139, %v2120
    %v2156 = vmax.f32 %v2140, %v2124
    %v2157 = vsub.f32 %v2125, %v2141
    %v2158 = vsub.f32 %v2126, %v2142
    %v2159 = vsub.f32 %v2127, %v2143
    %v2160 = vsub.f32 %v2128, %v2144
    %v2161 = vsub.f32 %v2129, %v2145
    %v2162 = vsub.f32 %v2130, %v2146
    %v2163 = vsub.f32 %v2131, %v2147
    %v2164 = vsub.f32 %v2132, %v2148
    %v2165 = vsub.f32 %v2133, %v2149
    %v2166 = vsub.f32 %v2134, %v2150
    %v2167 = vsub.f32 %v2135, %v2151
    %v2168 = vsub.f32 %v2136, %v2152
    %v2169 = vsub.f32 %v2137, %v2153
    %v2170 = vsub.f32 %v2138, %v2154
    %v2171 = vsub.f32 %v2139, %v2155
    %v2172 = vsub.f32 %v2140, %v2156
    %v2173 = vmul.f32 %v2157, 1.442695
    %v2174 = vpow.pop %v2173
    %v2175 = vmul.f32 %v2158, 1.442695
    %v2176 = vpow.pop %v2175
    %v2177 = vmul.f32 %v2159, 1.442695
    %v2178 = vpow.pop %v2177
    %v2179 = vmul.f32 %v2160, 1.442695
    %v2180 = vpow.pop %v2179
    %v2181 = vmul.f32 %v2161, 1.442695
    %v2182 = vpow.pop %v2181
    %v2183 = vmul.f32 %v2162, 1.442695
    %v2184 = vpow.pop %v2183
    %v2185 = vmul.f32 %v2163, 1.442695
    %v2186 = vpow.pop %v2185
    %v2187 = vmul.f32 %v2164, 1.442695
    %v2188 = vpow.pop %v2187
    %v2189 = vmul.f32 %v2165, 1.442695
    %v2190 = vpow.pop %v2189
    %v2191 = vmul.f32 %v2166, 1.442695
    %v2192 = vpow.pop %v2191
    %v2193 = vmul.f32 %v2167, 1.442695
    %v2194 = vpow.pop %v2193
    %v2195 = vmul.f32 %v2168, 1.442695
    %v2196 = vpow.pop %v2195
    %v2197 = vmul.f32 %v2169, 1.442695
    %v2198 = vpow.pop %v2197
    %v2199 = vmul.f32 %v2170, 1.442695
    %v2200 = vpow.pop %v2199
    %v2201 = vmul.f32 %v2171, 1.442695
    %v2202 = vpow.pop %v2201
    %v2203 = vmul.f32 %v2172, 1.442695
    %v2204 = vpow.pop %v2203
    %2206 = vset.pattern.permute.xlu0 0
    %2207 = vperm.xlu0 %2206, %v2141
    %v2208 = vpop.permute.xlu0 %2207
    %2211 = vset.pattern.permute.xlu0 0
    %2212 = vperm.xlu0 %2211, %v2142
    %v2213 = vpop.permute.xlu0 %2212
    %2216 = vset.pattern.permute.xlu0 0
    %2217 = vperm.xlu0 %2216, %v2143
    %v2218 = vpop.permute.xlu0 %2217
    %2221 = vset.pattern.permute.xlu0 0
    %2222 = vperm.xlu0 %2221, %v2144
    %v2223 = vpop.permute.xlu0 %2222
    %2226 = vset.pattern.permute.xlu0 0
    %2227 = vperm.xlu0 %2226, %v2145
    %v2228 = vpop.permute.xlu0 %2227
    %2231 = vset.pattern.permute.xlu0 0
    %2232 = vperm.xlu0 %2231, %v2146
    %v2233 = vpop.permute.xlu0 %2232
    %2236 = vset.pattern.permute.xlu0 0
    %2237 = vperm.xlu0 %2236, %v2147
    %v2238 = vpop.permute.xlu0 %2237
    %2241 = vset.pattern.permute.xlu0 0
    %2242 = vperm.xlu0 %2241, %v2148
    %v2243 = vpop.permute.xlu0 %2242
    %2246 = vset.pattern.permute.xlu0 0
    %2247 = vperm.xlu0 %2246, %v2149
    %v2248 = vpop.permute.xlu0 %2247
    %2251 = vset.pattern.permute.xlu0 0
    %2252 = vperm.xlu0 %2251, %v2150
    %v2253 = vpop.permute.xlu0 %2252
    %2256 = vset.pattern.permute.xlu0 0
    %2257 = vperm.xlu0 %2256, %v2151
    %v2258 = vpop.permute.xlu0 %2257
    %2261 = vset.pattern.permute.xlu0 0
    %2262 = vperm.xlu0 %2261, %v2152
    %v2263 = vpop.permute.xlu0 %2262
    %2266 = vset.pattern.permute.xlu0 0
    %2267 = vperm.xlu0 %2266, %v2153
    %v2268 = vpop.permute.xlu0 %2267
    %2271 = vset.pattern.permute.xlu0 0
    %2272 = vperm.xlu0 %2271, %v2154
    %v2273 = vpop.permute.xlu0 %2272
    %2276 = vset.pattern.permute.xlu0 0
    %2277 = vperm.xlu0 %2276, %v2155
    %v2278 = vpop.permute.xlu0 %2277
    %2281 = vset.pattern.permute.xlu0 0
    %2282 = vperm.xlu0 %2281, %v2156
    %v2283 = vpop.permute.xlu0 %2282
    %v2285 = vmul.f32 %v892, %v2208
    %v2286 = vmul.f32 %v893, %v2208
    %v2287 = vmul.f32 %v894, %v2208
    %v2288 = vmul.f32 %v895, %v2213
    %v2289 = vmul.f32 %v896, %v2213
    %v2290 = vmul.f32 %v897, %v2213
    %v2291 = vmul.f32 %v898, %v2218
    %v2292 = vmul.f32 %v899, %v2218
    %v2293 = vmul.f32 %v900, %v2218
    %v2294 = vmul.f32 %v901, %v2223
    %v2295 = vmul.f32 %v902, %v2223
    %v2296 = vmul.f32 %v903, %v2223
    %v2297 = vmul.f32 %v904, %v2228
    %v2298 = vmul.f32 %v905, %v2228
    %v2299 = vmul.f32 %v906, %v2228
    %v2300 = vmul.f32 %v907, %v2233
    %v2301 = vmul.f32 %v908, %v2233
    %v2302 = vmul.f32 %v909, %v2233
    %v2303 = vmul.f32 %v910, %v2238
    %v2304 = vmul.f32 %v911, %v2238
    %v2305 = vmul.f32 %v912, %v2238
    %v2306 = vmul.f32 %v913, %v2243
    %v2307 = vmul.f32 %v914, %v2243
    %v2308 = vmul.f32 %v915, %v2243
    %v2309 = vmul.f32 %v916, %v2248
    %v2310 = vmul.f32 %v917, %v2248
    %v2311 = vmul.f32 %v918, %v2248
    %v2312 = vmul.f32 %v919, %v2253
    %v2313 = vmul.f32 %v920, %v2253
    %v2314 = vmul.f32 %v921, %v2253
    %v2315 = vmul.f32 %v922, %v2258
    %v2316 = vmul.f32 %v923, %v2258
    %v2317 = vmul.f32 %v924, %v2258
    %v2318 = vmul.f32 %v925, %v2263
    %v2319 = vmul.f32 %v926, %v2263
    %v2320 = vmul.f32 %v927, %v2263
    %v2321 = vmul.f32 %v928, %v2268
    %v2322 = vmul.f32 %v929, %v2268
    %v2323 = vmul.f32 %v930, %v2268
    %v2324 = vmul.f32 %v931, %v2273
    %v2325 = vmul.f32 %v932, %v2273
    %v2326 = vmul.f32 %v933, %v2273
    %v2327 = vmul.f32 %v934, %v2278
    %v2328 = vmul.f32 %v935, %v2278
    %v2329 = vmul.f32 %v936, %v2278
    %v2330 = vmul.f32 %v937, %v2283
    %v2331 = vmul.f32 %v938, %v2283
    %v2332 = vmul.f32 %v939, %v2283
    %v2333 = vadd.f32 %v2285, %v2288
    %v2334 = vadd.f32 %v2333, %v2291
    %v2335 = vadd.f32 %v2334, %v2294
    %v2336 = vadd.f32 %v2335, %v2297
    %v2337 = vadd.f32 %v2336, %v2300
    %v2338 = vadd.f32 %v2337, %v2303
    %v2339 = vadd.f32 %v2338, %v2306
    %v2340 = vadd.f32 %v2339, %v2309
    %v2341 = vadd.f32 %v2340, %v2312
    %v2342 = vadd.f32 %v2341, %v2315
    %v2343 = vadd.f32 %v2342, %v2318
    %v2344 = vadd.f32 %v2343, %v2321
    %v2345 = vadd.f32 %v2344, %v2324
    %v2346 = vadd.f32 %v2345, %v2327
    %v2347 = vadd.f32 %v2346, %v2330
    %v2348 = vrot.slane %v2347, 4
    %v2349 = vadd.f32 %v2347, %v2348
    %v2350 = vrot.slane %v2349, 2
    %v2351 = vadd.f32 %v2349, %v2350
    %v2352 = vrot.slane %v2351, 1
    %v2353 = vadd.f32 %v2351, %v2352
    %v2354 = vadd.f32 %v2286, %v2289
    %v2355 = vadd.f32 %v2354, %v2292
    %v2356 = vadd.f32 %v2355, %v2295
    %v2357 = vadd.f32 %v2356, %v2298
    %v2358 = vadd.f32 %v2357, %v2301
    %v2359 = vadd.f32 %v2358, %v2304
    %v2360 = vadd.f32 %v2359, %v2307
    %v2361 = vadd.f32 %v2360, %v2310
    %v2362 = vadd.f32 %v2361, %v2313
    %v2363 = vadd.f32 %v2362, %v2316
    %v2364 = vadd.f32 %v2363, %v2319
    %v2365 = vadd.f32 %v2364, %v2322
    %v2366 = vadd.f32 %v2365, %v2325
    %v2367 = vadd.f32 %v2366, %v2328
    %v2368 = vadd.f32 %v2367, %v2331
    %v2369 = vrot.slane %v2368, 4
    %v2370 = vadd.f32 %v2368, %v2369
    %v2371 = vrot.slane %v2370, 2
    %v2372 = vadd.f32 %v2370, %v2371
    %v2373 = vrot.slane %v2372, 1
    %v2374 = vadd.f32 %v2372, %v2373
    %v2375 = vadd.f32 %v2287, %v2290
    %v2376 = vadd.f32 %v2375, %v2293
    %v2377 = vadd.f32 %v2376, %v2296
    %v2378 = vadd.f32 %v2377, %v2299
    %v2379 = vadd.f32 %v2378, %v2302
    %v2380 = vadd.f32 %v2379, %v2305
    %v2381 = vadd.f32 %v2380, %v2308
    %v2382 = vadd.f32 %v2381, %v2311
    %v2383 = vadd.f32 %v2382, %v2314
    %v2384 = vadd.f32 %v2383, %v2317
    %v2385 = vadd.f32 %v2384, %v2320
    %v2386 = vadd.f32 %v2385, %v2323
    %v2387 = vadd.f32 %v2386, %v2326
    %v2388 = vadd.f32 %v2387, %v2329
    %v2389 = vadd.f32 %v2388, %v2332
    %v2390 = vrot.slane %v2389, 4
    %v2391 = vadd.f32 %v2389, %v2390
    %v2392 = vrot.slane %v2391, 2
    %v2393 = vadd.f32 %v2391, %v2392
    %v2394 = vrot.slane %v2393, 1
    %v2395 = vadd.f32 %v2393, %v2394
    %v2396 = vsub.f32 %v2010, %v2353
    %v2397 = vsub.f32 %v2011, %v2374
    %v2398 = vsub.f32 %v2012, %v2395
    %v2399 = vmul.f32 %v2396, 1.442695
    %v2400 = vpow.pop %v2399
    %v2401 = vmul.f32 %v2397, 1.442695
    %v2402 = vpow.pop %v2401
    %v2403 = vmul.f32 %v2398, 1.442695
    %v2404 = vpow.pop %v2403
    %v2408 = vrot.slane %v2402, 7
    %v2409 = vrot.slane %v2404, 6
    %vm2410 = vcmask 1040384
    %v2411 = vsel %vm2410, %v2400, %v2408
    %vm2412 = vcmask 1041408
    %v2413 = vsel %vm2412, %v2411, %v2409
    %v2415 = vsel %vm364, %v2413, 0.0
    %v2417 = vperm.slane %v2415, 0
    %v2418 = vperm.slane %v2415, 1
    %v2419 = vperm.slane %v2415, 2
    %v2423 = vmul.f32 %v1716, %v2417
    %v2424 = vmul.f32 %v1781, %v2418
    %v2425 = vmul.f32 %v1846, %v2419
    %v2426 = vmul.f32 %v1719, %v2417
    %v2427 = vmul.f32 %v1784, %v2418
    %v2428 = vmul.f32 %v1849, %v2419
    %v2429 = vmul.f32 %v1722, %v2417
    %v2430 = vmul.f32 %v1787, %v2418
    %v2431 = vmul.f32 %v1852, %v2419
    %v2432 = vmul.f32 %v1725, %v2417
    %v2433 = vmul.f32 %v1790, %v2418
    %v2434 = vmul.f32 %v1855, %v2419
    %v2435 = vmul.f32 %v1728, %v2417
    %v2436 = vmul.f32 %v1793, %v2418
    %v2437 = vmul.f32 %v1858, %v2419
    %v2438 = vmul.f32 %v1731, %v2417
    %v2439 = vmul.f32 %v1796, %v2418
    %v2440 = vmul.f32 %v1861, %v2419
    %v2441 = vmul.f32 %v1734, %v2417
    %v2442 = vmul.f32 %v1799, %v2418
    %v2443 = vmul.f32 %v1864, %v2419
    %v2444 = vmul.f32 %v1737, %v2417
    %v2445 = vmul.f32 %v1802, %v2418
    %v2446 = vmul.f32 %v1867, %v2419
    %v2447 = vmul.f32 %v1740, %v2417
    %v2448 = vmul.f32 %v1805, %v2418
    %v2449 = vmul.f32 %v1870, %v2419
    %v2450 = vmul.f32 %v1743, %v2417
    %v2451 = vmul.f32 %v1808, %v2418
    %v2452 = vmul.f32 %v1873, %v2419
    %v2453 = vmul.f32 %v1746, %v2417
    %v2454 = vmul.f32 %v1811, %v2418
    %v2455 = vmul.f32 %v1876, %v2419
    %v2456 = vmul.f32 %v1749, %v2417
    %v2457 = vmul.f32 %v1814, %v2418
    %v2458 = vmul.f32 %v1879, %v2419
    %v2459 = vmul.f32 %v1752, %v2417
    %v2460 = vmul.f32 %v1817, %v2418
    %v2461 = vmul.f32 %v1882, %v2419
    %v2462 = vmul.f32 %v1755, %v2417
    %v2463 = vmul.f32 %v1820, %v2418
    %v2464 = vmul.f32 %v1885, %v2419
    %v2465 = vmul.f32 %v1758, %v2417
    %v2466 = vmul.f32 %v1823, %v2418
    %v2467 = vmul.f32 %v1888, %v2419
    %v2468 = vmul.f32 %v1761, %v2417
    %v2469 = vmul.f32 %v1826, %v2418
    %v2470 = vmul.f32 %v1891, %v2419
    %2471 = vmatpush.xpose.msra.mxu0 %v2468
    %2472 = vmatpush.xpose.msra.mxu0 %v2465
    %2473 = vmatpush.xpose.msra.mxu0 %v2462
    %2474 = vmatpush.xpose.msra.mxu0 %v2459
    %2475 = vmatpush.xpose.msra.mxu0 %v2456
    %2476 = vmatpush.xpose.msra.mxu0 %v2453
    %2477 = vmatpush.xpose.msra.mxu0 %v2450
    %2478 = vmatpush.xpose.msra.mxu0 %v2447
    %2479 = vmatpush.xpose.msra.mxu0 %v2444
    %2480 = vmatpush.xpose.msra.mxu0 %v2441
    %2481 = vmatpush.xpose.msra.mxu0 %v2438
    %2482 = vmatpush.xpose.msra.mxu0 %v2435
    %2483 = vmatpush.xpose.msra.mxu0 %v2432
    %2484 = vmatpush.xpose.msra.mxu0 %v2429
    %2485 = vmatpush.xpose.msra.mxu0 %v2426
    %2486 = vmatpush.xpose.msra.mxu0 %v2423
    %2487 = vmatmul.f32.gmra.mxu0 %v892
    %v2488 = vpop.f32.mrf.mxu0
    %v2489 = vadd.f32 0.0, %v2488
    %2490 = vmatmul.f32.gmra.mxu0 %v895
    %v2491 = vpop.f32.mrf.mxu0
    %v2492 = vadd.f32 0.0, %v2491
    %2493 = vmatmul.f32.gmra.mxu0 %v898
    %v2494 = vpop.f32.mrf.mxu0
    %v2495 = vadd.f32 0.0, %v2494
    %2496 = vmatmul.f32.gmra.mxu0 %v901
    %v2497 = vpop.f32.mrf.mxu0
    %v2498 = vadd.f32 0.0, %v2497
    %2499 = vmatmul.f32.gmra.mxu0 %v904
    %v2500 = vpop.f32.mrf.mxu0
    %v2501 = vadd.f32 0.0, %v2500
    %2502 = vmatmul.f32.gmra.mxu0 %v907
    %v2503 = vpop.f32.mrf.mxu0
    %v2504 = vadd.f32 0.0, %v2503
    %2505 = vmatmul.f32.gmra.mxu0 %v910
    %v2506 = vpop.f32.mrf.mxu0
    %v2507 = vadd.f32 0.0, %v2506
    %2508 = vmatmul.f32.gmra.mxu0 %v913
    %v2509 = vpop.f32.mrf.mxu0
    %v2510 = vadd.f32 0.0, %v2509
    %2511 = vmatmul.f32.gmra.mxu0 %v916
    %v2512 = vpop.f32.mrf.mxu0
    %v2513 = vadd.f32 0.0, %v2512
    %2514 = vmatmul.f32.gmra.mxu0 %v919
    %v2515 = vpop.f32.mrf.mxu0
    %v2516 = vadd.f32 0.0, %v2515
    %2517 = vmatmul.f32.gmra.mxu0 %v922
    %v2518 = vpop.f32.mrf.mxu0
    %v2519 = vadd.f32 0.0, %v2518
    %2520 = vmatmul.f32.gmra.mxu0 %v925
    %v2521 = vpop.f32.mrf.mxu0
    %v2522 = vadd.f32 0.0, %v2521
    %2523 = vmatmul.f32.gmra.mxu0 %v928
    %v2524 = vpop.f32.mrf.mxu0
    %v2525 = vadd.f32 0.0, %v2524
    %2526 = vmatmul.f32.gmra.mxu0 %v931
    %v2527 = vpop.f32.mrf.mxu0
    %v2528 = vadd.f32 0.0, %v2527
    %2529 = vmatmul.f32.gmra.mxu0 %v934
    %v2530 = vpop.f32.mrf.mxu0
    %v2531 = vadd.f32 0.0, %v2530
    %2532 = vmatmul.f32.gmra.mxu0 %v937
    %v2533 = vpop.f32.mrf.mxu0
    %v2534 = vadd.f32 0.0, %v2533
    %2535 = vdwg.mxu0
    %2536 = vmatpush.xpose.msra.mxu0 %v2469
    %2537 = vmatpush.xpose.msra.mxu0 %v2466
    %2538 = vmatpush.xpose.msra.mxu0 %v2463
    %2539 = vmatpush.xpose.msra.mxu0 %v2460
    %2540 = vmatpush.xpose.msra.mxu0 %v2457
    %2541 = vmatpush.xpose.msra.mxu0 %v2454
    %2542 = vmatpush.xpose.msra.mxu0 %v2451
    %2543 = vmatpush.xpose.msra.mxu0 %v2448
    %2544 = vmatpush.xpose.msra.mxu0 %v2445
    %2545 = vmatpush.xpose.msra.mxu0 %v2442
    %2546 = vmatpush.xpose.msra.mxu0 %v2439
    %2547 = vmatpush.xpose.msra.mxu0 %v2436
    %2548 = vmatpush.xpose.msra.mxu0 %v2433
    %2549 = vmatpush.xpose.msra.mxu0 %v2430
    %2550 = vmatpush.xpose.msra.mxu0 %v2427
    %2551 = vmatpush.xpose.msra.mxu0 %v2424
    %2552 = vmatmul.f32.gmra.mxu0 %v893
    %v2553 = vpop.f32.mrf.mxu0
    %v2554 = vadd.f32 %v2489, %v2553
    %2555 = vmatmul.f32.gmra.mxu0 %v896
    %v2556 = vpop.f32.mrf.mxu0
    %v2557 = vadd.f32 %v2492, %v2556
    %2558 = vmatmul.f32.gmra.mxu0 %v899
    %v2559 = vpop.f32.mrf.mxu0
    %v2560 = vadd.f32 %v2495, %v2559
    %2561 = vmatmul.f32.gmra.mxu0 %v902
    %v2562 = vpop.f32.mrf.mxu0
    %v2563 = vadd.f32 %v2498, %v2562
    %2564 = vmatmul.f32.gmra.mxu0 %v905
    %v2565 = vpop.f32.mrf.mxu0
    %v2566 = vadd.f32 %v2501, %v2565
    %2567 = vmatmul.f32.gmra.mxu0 %v908
    %v2568 = vpop.f32.mrf.mxu0
    %v2569 = vadd.f32 %v2504, %v2568
    %2570 = vmatmul.f32.gmra.mxu0 %v911
    %v2571 = vpop.f32.mrf.mxu0
    %v2572 = vadd.f32 %v2507, %v2571
    %2573 = vmatmul.f32.gmra.mxu0 %v914
    %v2574 = vpop.f32.mrf.mxu0
    %v2575 = vadd.f32 %v2510, %v2574
    %2576 = vmatmul.f32.gmra.mxu0 %v917
    %v2577 = vpop.f32.mrf.mxu0
    %v2578 = vadd.f32 %v2513, %v2577
    %2579 = vmatmul.f32.gmra.mxu0 %v920
    %v2580 = vpop.f32.mrf.mxu0
    %v2581 = vadd.f32 %v2516, %v2580
    %2582 = vmatmul.f32.gmra.mxu0 %v923
    %v2583 = vpop.f32.mrf.mxu0
    %v2584 = vadd.f32 %v2519, %v2583
    %2585 = vmatmul.f32.gmra.mxu0 %v926
    %v2586 = vpop.f32.mrf.mxu0
    %v2587 = vadd.f32 %v2522, %v2586
    %2588 = vmatmul.f32.gmra.mxu0 %v929
    %v2589 = vpop.f32.mrf.mxu0
    %v2590 = vadd.f32 %v2525, %v2589
    %2591 = vmatmul.f32.gmra.mxu0 %v932
    %v2592 = vpop.f32.mrf.mxu0
    %v2593 = vadd.f32 %v2528, %v2592
    %2594 = vmatmul.f32.gmra.mxu0 %v935
    %v2595 = vpop.f32.mrf.mxu0
    %v2596 = vadd.f32 %v2531, %v2595
    %2597 = vmatmul.f32.gmra.mxu0 %v938
    %v2598 = vpop.f32.mrf.mxu0
    %v2599 = vadd.f32 %v2534, %v2598
    %2600 = vdwg.mxu0
    %2601 = vmatpush.xpose.msra.mxu0 %v2470
    %2602 = vmatpush.xpose.msra.mxu0 %v2467
    %2603 = vmatpush.xpose.msra.mxu0 %v2464
    %2604 = vmatpush.xpose.msra.mxu0 %v2461
    %2605 = vmatpush.xpose.msra.mxu0 %v2458
    %2606 = vmatpush.xpose.msra.mxu0 %v2455
    %2607 = vmatpush.xpose.msra.mxu0 %v2452
    %2608 = vmatpush.xpose.msra.mxu0 %v2449
    %2609 = vmatpush.xpose.msra.mxu0 %v2446
    %2610 = vmatpush.xpose.msra.mxu0 %v2443
    %2611 = vmatpush.xpose.msra.mxu0 %v2440
    %2612 = vmatpush.xpose.msra.mxu0 %v2437
    %2613 = vmatpush.xpose.msra.mxu0 %v2434
    %2614 = vmatpush.xpose.msra.mxu0 %v2431
    %2615 = vmatpush.xpose.msra.mxu0 %v2428
    %2616 = vmatpush.xpose.msra.mxu0 %v2425
    %2617 = vmatmul.f32.gmra.mxu0 %v894
    %v2618 = vpop.f32.mrf.mxu0
    %v2619 = vadd.f32 %v2554, %v2618
    %2620 = vmatmul.f32.gmra.mxu0 %v897
    %v2621 = vpop.f32.mrf.mxu0
    %v2622 = vadd.f32 %v2557, %v2621
    %2623 = vmatmul.f32.gmra.mxu0 %v900
    %v2624 = vpop.f32.mrf.mxu0
    %v2625 = vadd.f32 %v2560, %v2624
    %2626 = vmatmul.f32.gmra.mxu0 %v903
    %v2627 = vpop.f32.mrf.mxu0
    %v2628 = vadd.f32 %v2563, %v2627
    %2629 = vmatmul.f32.gmra.mxu0 %v906
    %v2630 = vpop.f32.mrf.mxu0
    %v2631 = vadd.f32 %v2566, %v2630
    %2632 = vmatmul.f32.gmra.mxu0 %v909
    %v2633 = vpop.f32.mrf.mxu0
    %v2634 = vadd.f32 %v2569, %v2633
    %2635 = vmatmul.f32.gmra.mxu0 %v912
    %v2636 = vpop.f32.mrf.mxu0
    %v2637 = vadd.f32 %v2572, %v2636
    %2638 = vmatmul.f32.gmra.mxu0 %v915
    %v2639 = vpop.f32.mrf.mxu0
    %v2640 = vadd.f32 %v2575, %v2639
    %2641 = vmatmul.f32.gmra.mxu0 %v918
    %v2642 = vpop.f32.mrf.mxu0
    %v2643 = vadd.f32 %v2578, %v2642
    %2644 = vmatmul.f32.gmra.mxu0 %v921
    %v2645 = vpop.f32.mrf.mxu0
    %v2646 = vadd.f32 %v2581, %v2645
    %2647 = vmatmul.f32.gmra.mxu0 %v924
    %v2648 = vpop.f32.mrf.mxu0
    %v2649 = vadd.f32 %v2584, %v2648
    %2650 = vmatmul.f32.gmra.mxu0 %v927
    %v2651 = vpop.f32.mrf.mxu0
    %v2652 = vadd.f32 %v2587, %v2651
    %2653 = vmatmul.f32.gmra.mxu0 %v930
    %v2654 = vpop.f32.mrf.mxu0
    %v2655 = vadd.f32 %v2590, %v2654
    %2656 = vmatmul.f32.gmra.mxu0 %v933
    %v2657 = vpop.f32.mrf.mxu0
    %v2658 = vadd.f32 %v2593, %v2657
    %2659 = vmatmul.f32.gmra.mxu0 %v936
    %v2660 = vpop.f32.mrf.mxu0
    %v2661 = vadd.f32 %v2596, %v2660
    %2662 = vmatmul.f32.gmra.mxu0 %v939
    %v2663 = vpop.f32.mrf.mxu0
    %v2664 = vadd.f32 %v2599, %v2663
    %2665 = vdwg.mxu0
    %2666 = vmatpush.xpose.msra.mxu0 0.0
    %2667 = vmatpush.xpose.msra.mxu0 0.0
    %2668 = vmatpush.xpose.msra.mxu0 0.0
    %2669 = vmatpush.xpose.msra.mxu0 0.0
    %2670 = vmatpush.xpose.msra.mxu0 0.0
    %2671 = vmatpush.xpose.msra.mxu0 0.0
    %2672 = vmatpush.xpose.msra.mxu0 0.0
    %2673 = vmatpush.xpose.msra.mxu0 0.0
    %2674 = vmatpush.xpose.msra.mxu0 0.0
    %2675 = vmatpush.xpose.msra.mxu0 0.0
    %2676 = vmatpush.xpose.msra.mxu0 0.0
    %2677 = vmatpush.xpose.msra.mxu0 0.0
    %2678 = vmatpush.xpose.msra.mxu0 0.0
    %2679 = vmatpush.xpose.msra.mxu0 0.0
    %2680 = vmatpush.xpose.msra.mxu0 0.0
    %2681 = vmatpush.xpose.msra.mxu0 %v2417
    %2682 = vmatmul.f32.gmra.mxu0 %v892
    %v2683 = vpop.f32.mrf.mxu0
    %v2684 = vadd.f32 0.0, %v2683
    %2685 = vmatmul.f32.gmra.mxu0 %v895
    %v2686 = vpop.f32.mrf.mxu0
    %v2687 = vadd.f32 0.0, %v2686
    %2688 = vmatmul.f32.gmra.mxu0 %v898
    %v2689 = vpop.f32.mrf.mxu0
    %v2690 = vadd.f32 0.0, %v2689
    %2691 = vmatmul.f32.gmra.mxu0 %v901
    %v2692 = vpop.f32.mrf.mxu0
    %v2693 = vadd.f32 0.0, %v2692
    %2694 = vmatmul.f32.gmra.mxu0 %v904
    %v2695 = vpop.f32.mrf.mxu0
    %v2696 = vadd.f32 0.0, %v2695
    %2697 = vmatmul.f32.gmra.mxu0 %v907
    %v2698 = vpop.f32.mrf.mxu0
    %v2699 = vadd.f32 0.0, %v2698
    %2700 = vmatmul.f32.gmra.mxu0 %v910
    %v2701 = vpop.f32.mrf.mxu0
    %v2702 = vadd.f32 0.0, %v2701
    %2703 = vmatmul.f32.gmra.mxu0 %v913
    %v2704 = vpop.f32.mrf.mxu0
    %v2705 = vadd.f32 0.0, %v2704
    %2706 = vmatmul.f32.gmra.mxu0 %v916
    %v2707 = vpop.f32.mrf.mxu0
    %v2708 = vadd.f32 0.0, %v2707
    %2709 = vmatmul.f32.gmra.mxu0 %v919
    %v2710 = vpop.f32.mrf.mxu0
    %v2711 = vadd.f32 0.0, %v2710
    %2712 = vmatmul.f32.gmra.mxu0 %v922
    %v2713 = vpop.f32.mrf.mxu0
    %v2714 = vadd.f32 0.0, %v2713
    %2715 = vmatmul.f32.gmra.mxu0 %v925
    %v2716 = vpop.f32.mrf.mxu0
    %v2717 = vadd.f32 0.0, %v2716
    %2718 = vmatmul.f32.gmra.mxu0 %v928
    %v2719 = vpop.f32.mrf.mxu0
    %v2720 = vadd.f32 0.0, %v2719
    %2721 = vmatmul.f32.gmra.mxu0 %v931
    %v2722 = vpop.f32.mrf.mxu0
    %v2723 = vadd.f32 0.0, %v2722
    %2724 = vmatmul.f32.gmra.mxu0 %v934
    %v2725 = vpop.f32.mrf.mxu0
    %v2726 = vadd.f32 0.0, %v2725
    %2727 = vmatmul.f32.gmra.mxu0 %v937
    %v2728 = vpop.f32.mrf.mxu0
    %v2729 = vadd.f32 0.0, %v2728
    %2730 = vdwg.mxu0
    %2731 = vmatpush.xpose.msra.mxu0 0.0
    %2732 = vmatpush.xpose.msra.mxu0 0.0
    %2733 = vmatpush.xpose.msra.mxu0 0.0
    %2734 = vmatpush.xpose.msra.mxu0 0.0
    %2735 = vmatpush.xpose.msra.mxu0 0.0
    %2736 = vmatpush.xpose.msra.mxu0 0.0
    %2737 = vmatpush.xpose.msra.mxu0 0.0
    %2738 = vmatpush.xpose.msra.mxu0 0.0
    %2739 = vmatpush.xpose.msra.mxu0 0.0
    %2740 = vmatpush.xpose.msra.mxu0 0.0
    %2741 = vmatpush.xpose.msra.mxu0 0.0
    %2742 = vmatpush.xpose.msra.mxu0 0.0
    %2743 = vmatpush.xpose.msra.mxu0 0.0
    %2744 = vmatpush.xpose.msra.mxu0 0.0
    %2745 = vmatpush.xpose.msra.mxu0 0.0
    %2746 = vmatpush.xpose.msra.mxu0 %v2418
    %2747 = vmatmul.f32.gmra.mxu0 %v893
    %v2748 = vpop.f32.mrf.mxu0
    %v2749 = vadd.f32 %v2684, %v2748
    %2750 = vmatmul.f32.gmra.mxu0 %v896
    %v2751 = vpop.f32.mrf.mxu0
    %v2752 = vadd.f32 %v2687, %v2751
    %2753 = vmatmul.f32.gmra.mxu0 %v899
    %v2754 = vpop.f32.mrf.mxu0
    %v2755 = vadd.f32 %v2690, %v2754
    %2756 = vmatmul.f32.gmra.mxu0 %v902
    %v2757 = vpop.f32.mrf.mxu0
    %v2758 = vadd.f32 %v2693, %v2757
    %2759 = vmatmul.f32.gmra.mxu0 %v905
    %v2760 = vpop.f32.mrf.mxu0
    %v2761 = vadd.f32 %v2696, %v2760
    %2762 = vmatmul.f32.gmra.mxu0 %v908
    %v2763 = vpop.f32.mrf.mxu0
    %v2764 = vadd.f32 %v2699, %v2763
    %2765 = vmatmul.f32.gmra.mxu0 %v911
    %v2766 = vpop.f32.mrf.mxu0
    %v2767 = vadd.f32 %v2702, %v2766
    %2768 = vmatmul.f32.gmra.mxu0 %v914
    %v2769 = vpop.f32.mrf.mxu0
    %v2770 = vadd.f32 %v2705, %v2769
    %2771 = vmatmul.f32.gmra.mxu0 %v917
    %v2772 = vpop.f32.mrf.mxu0
    %v2773 = vadd.f32 %v2708, %v2772
    %2774 = vmatmul.f32.gmra.mxu0 %v920
    %v2775 = vpop.f32.mrf.mxu0
    %v2776 = vadd.f32 %v2711, %v2775
    %2777 = vmatmul.f32.gmra.mxu0 %v923
    %v2778 = vpop.f32.mrf.mxu0
    %v2779 = vadd.f32 %v2714, %v2778
    %2780 = vmatmul.f32.gmra.mxu0 %v926
    %v2781 = vpop.f32.mrf.mxu0
    %v2782 = vadd.f32 %v2717, %v2781
    %2783 = vmatmul.f32.gmra.mxu0 %v929
    %v2784 = vpop.f32.mrf.mxu0
    %v2785 = vadd.f32 %v2720, %v2784
    %2786 = vmatmul.f32.gmra.mxu0 %v932
    %v2787 = vpop.f32.mrf.mxu0
    %v2788 = vadd.f32 %v2723, %v2787
    %2789 = vmatmul.f32.gmra.mxu0 %v935
    %v2790 = vpop.f32.mrf.mxu0
    %v2791 = vadd.f32 %v2726, %v2790
    %2792 = vmatmul.f32.gmra.mxu0 %v938
    %v2793 = vpop.f32.mrf.mxu0
    %v2794 = vadd.f32 %v2729, %v2793
    %2795 = vdwg.mxu0
    %2796 = vmatpush.xpose.msra.mxu0 0.0
    %2797 = vmatpush.xpose.msra.mxu0 0.0
    %2798 = vmatpush.xpose.msra.mxu0 0.0
    %2799 = vmatpush.xpose.msra.mxu0 0.0
    %2800 = vmatpush.xpose.msra.mxu0 0.0
    %2801 = vmatpush.xpose.msra.mxu0 0.0
    %2802 = vmatpush.xpose.msra.mxu0 0.0
    %2803 = vmatpush.xpose.msra.mxu0 0.0
    %2804 = vmatpush.xpose.msra.mxu0 0.0
    %2805 = vmatpush.xpose.msra.mxu0 0.0
    %2806 = vmatpush.xpose.msra.mxu0 0.0
    %2807 = vmatpush.xpose.msra.mxu0 0.0
    %2808 = vmatpush.xpose.msra.mxu0 0.0
    %2809 = vmatpush.xpose.msra.mxu0 0.0
    %2810 = vmatpush.xpose.msra.mxu0 0.0
    %2811 = vmatpush.xpose.msra.mxu0 %v2419
    %2812 = vmatmul.f32.gmra.mxu0 %v894
    %v2813 = vpop.f32.mrf.mxu0
    %v2814 = vadd.f32 %v2749, %v2813
    %2815 = vmatmul.f32.gmra.mxu0 %v897
    %v2816 = vpop.f32.mrf.mxu0
    %v2817 = vadd.f32 %v2752, %v2816
    %2818 = vmatmul.f32.gmra.mxu0 %v900
    %v2819 = vpop.f32.mrf.mxu0
    %v2820 = vadd.f32 %v2755, %v2819
    %2821 = vmatmul.f32.gmra.mxu0 %v903
    %v2822 = vpop.f32.mrf.mxu0
    %v2823 = vadd.f32 %v2758, %v2822
    %2824 = vmatmul.f32.gmra.mxu0 %v906
    %v2825 = vpop.f32.mrf.mxu0
    %v2826 = vadd.f32 %v2761, %v2825
    %2827 = vmatmul.f32.gmra.mxu0 %v909
    %v2828 = vpop.f32.mrf.mxu0
    %v2829 = vadd.f32 %v2764, %v2828
    %2830 = vmatmul.f32.gmra.mxu0 %v912
    %v2831 = vpop.f32.mrf.mxu0
    %v2832 = vadd.f32 %v2767, %v2831
    %2833 = vmatmul.f32.gmra.mxu0 %v915
    %v2834 = vpop.f32.mrf.mxu0
    %v2835 = vadd.f32 %v2770, %v2834
    %2836 = vmatmul.f32.gmra.mxu0 %v918
    %v2837 = vpop.f32.mrf.mxu0
    %v2838 = vadd.f32 %v2773, %v2837
    %2839 = vmatmul.f32.gmra.mxu0 %v921
    %v2840 = vpop.f32.mrf.mxu0
    %v2841 = vadd.f32 %v2776, %v2840
    %2842 = vmatmul.f32.gmra.mxu0 %v924
    %v2843 = vpop.f32.mrf.mxu0
    %v2844 = vadd.f32 %v2779, %v2843
    %2845 = vmatmul.f32.gmra.mxu0 %v927
    %v2846 = vpop.f32.mrf.mxu0
    %v2847 = vadd.f32 %v2782, %v2846
    %2848 = vmatmul.f32.gmra.mxu0 %v930
    %v2849 = vpop.f32.mrf.mxu0
    %v2850 = vadd.f32 %v2785, %v2849
    %2851 = vmatmul.f32.gmra.mxu0 %v933
    %v2852 = vpop.f32.mrf.mxu0
    %v2853 = vadd.f32 %v2788, %v2852
    %2854 = vmatmul.f32.gmra.mxu0 %v936
    %v2855 = vpop.f32.mrf.mxu0
    %v2856 = vadd.f32 %v2791, %v2855
    %2857 = vmatmul.f32.gmra.mxu0 %v939
    %v2858 = vpop.f32.mrf.mxu0
    %v2859 = vadd.f32 %v2794, %v2858
    %2860 = vdwg.mxu0
    %vm2861 = vcmask 7168
    %2862 = vst.msk [vmem:[#allocation4] sm:$0xff] %vm2861, %v2141
    %2863 = vst.msk [vmem:[#allocation4 + $0x8] sm:$0xff] %vm2861, %v2142
    %2864 = vst.msk [vmem:[#allocation4 + $0x10] sm:$0xff] %vm2861, %v2143
    %2865 = vst.msk [vmem:[#allocation4 + $0x18] sm:$0xff] %vm2861, %v2144
    %2866 = vst.msk [vmem:[#allocation4 + $0x20] sm:$0xff] %vm2861, %v2145
    %2867 = vst.msk [vmem:[#allocation4 + $0x28] sm:$0xff] %vm2861, %v2146
    %2868 = vst.msk [vmem:[#allocation4 + $0x30] sm:$0xff] %vm2861, %v2147
    %2869 = vst.msk [vmem:[#allocation4 + $0x38] sm:$0xff] %vm2861, %v2148
    %2870 = vst.msk [vmem:[#allocation4 + $0x40] sm:$0xff] %vm2861, %v2149
    %2871 = vst.msk [vmem:[#allocation4 + $0x48] sm:$0xff] %vm2861, %v2150
    %2872 = vst.msk [vmem:[#allocation4 + $0x50] sm:$0xff] %vm2861, %v2151
    %2873 = vst.msk [vmem:[#allocation4 + $0x58] sm:$0xff] %vm2861, %v2152
    %2874 = vst.msk [vmem:[#allocation4 + $0x60] sm:$0xff] %vm2861, %v2153
    %2875 = vst.msk [vmem:[#allocation4 + $0x68] sm:$0xff] %vm2861, %v2154
    %2876 = vst.msk [vmem:[#allocation4 + $0x70] sm:$0xff] %vm2861, %v2155
    %2877 = vst.msk [vmem:[#allocation4 + $0x78] sm:$0xff] %vm2861, %v2156
    %v2878 = vld [vmem:[#allocation5] sm:$0xff]
    %v2879 = vld [vmem:[#allocation5 + $0x8] sm:$0xff]
    %v2880 = vld [vmem:[#allocation5 + $0x10] sm:$0xff]
    %v2881 = vld [vmem:[#allocation5 + $0x18] sm:$0xff]
    %v2882 = vld [vmem:[#allocation5 + $0x20] sm:$0xff]
    %v2883 = vld [vmem:[#allocation5 + $0x28] sm:$0xff]
    %v2884 = vld [vmem:[#allocation5 + $0x30] sm:$0xff]
    %v2885 = vld [vmem:[#allocation5 + $0x38] sm:$0xff]
    %v2886 = vld [vmem:[#allocation5 + $0x40] sm:$0xff]
    %v2887 = vld [vmem:[#allocation5 + $0x48] sm:$0xff]
    %v2888 = vld [vmem:[#allocation5 + $0x50] sm:$0xff]
    %v2889 = vld [vmem:[#allocation5 + $0x58] sm:$0xff]
    %v2890 = vld [vmem:[#allocation5 + $0x60] sm:$0xff]
    %v2891 = vld [vmem:[#allocation5 + $0x68] sm:$0xff]
    %v2892 = vld [vmem:[#allocation5 + $0x70] sm:$0xff]
    %v2893 = vld [vmem:[#allocation5 + $0x78] sm:$0xff]
    %v2894 = vmul.f32 %v2174, %v2878
    %v2895 = vmul.f32 %v2176, %v2879
    %v2896 = vmul.f32 %v2178, %v2880
    %v2897 = vmul.f32 %v2180, %v2881
    %v2898 = vmul.f32 %v2182, %v2882
    %v2899 = vmul.f32 %v2184, %v2883
    %v2900 = vmul.f32 %v2186, %v2884
    %v2901 = vmul.f32 %v2188, %v2885
    %v2902 = vmul.f32 %v2190, %v2886
    %v2903 = vmul.f32 %v2192, %v2887
    %v2904 = vmul.f32 %v2194, %v2888
    %v2905 = vmul.f32 %v2196, %v2889
    %v2906 = vmul.f32 %v2198, %v2890
    %v2907 = vmul.f32 %v2200, %v2891
    %v2908 = vmul.f32 %v2202, %v2892
    %v2909 = vmul.f32 %v2204, %v2893
    %v2910 = vadd.f32 %v2894, %v2814
    %v2911 = vadd.f32 %v2895, %v2817
    %v2912 = vadd.f32 %v2896, %v2820
    %v2913 = vadd.f32 %v2897, %v2823
    %v2914 = vadd.f32 %v2898, %v2826
    %v2915 = vadd.f32 %v2899, %v2829
    %v2916 = vadd.f32 %v2900, %v2832
    %v2917 = vadd.f32 %v2901, %v2835
    %v2918 = vadd.f32 %v2902, %v2838
    %v2919 = vadd.f32 %v2903, %v2841
    %v2920 = vadd.f32 %v2904, %v2844
    %v2921 = vadd.f32 %v2905, %v2847
    %v2922 = vadd.f32 %v2906, %v2850
    %v2923 = vadd.f32 %v2907, %v2853
    %v2924 = vadd.f32 %v2908, %v2856
    %v2925 = vadd.f32 %v2909, %v2859
    %2926 = vst.msk [vmem:[#allocation5] sm:$0xff] %vm2861, %v2910
    %2927 = vst.msk [vmem:[#allocation5 + $0x8] sm:$0xff] %vm2861, %v2911
    %2928 = vst.msk [vmem:[#allocation5 + $0x10] sm:$0xff] %vm2861, %v2912
    %2929 = vst.msk [vmem:[#allocation5 + $0x18] sm:$0xff] %vm2861, %v2913
    %2930 = vst.msk [vmem:[#allocation5 + $0x20] sm:$0xff] %vm2861, %v2914
    %2931 = vst.msk [vmem:[#allocation5 + $0x28] sm:$0xff] %vm2861, %v2915
    %2932 = vst.msk [vmem:[#allocation5 + $0x30] sm:$0xff] %vm2861, %v2916
    %2933 = vst.msk [vmem:[#allocation5 + $0x38] sm:$0xff] %vm2861, %v2917
    %2934 = vst.msk [vmem:[#allocation5 + $0x40] sm:$0xff] %vm2861, %v2918
    %2935 = vst.msk [vmem:[#allocation5 + $0x48] sm:$0xff] %vm2861, %v2919
    %2936 = vst.msk [vmem:[#allocation5 + $0x50] sm:$0xff] %vm2861, %v2920
    %2937 = vst.msk [vmem:[#allocation5 + $0x58] sm:$0xff] %vm2861, %v2921
    %2938 = vst.msk [vmem:[#allocation5 + $0x60] sm:$0xff] %vm2861, %v2922
    %2939 = vst.msk [vmem:[#allocation5 + $0x68] sm:$0xff] %vm2861, %v2923
    %2940 = vst.msk [vmem:[#allocation5 + $0x70] sm:$0xff] %vm2861, %v2924
    %2941 = vst.msk [vmem:[#allocation5 + $0x78] sm:$0xff] %vm2861, %v2925
    %v2942 = vld [vmem:[#allocation6] sm:$0xff]
    %v2943 = vld [vmem:[#allocation6 + $0x8] sm:$0xff]
    %v2944 = vld [vmem:[#allocation6 + $0x10] sm:$0xff]
    %v2945 = vld [vmem:[#allocation6 + $0x18] sm:$0xff]
    %v2946 = vld [vmem:[#allocation6 + $0x20] sm:$0xff]
    %v2947 = vld [vmem:[#allocation6 + $0x28] sm:$0xff]
    %v2948 = vld [vmem:[#allocation6 + $0x30] sm:$0xff]
    %v2949 = vld [vmem:[#allocation6 + $0x38] sm:$0xff]
    %v2950 = vld [vmem:[#allocation6 + $0x40] sm:$0xff]
    %v2951 = vld [vmem:[#allocation6 + $0x48] sm:$0xff]
    %v2952 = vld [vmem:[#allocation6 + $0x50] sm:$0xff]
    %v2953 = vld [vmem:[#allocation6 + $0x58] sm:$0xff]
    %v2954 = vld [vmem:[#allocation6 + $0x60] sm:$0xff]
    %v2955 = vld [vmem:[#allocation6 + $0x68] sm:$0xff]
    %v2956 = vld [vmem:[#allocation6 + $0x70] sm:$0xff]
    %v2957 = vld [vmem:[#allocation6 + $0x78] sm:$0xff]
    %2959 = vset.pattern.permute.xlu0 0
    %2960 = vperm.xlu0 %2959, %v2174
    %v2961 = vpop.permute.xlu0 %2960
    %2964 = vset.pattern.permute.xlu0 0
    %2965 = vperm.xlu0 %2964, %v2176
    %v2966 = vpop.permute.xlu0 %2965
    %2969 = vset.pattern.permute.xlu0 0
    %2970 = vperm.xlu0 %2969, %v2178
    %v2971 = vpop.permute.xlu0 %2970
    %2974 = vset.pattern.permute.xlu0 0
    %2975 = vperm.xlu0 %2974, %v2180
    %v2976 = vpop.permute.xlu0 %2975
    %2979 = vset.pattern.permute.xlu0 0
    %2980 = vperm.xlu0 %2979, %v2182
    %v2981 = vpop.permute.xlu0 %2980
    %2984 = vset.pattern.permute.xlu0 0
    %2985 = vperm.xlu0 %2984, %v2184
    %v2986 = vpop.permute.xlu0 %2985
    %2989 = vset.pattern.permute.xlu0 0
    %2990 = vperm.xlu0 %2989, %v2186
    %v2991 = vpop.permute.xlu0 %2990
    %2994 = vset.pattern.permute.xlu0 0
    %2995 = vperm.xlu0 %2994, %v2188
    %v2996 = vpop.permute.xlu0 %2995
    %2999 = vset.pattern.permute.xlu0 0
    %3000 = vperm.xlu0 %2999, %v2190
    %v3001 = vpop.permute.xlu0 %3000
    %3004 = vset.pattern.permute.xlu0 0
    %3005 = vperm.xlu0 %3004, %v2192
    %v3006 = vpop.permute.xlu0 %3005
    %3009 = vset.pattern.permute.xlu0 0
    %3010 = vperm.xlu0 %3009, %v2194
    %v3011 = vpop.permute.xlu0 %3010
    %3014 = vset.pattern.permute.xlu0 0
    %3015 = vperm.xlu0 %3014, %v2196
    %v3016 = vpop.permute.xlu0 %3015
    %3019 = vset.pattern.permute.xlu0 0
    %3020 = vperm.xlu0 %3019, %v2198
    %v3021 = vpop.permute.xlu0 %3020
    %3024 = vset.pattern.permute.xlu0 0
    %3025 = vperm.xlu0 %3024, %v2200
    %v3026 = vpop.permute.xlu0 %3025
    %3029 = vset.pattern.permute.xlu0 0
    %3030 = vperm.xlu0 %3029, %v2202
    %v3031 = vpop.permute.xlu0 %3030
    %3034 = vset.pattern.permute.xlu0 0
    %3035 = vperm.xlu0 %3034, %v2204
    %v3036 = vpop.permute.xlu0 %3035
    %v3038 = vmul.f32 %v2961, %v2942
    %v3039 = vmul.f32 %v2966, %v2943
    %v3040 = vmul.f32 %v2971, %v2944
    %v3041 = vmul.f32 %v2976, %v2945
    %v3042 = vmul.f32 %v2981, %v2946
    %v3043 = vmul.f32 %v2986, %v2947
    %v3044 = vmul.f32 %v2991, %v2948
    %v3045 = vmul.f32 %v2996, %v2949
    %v3046 = vmul.f32 %v3001, %v2950
    %v3047 = vmul.f32 %v3006, %v2951
    %v3048 = vmul.f32 %v3011, %v2952
    %v3049 = vmul.f32 %v3016, %v2953
    %v3050 = vmul.f32 %v3021, %v2954
    %v3051 = vmul.f32 %v3026, %v2955
    %v3052 = vmul.f32 %v3031, %v2956
    %v3053 = vmul.f32 %v3036, %v2957
    %v3054 = vadd.f32 %v3038, %v2619
    %v3055 = vadd.f32 %v3039, %v2622
    %v3056 = vadd.f32 %v3040, %v2625
    %v3057 = vadd.f32 %v3041, %v2628
    %v3058 = vadd.f32 %v3042, %v2631
    %v3059 = vadd.f32 %v3043, %v2634
    %v3060 = vadd.f32 %v3044, %v2637
    %v3061 = vadd.f32 %v3045, %v2640
    %v3062 = vadd.f32 %v3046, %v2643
    %v3063 = vadd.f32 %v3047, %v2646
    %v3064 = vadd.f32 %v3048, %v2649
    %v3065 = vadd.f32 %v3049, %v2652
    %v3066 = vadd.f32 %v3050, %v2655
    %v3067 = vadd.f32 %v3051, %v2658
    %v3068 = vadd.f32 %v3052, %v2661
    %v3069 = vadd.f32 %v3053, %v2664
    %3070 = vst [vmem:[#allocation6] sm:$0xff] %v3054
    %3071 = vst [vmem:[#allocation6 + $0x8] sm:$0xff] %v3055
    %3072 = vst [vmem:[#allocation6 + $0x10] sm:$0xff] %v3056
    %3073 = vst [vmem:[#allocation6 + $0x18] sm:$0xff] %v3057
    %3074 = vst [vmem:[#allocation6 + $0x20] sm:$0xff] %v3058
    %3075 = vst [vmem:[#allocation6 + $0x28] sm:$0xff] %v3059
    %3076 = vst [vmem:[#allocation6 + $0x30] sm:$0xff] %v3060
    %3077 = vst [vmem:[#allocation6 + $0x38] sm:$0xff] %v3061
    %3078 = vst [vmem:[#allocation6 + $0x40] sm:$0xff] %v3062
    %3079 = vst [vmem:[#allocation6 + $0x48] sm:$0xff] %v3063
    %3080 = vst [vmem:[#allocation6 + $0x50] sm:$0xff] %v3064
    %3081 = vst [vmem:[#allocation6 + $0x58] sm:$0xff] %v3065
    %3082 = vst [vmem:[#allocation6 + $0x60] sm:$0xff] %v3066
    %3083 = vst [vmem:[#allocation6 + $0x68] sm:$0xff] %v3067
    %3084 = vst [vmem:[#allocation6 + $0x70] sm:$0xff] %v3068
    %3085 = vst [vmem:[#allocation6 + $0x78] sm:$0xff] %v3069
    // Predicated region
    $region30: #{tpu_custom_call.1} parent=1 // pred_check
      %p3086 = pneg %p48
    $region31: #{tpu_custom_call.1} parent=1 // pred_check_branch
      %3088 = sbr.rel (%p3086) target = $region33
    $region32: #{tpu_custom_call.1} parent=1 // pred_region
      %v3089 = vld [vmem:[#allocation5] sm:$0xff]
      %v3090 = vld [vmem:[#allocation5 + $0x8] sm:$0xff]
      %v3091 = vld [vmem:[#allocation5 + $0x10] sm:$0xff]
      %v3092 = vld [vmem:[#allocation5 + $0x18] sm:$0xff]
      %v3093 = vld [vmem:[#allocation5 + $0x20] sm:$0xff]
      %v3094 = vld [vmem:[#allocation5 + $0x28] sm:$0xff]
      %v3095 = vld [vmem:[#allocation5 + $0x30] sm:$0xff]
      %v3096 = vld [vmem:[#allocation5 + $0x38] sm:$0xff]
      %v3097 = vld [vmem:[#allocation5 + $0x40] sm:$0xff]
      %v3098 = vld [vmem:[#allocation5 + $0x48] sm:$0xff]
      %v3099 = vld [vmem:[#allocation5 + $0x50] sm:$0xff]
      %v3100 = vld [vmem:[#allocation5 + $0x58] sm:$0xff]
      %v3101 = vld [vmem:[#allocation5 + $0x60] sm:$0xff]
      %v3102 = vld [vmem:[#allocation5 + $0x68] sm:$0xff]
      %v3103 = vld [vmem:[#allocation5 + $0x70] sm:$0xff]
      %v3104 = vld [vmem:[#allocation5 + $0x78] sm:$0xff]
      %vm3105 = vcmp.gt.f32.partialorder %v3089, 0.0
      %vm3106 = vcmp.gt.f32.partialorder %v3090, 0.0
      %vm3107 = vcmp.gt.f32.partialorder %v3091, 0.0
      %vm3108 = vcmp.gt.f32.partialorder %v3092, 0.0
      %vm3109 = vcmp.gt.f32.partialorder %v3093, 0.0
      %vm3110 = vcmp.gt.f32.partialorder %v3094, 0.0
      %vm3111 = vcmp.gt.f32.partialorder %v3095, 0.0
      %vm3112 = vcmp.gt.f32.partialorder %v3096, 0.0
      %vm3113 = vcmp.gt.f32.partialorder %v3097, 0.0
      %vm3114 = vcmp.gt.f32.partialorder %v3098, 0.0
      %vm3115 = vcmp.gt.f32.partialorder %v3099, 0.0
      %vm3116 = vcmp.gt.f32.partialorder %v3100, 0.0
      %vm3117 = vcmp.gt.f32.partialorder %v3101, 0.0
      %vm3118 = vcmp.gt.f32.partialorder %v3102, 0.0
      %vm3119 = vcmp.gt.f32.partialorder %v3103, 0.0
      %vm3120 = vcmp.gt.f32.partialorder %v3104, 0.0
      %v3121 = vmax.f32 %v3089, 1e-30
      %v3122 = vmax.f32 %v3090, 1e-30
      %v3123 = vmax.f32 %v3091, 1e-30
      %v3124 = vmax.f32 %v3092, 1e-30
      %v3125 = vmax.f32 %v3093, 1e-30
      %v3126 = vmax.f32 %v3094, 1e-30
      %v3127 = vmax.f32 %v3095, 1e-30
      %v3128 = vmax.f32 %v3096, 1e-30
      %v3129 = vmax.f32 %v3097, 1e-30
      %v3130 = vmax.f32 %v3098, 1e-30
      %v3131 = vmax.f32 %v3099, 1e-30
      %v3132 = vmax.f32 %v3100, 1e-30
      %v3133 = vmax.f32 %v3101, 1e-30
      %v3134 = vmax.f32 %v3102, 1e-30
      %v3135 = vmax.f32 %v3103, 1e-30
      %v3136 = vmax.f32 %v3104, 1e-30
      %v3137 = vrcp.pop %v3121
      %v3138 = vmul.f32 %v3121, %v3137
      %v3139 = vsub.f32 1.0, %v3138
      %v3140 = vmul.f32 %v3137, %v3139
      %v3141 = vadd.f32 %v3137, %v3140
      %vm3142 = vweird.f32 %v3121
      %vm3143 = vweird.f32 %v3137
      %vm3144 = vmor %vm3142, %vm3143
      %v3145 = vsel %vm3144, %v3137, %v3141
      %v3146 = vand.u32 2147483647, %v3121
      %vm3147 = vcmp.eq.f32.partialorder %v3146, 8.507059e+37
      %v3148 = vand.u32 %v3121, 2147483648
      %v3149 = vor.u32 1.1754944e-38, %v3148
      %v3150 = vsel %vm3147, %v3149, %v3145
      %v3151 = vmul.f32 1.0, %v3150
      %v3152 = vrcp.pop %v3122
      %v3153 = vmul.f32 %v3122, %v3152
      %v3154 = vsub.f32 1.0, %v3153
      %v3155 = vmul.f32 %v3152, %v3154
      %v3156 = vadd.f32 %v3152, %v3155
      %vm3157 = vweird.f32 %v3122
      %vm3158 = vweird.f32 %v3152
      %vm3159 = vmor %vm3157, %vm3158
      %v3160 = vsel %vm3159, %v3152, %v3156
      %v3161 = vand.u32 2147483647, %v3122
      %vm3162 = vcmp.eq.f32.partialorder %v3161, 8.507059e+37
      %v3163 = vand.u32 %v3122, 2147483648
      %v3164 = vor.u32 1.1754944e-38, %v3163
      %v3165 = vsel %vm3162, %v3164, %v3160
      %v3166 = vmul.f32 1.0, %v3165
      %v3167 = vrcp.pop %v3123
      %v3168 = vmul.f32 %v3123, %v3167
      %v3169 = vsub.f32 1.0, %v3168
      %v3170 = vmul.f32 %v3167, %v3169
      %v3171 = vadd.f32 %v3167, %v3170
      %vm3172 = vweird.f32 %v3123
      %vm3173 = vweird.f32 %v3167
      %vm3174 = vmor %vm3172, %vm3173
      %v3175 = vsel %vm3174, %v3167, %v3171
      %v3176 = vand.u32 2147483647, %v3123
      %vm3177 = vcmp.eq.f32.partialorder %v3176, 8.507059e+37
      %v3178 = vand.u32 %v3123, 2147483648
      %v3179 = vor.u32 1.1754944e-38, %v3178
      %v3180 = vsel %vm3177, %v3179, %v3175
      %v3181 = vmul.f32 1.0, %v3180
      %v3182 = vrcp.pop %v3124
      %v3183 = vmul.f32 %v3124, %v3182
      %v3184 = vsub.f32 1.0, %v3183
      %v3185 = vmul.f32 %v3182, %v3184
      %v3186 = vadd.f32 %v3182, %v3185
      %vm3187 = vweird.f32 %v3124
      %vm3188 = vweird.f32 %v3182
      %vm3189 = vmor %vm3187, %vm3188
      %v3190 = vsel %vm3189, %v3182, %v3186
      %v3191 = vand.u32 2147483647, %v3124
      %vm3192 = vcmp.eq.f32.partialorder %v3191, 8.507059e+37
      %v3193 = vand.u32 %v3124, 2147483648
      %v3194 = vor.u32 1.1754944e-38, %v3193
      %v3195 = vsel %vm3192, %v3194, %v3190
      %v3196 = vmul.f32 1.0, %v3195
      %v3197 = vrcp.pop %v3125
      %v3198 = vmul.f32 %v3125, %v3197
      %v3199 = vsub.f32 1.0, %v3198
      %v3200 = vmul.f32 %v3197, %v3199
      %v3201 = vadd.f32 %v3197, %v3200
      %vm3202 = vweird.f32 %v3125
      %vm3203 = vweird.f32 %v3197
      %vm3204 = vmor %vm3202, %vm3203
      %v3205 = vsel %vm3204, %v3197, %v3201
      %v3206 = vand.u32 2147483647, %v3125
      %vm3207 = vcmp.eq.f32.partialorder %v3206, 8.507059e+37
      %v3208 = vand.u32 %v3125, 2147483648
      %v3209 = vor.u32 1.1754944e-38, %v3208
      %v3210 = vsel %vm3207, %v3209, %v3205
      %v3211 = vmul.f32 1.0, %v3210
      %v3212 = vrcp.pop %v3126
      %v3213 = vmul.f32 %v3126, %v3212
      %v3214 = vsub.f32 1.0, %v3213
      %v3215 = vmul.f32 %v3212, %v3214
      %v3216 = vadd.f32 %v3212, %v3215
      %vm3217 = vweird.f32 %v3126
      %vm3218 = vweird.f32 %v3212
      %vm3219 = vmor %vm3217, %vm3218
      %v3220 = vsel %vm3219, %v3212, %v3216
      %v3221 = vand.u32 2147483647, %v3126
      %vm3222 = vcmp.eq.f32.partialorder %v3221, 8.507059e+37
      %v3223 = vand.u32 %v3126, 2147483648
      %v3224 = vor.u32 1.1754944e-38, %v3223
      %v3225 = vsel %vm3222, %v3224, %v3220
      %v3226 = vmul.f32 1.0, %v3225
      %v3227 = vrcp.pop %v3127
      %v3228 = vmul.f32 %v3127, %v3227
      %v3229 = vsub.f32 1.0, %v3228
      %v3230 = vmul.f32 %v3227, %v3229
      %v3231 = vadd.f32 %v3227, %v3230
      %vm3232 = vweird.f32 %v3127
      %vm3233 = vweird.f32 %v3227
      %vm3234 = vmor %vm3232, %vm3233
      %v3235 = vsel %vm3234, %v3227, %v3231
      %v3236 = vand.u32 2147483647, %v3127
      %vm3237 = vcmp.eq.f32.partialorder %v3236, 8.507059e+37
      %v3238 = vand.u32 %v3127, 2147483648
      %v3239 = vor.u32 1.1754944e-38, %v3238
      %v3240 = vsel %vm3237, %v3239, %v3235
      %v3241 = vmul.f32 1.0, %v3240
      %v3242 = vrcp.pop %v3128
      %v3243 = vmul.f32 %v3128, %v3242
      %v3244 = vsub.f32 1.0, %v3243
      %v3245 = vmul.f32 %v3242, %v3244
      %v3246 = vadd.f32 %v3242, %v3245
      %vm3247 = vweird.f32 %v3128
      %vm3248 = vweird.f32 %v3242
      %vm3249 = vmor %vm3247, %vm3248
      %v3250 = vsel %vm3249, %v3242, %v3246
      %v3251 = vand.u32 2147483647, %v3128
      %vm3252 = vcmp.eq.f32.partialorder %v3251, 8.507059e+37
      %v3253 = vand.u32 %v3128, 2147483648
      %v3254 = vor.u32 1.1754944e-38, %v3253
      %v3255 = vsel %vm3252, %v3254, %v3250
      %v3256 = vmul.f32 1.0, %v3255
      %v3257 = vrcp.pop %v3129
      %v3258 = vmul.f32 %v3129, %v3257
      %v3259 = vsub.f32 1.0, %v3258
      %v3260 = vmul.f32 %v3257, %v3259
      %v3261 = vadd.f32 %v3257, %v3260
      %vm3262 = vweird.f32 %v3129
      %vm3263 = vweird.f32 %v3257
      %vm3264 = vmor %vm3262, %vm3263
      %v3265 = vsel %vm3264, %v3257, %v3261
      %v3266 = vand.u32 2147483647, %v3129
      %vm3267 = vcmp.eq.f32.partialorder %v3266, 8.507059e+37
      %v3268 = vand.u32 %v3129, 2147483648
      %v3269 = vor.u32 1.1754944e-38, %v3268
      %v3270 = vsel %vm3267, %v3269, %v3265
      %v3271 = vmul.f32 1.0, %v3270
      %v3272 = vrcp.pop %v3130
      %v3273 = vmul.f32 %v3130, %v3272
      %v3274 = vsub.f32 1.0, %v3273
      %v3275 = vmul.f32 %v3272, %v3274
      %v3276 = vadd.f32 %v3272, %v3275
      %vm3277 = vweird.f32 %v3130
      %vm3278 = vweird.f32 %v3272
      %vm3279 = vmor %vm3277, %vm3278
      %v3280 = vsel %vm3279, %v3272, %v3276
      %v3281 = vand.u32 2147483647, %v3130
      %vm3282 = vcmp.eq.f32.partialorder %v3281, 8.507059e+37
      %v3283 = vand.u32 %v3130, 2147483648
      %v3284 = vor.u32 1.1754944e-38, %v3283
      %v3285 = vsel %vm3282, %v3284, %v3280
      %v3286 = vmul.f32 1.0, %v3285
      %v3287 = vrcp.pop %v3131
      %v3288 = vmul.f32 %v3131, %v3287
      %v3289 = vsub.f32 1.0, %v3288
      %v3290 = vmul.f32 %v3287, %v3289
      %v3291 = vadd.f32 %v3287, %v3290
      %vm3292 = vweird.f32 %v3131
      %vm3293 = vweird.f32 %v3287
      %vm3294 = vmor %vm3292, %vm3293
      %v3295 = vsel %vm3294, %v3287, %v3291
      %v3296 = vand.u32 2147483647, %v3131
      %vm3297 = vcmp.eq.f32.partialorder %v3296, 8.507059e+37
      %v3298 = vand.u32 %v3131, 2147483648
      %v3299 = vor.u32 1.1754944e-38, %v3298
      %v3300 = vsel %vm3297, %v3299, %v3295
      %v3301 = vmul.f32 1.0, %v3300
      %v3302 = vrcp.pop %v3132
      %v3303 = vmul.f32 %v3132, %v3302
      %v3304 = vsub.f32 1.0, %v3303
      %v3305 = vmul.f32 %v3302, %v3304
      %v3306 = vadd.f32 %v3302, %v3305
      %vm3307 = vweird.f32 %v3132
      %vm3308 = vweird.f32 %v3302
      %vm3309 = vmor %vm3307, %vm3308
      %v3310 = vsel %vm3309, %v3302, %v3306
      %v3311 = vand.u32 2147483647, %v3132
      %vm3312 = vcmp.eq.f32.partialorder %v3311, 8.507059e+37
      %v3313 = vand.u32 %v3132, 2147483648
      %v3314 = vor.u32 1.1754944e-38, %v3313
      %v3315 = vsel %vm3312, %v3314, %v3310
      %v3316 = vmul.f32 1.0, %v3315
      %v3317 = vrcp.pop %v3133
      %v3318 = vmul.f32 %v3133, %v3317
      %v3319 = vsub.f32 1.0, %v3318
      %v3320 = vmul.f32 %v3317, %v3319
      %v3321 = vadd.f32 %v3317, %v3320
      %vm3322 = vweird.f32 %v3133
      %vm3323 = vweird.f32 %v3317
      %vm3324 = vmor %vm3322, %vm3323
      %v3325 = vsel %vm3324, %v3317, %v3321
      %v3326 = vand.u32 2147483647, %v3133
      %vm3327 = vcmp.eq.f32.partialorder %v3326, 8.507059e+37
      %v3328 = vand.u32 %v3133, 2147483648
      %v3329 = vor.u32 1.1754944e-38, %v3328
      %v3330 = vsel %vm3327, %v3329, %v3325
      %v3331 = vmul.f32 1.0, %v3330
      %v3332 = vrcp.pop %v3134
      %v3333 = vmul.f32 %v3134, %v3332
      %v3334 = vsub.f32 1.0, %v3333
      %v3335 = vmul.f32 %v3332, %v3334
      %v3336 = vadd.f32 %v3332, %v3335
      %vm3337 = vweird.f32 %v3134
      %vm3338 = vweird.f32 %v3332
      %vm3339 = vmor %vm3337, %vm3338
      %v3340 = vsel %vm3339, %v3332, %v3336
      %v3341 = vand.u32 2147483647, %v3134
      %vm3342 = vcmp.eq.f32.partialorder %v3341, 8.507059e+37
      %v3343 = vand.u32 %v3134, 2147483648
      %v3344 = vor.u32 1.1754944e-38, %v3343
      %v3345 = vsel %vm3342, %v3344, %v3340
      %v3346 = vmul.f32 1.0, %v3345
      %v3347 = vrcp.pop %v3135
      %v3348 = vmul.f32 %v3135, %v3347
      %v3349 = vsub.f32 1.0, %v3348
      %v3350 = vmul.f32 %v3347, %v3349
      %v3351 = vadd.f32 %v3347, %v3350
      %vm3352 = vweird.f32 %v3135
      %vm3353 = vweird.f32 %v3347
      %vm3354 = vmor %vm3352, %vm3353
      %v3355 = vsel %vm3354, %v3347, %v3351
      %v3356 = vand.u32 2147483647, %v3135
      %vm3357 = vcmp.eq.f32.partialorder %v3356, 8.507059e+37
      %v3358 = vand.u32 %v3135, 2147483648
      %v3359 = vor.u32 1.1754944e-38, %v3358
      %v3360 = vsel %vm3357, %v3359, %v3355
      %v3361 = vmul.f32 1.0, %v3360
      %v3362 = vrcp.pop %v3136
      %v3363 = vmul.f32 %v3136, %v3362
      %v3364 = vsub.f32 1.0, %v3363
      %v3365 = vmul.f32 %v3362, %v3364
      %v3366 = vadd.f32 %v3362, %v3365
      %vm3367 = vweird.f32 %v3136
      %vm3368 = vweird.f32 %v3362
      %vm3369 = vmor %vm3367, %vm3368
      %v3370 = vsel %vm3369, %v3362, %v3366
      %v3371 = vand.u32 2147483647, %v3136
      %vm3372 = vcmp.eq.f32.partialorder %v3371, 8.507059e+37
      %v3373 = vand.u32 %v3136, 2147483648
      %v3374 = vor.u32 1.1754944e-38, %v3373
      %v3375 = vsel %vm3372, %v3374, %v3370
      %v3376 = vmul.f32 1.0, %v3375
      %v3377 = vsel %vm3105, %v3151, 0.0
      %v3378 = vsel %vm3106, %v3166, 0.0
      %v3379 = vsel %vm3107, %v3181, 0.0
      %v3380 = vsel %vm3108, %v3196, 0.0
      %v3381 = vsel %vm3109, %v3211, 0.0
      %v3382 = vsel %vm3110, %v3226, 0.0
      %v3383 = vsel %vm3111, %v3241, 0.0
      %v3384 = vsel %vm3112, %v3256, 0.0
      %v3385 = vsel %vm3113, %v3271, 0.0
      %v3386 = vsel %vm3114, %v3286, 0.0
      %v3387 = vsel %vm3115, %v3301, 0.0
      %v3388 = vsel %vm3116, %v3316, 0.0
      %v3389 = vsel %vm3117, %v3331, 0.0
      %v3390 = vsel %vm3118, %v3346, 0.0
      %v3391 = vsel %vm3119, %v3361, 0.0
      %v3392 = vsel %vm3120, %v3376, 0.0
      %v3393 = vld [vmem:[#allocation6] sm:$0xff]
      %v3394 = vld [vmem:[#allocation6 + $0x8] sm:$0xff]
      %v3395 = vld [vmem:[#allocation6 + $0x10] sm:$0xff]
      %v3396 = vld [vmem:[#allocation6 + $0x18] sm:$0xff]
      %v3397 = vld [vmem:[#allocation6 + $0x20] sm:$0xff]
      %v3398 = vld [vmem:[#allocation6 + $0x28] sm:$0xff]
      %v3399 = vld [vmem:[#allocation6 + $0x30] sm:$0xff]
      %v3400 = vld [vmem:[#allocation6 + $0x38] sm:$0xff]
      %v3401 = vld [vmem:[#allocation6 + $0x40] sm:$0xff]
      %v3402 = vld [vmem:[#allocation6 + $0x48] sm:$0xff]
      %v3403 = vld [vmem:[#allocation6 + $0x50] sm:$0xff]
      %v3404 = vld [vmem:[#allocation6 + $0x58] sm:$0xff]
      %v3405 = vld [vmem:[#allocation6 + $0x60] sm:$0xff]
      %v3406 = vld [vmem:[#allocation6 + $0x68] sm:$0xff]
      %v3407 = vld [vmem:[#allocation6 + $0x70] sm:$0xff]
      %v3408 = vld [vmem:[#allocation6 + $0x78] sm:$0xff]
      %3410 = vset.pattern.permute.xlu0 0
      %3411 = vperm.xlu0 %3410, %v3377
      %v3412 = vpop.permute.xlu0 %3411
      %3415 = vset.pattern.permute.xlu0 0
      %3416 = vperm.xlu0 %3415, %v3378
      %v3417 = vpop.permute.xlu0 %3416
      %3420 = vset.pattern.permute.xlu0 0
      %3421 = vperm.xlu0 %3420, %v3379
      %v3422 = vpop.permute.xlu0 %3421
      %3425 = vset.pattern.permute.xlu0 0
      %3426 = vperm.xlu0 %3425, %v3380
      %v3427 = vpop.permute.xlu0 %3426
      %3430 = vset.pattern.permute.xlu0 0
      %3431 = vperm.xlu0 %3430, %v3381
      %v3432 = vpop.permute.xlu0 %3431
      %3435 = vset.pattern.permute.xlu0 0
      %3436 = vperm.xlu0 %3435, %v3382
      %v3437 = vpop.permute.xlu0 %3436
      %3440 = vset.pattern.permute.xlu0 0
      %3441 = vperm.xlu0 %3440, %v3383
      %v3442 = vpop.permute.xlu0 %3441
      %3445 = vset.pattern.permute.xlu0 0
      %3446 = vperm.xlu0 %3445, %v3384
      %v3447 = vpop.permute.xlu0 %3446
      %3450 = vset.pattern.permute.xlu0 0
      %3451 = vperm.xlu0 %3450, %v3385
      %v3452 = vpop.permute.xlu0 %3451
      %3455 = vset.pattern.permute.xlu0 0
      %3456 = vperm.xlu0 %3455, %v3386
      %v3457 = vpop.permute.xlu0 %3456
      %3460 = vset.pattern.permute.xlu0 0
      %3461 = vperm.xlu0 %3460, %v3387
      %v3462 = vpop.permute.xlu0 %3461
      %3465 = vset.pattern.permute.xlu0 0
      %3466 = vperm.xlu0 %3465, %v3388
      %v3467 = vpop.permute.xlu0 %3466
      %3470 = vset.pattern.permute.xlu0 0
      %3471 = vperm.xlu0 %3470, %v3389
      %v3472 = vpop.permute.xlu0 %3471
      %3475 = vset.pattern.permute.xlu0 0
      %3476 = vperm.xlu0 %3475, %v3390
      %v3477 = vpop.permute.xlu0 %3476
      %3480 = vset.pattern.permute.xlu0 0
      %3481 = vperm.xlu0 %3480, %v3391
      %v3482 = vpop.permute.xlu0 %3481
      %3485 = vset.pattern.permute.xlu0 0
      %3486 = vperm.xlu0 %3485, %v3392
      %v3487 = vpop.permute.xlu0 %3486
      %v3489 = vmul.f32 %v3393, %v3412
      %v3490 = vmul.f32 %v3394, %v3417
      %v3491 = vmul.f32 %v3395, %v3422
      %v3492 = vmul.f32 %v3396, %v3427
      %v3493 = vmul.f32 %v3397, %v3432
      %v3494 = vmul.f32 %v3398, %v3437
      %v3495 = vmul.f32 %v3399, %v3442
      %v3496 = vmul.f32 %v3400, %v3447
      %v3497 = vmul.f32 %v3401, %v3452
      %v3498 = vmul.f32 %v3402, %v3457
      %v3499 = vmul.f32 %v3403, %v3462
      %v3500 = vmul.f32 %v3404, %v3467
      %v3501 = vmul.f32 %v3405, %v3472
      %v3502 = vmul.f32 %v3406, %v3477
      %v3503 = vmul.f32 %v3407, %v3482
      %v3504 = vmul.f32 %v3408, %v3487
      %v3505 = vld [vmem:[%s1] sm:$0xff]
      %v3506 = vld [vmem:[%s1 + $0x8] sm:$0xff]
      %v3507 = vld [vmem:[%s1 + $0x10] sm:$0xff]
      %v3508 = vld [vmem:[%s1 + $0x18] sm:$0xff]
      %v3509 = vld [vmem:[%s1 + $0x20] sm:$0xff]
      %v3510 = vld [vmem:[%s1 + $0x28] sm:$0xff]
      %v3511 = vld [vmem:[%s1 + $0x30] sm:$0xff]
      %v3512 = vld [vmem:[%s1 + $0x38] sm:$0xff]
      %v3513 = vld [vmem:[%s1 + $0x40] sm:$0xff]
      %v3514 = vld [vmem:[%s1 + $0x48] sm:$0xff]
      %v3515 = vld [vmem:[%s1 + $0x50] sm:$0xff]
      %v3516 = vld [vmem:[%s1 + $0x58] sm:$0xff]
      %v3517 = vld [vmem:[%s1 + $0x60] sm:$0xff]
      %v3518 = vld [vmem:[%s1 + $0x68] sm:$0xff]
      %v3519 = vld [vmem:[%s1 + $0x70] sm:$0xff]
      %v3520 = vld [vmem:[%s1 + $0x78] sm:$0xff]
      %v3521 = vadd.f32 %v3489, %v3505
      %v3522 = vadd.f32 %v3490, %v3506
      %v3523 = vadd.f32 %v3491, %v3507
      %v3524 = vadd.f32 %v3492, %v3508
      %v3525 = vadd.f32 %v3493, %v3509
      %v3526 = vadd.f32 %v3494, %v3510
      %v3527 = vadd.f32 %v3495, %v3511
      %v3528 = vadd.f32 %v3496, %v3512
      %v3529 = vadd.f32 %v3497, %v3513
      %v3530 = vadd.f32 %v3498, %v3514
      %v3531 = vadd.f32 %v3499, %v3515
      %v3532 = vadd.f32 %v3500, %v3516
      %v3533 = vadd.f32 %v3501, %v3517
      %v3534 = vadd.f32 %v3502, %v3518
      %v3535 = vadd.f32 %v3503, %v3519
      %v3536 = vadd.f32 %v3504, %v3520
      %3537 = vst [vmem:[#allocation12] sm:$0xff] %v3521
      %3538 = vst [vmem:[#allocation12 + $0x8] sm:$0xff] %v3522
      %3539 = vst [vmem:[#allocation12 + $0x10] sm:$0xff] %v3523
      %3540 = vst [vmem:[#allocation12 + $0x18] sm:$0xff] %v3524
      %3541 = vst [vmem:[#allocation12 + $0x20] sm:$0xff] %v3525
      %3542 = vst [vmem:[#allocation12 + $0x28] sm:$0xff] %v3526
      %3543 = vst [vmem:[#allocation12 + $0x30] sm:$0xff] %v3527
      %3544 = vst [vmem:[#allocation12 + $0x38] sm:$0xff] %v3528
      %3545 = vst [vmem:[#allocation12 + $0x40] sm:$0xff] %v3529
      %3546 = vst [vmem:[#allocation12 + $0x48] sm:$0xff] %v3530
      %3547 = vst [vmem:[#allocation12 + $0x50] sm:$0xff] %v3531
      %3548 = vst [vmem:[#allocation12 + $0x58] sm:$0xff] %v3532
      %3549 = vst [vmem:[#allocation12 + $0x60] sm:$0xff] %v3533
      %3550 = vst [vmem:[#allocation12 + $0x68] sm:$0xff] %v3534
      %3551 = vst [vmem:[#allocation12 + $0x70] sm:$0xff] %v3535
      %3552 = vst [vmem:[#allocation12 + $0x78] sm:$0xff] %v3536
    $region33: #{tpu_custom_call.1} parent=1 // pred_fallthru
      _
    // Predicated region
    $region34: #{tpu_custom_call.1} parent=1 // pred_check
      _
    $region35: #{tpu_custom_call.1} parent=1 // pred_check_branch
      %3554 = sbr.rel (0) target = $region37
    $region36: #{tpu_custom_call.1} parent=1 // pred_region
      %3556 = vsyncadd [#allocation9], 0
      %s3557 = sshll.u32 [#allocation12], 4
      %s3558 = int_to_ptr.vmem [resolvable:$true] %s3557
      %s3559 = sshll.u32 %s4, 4
      %s3560 = int_to_ptr.hbm [resolvable:$true] %s3559
      %3565 = dma.vmem_to_hbm [thread:$0]  %s3558, 2048, %s3560, [#allocation9], 128, 128, 8
    $region37: #{tpu_custom_call.1} parent=1 // pred_fallthru
      _
    // Predicated region
    $region38: #{tpu_custom_call.1} parent=1 // pred_check
      _
    $region39: #{tpu_custom_call.1} parent=1 // pred_check_branch
      %3567 = sbr.rel (0) target = $region41
    $region40: #{tpu_custom_call.1} parent=1 // pred_region
      %3569 = dma.done [#allocation9], 2048
    $region41: #{tpu_custom_call.1} parent=1 // pred_fallthru
      _
    %3570 = vsyncpa [#allocation8], 1
    %3571 = vsyncpa [#allocation11], 1
    %3572 = vsyncpa [#allocation9], 1

</llo_original>
